<compile_context>
chip_gen: v6e
topology: v6e:2x2x1
jax: 0.10.0
libtpu: 0.0.40
codegen_flags: <defaults>
</compile_context>

<pallas_src>
import numpy as np
import jax
import jax.numpy as jnp
from jax.experimental import pallas as pl
from jax.experimental.pallas import tpu as pltpu

F32 = jnp.float32
LANE = 128

# ---- configuration (small synthetic shapes consistent with the module) ----
NE, NS = 6, 10                 # num ERE nodes, num statement nodes
V_ERE, V_STMT = 20, 30         # embedding-table vocab sizes
ERE_EMB = STMT_EMB = HID = 32  # ere_embed_size == stmt_embed_size == hidden_size
ATT = 32                       # attention_size
QS, QE, C = 4, 3, 5            # |query_stmts|, |query_eres|, |candidates|
NUM_LAYERS = 2
PLAUS = False
ATTENTION_TYPE = "bilinear"

assert ERE_EMB == HID and STMT_EMB == HID  # required for the weight stacking


# ---------------- matmul helpers (usable inside Pallas kernels) ------------
def _mm(a, b):                                      # a @ b
    return jax.lax.dot_general(a, b, (((1,), (0,)), ((), ())),
                               preferred_element_type=F32)


def _mm_at(a, b):                                   # a.T @ b
    return jax.lax.dot_general(a, b, (((0,), (0,)), ((), ())),
                               preferred_element_type=F32)


def _mm_bt(a, b):                                   # a @ b.T
    return jax.lax.dot_general(a, b, (((1,), (1,)), ((), ())),
                               preferred_element_type=F32)


# --------------------------- fused Pallas kernel ----------------------------
def coherence_gcn_kernel(
        # tiny int32 index columns (VMEM)
        qs_ref, qe_ref, cand_ref,
        # tensor inputs (VMEM)
        avg_e_ref, avg_s_ref, etab_ref, stab_ref,
        adj_ref, adjt_ref,
        w_sq_ref, w_sadj_ref, w_eadj_ref,
        w_att_ref, w_coh_ref, bias_ref,
        # outputs
        eres_out_ref, stmts_out_ref, att_out_ref, coh_out_ref):
    """Fused: label-mean embeddings + 2-layer GCN + bilinear attention + head.

    w_sq_ref  : [6, H, H]   0:linear_ere_init 1:linear_stmt_init 2:linear_ere
                            3:linear_stmt     4:score_ss.bilinear 5:score_es.bilinear
    w_sadj_ref: [2, H, 3H]  per-layer [head|tail|type]_adj_stmt weights (stacked)
    w_eadj_ref: [2, H, 2H]  per-layer [head|tail]_adj_ere weights (stacked)
    w_att_ref : [3, H, 128] Attention.linear split by operand, lane-padded
    w_coh_ref : [128, 128]  coherence_linear column broadcast across lanes
    bias_ref  : [12, 128]   packed biases (rows 0-5: self/bilinear, 6-7: stmt-adj
                            per layer, 8-9: ere-adj per layer, 10: att, 11: coh)
    """
    H = HID
    bias = bias_ref[...]                               # [12, 128], loaded once

    def b_sq(k):   return bias[k:k + 1, 0:H]           # [1, H]
    def b_sadj(l): return bias[6 + l:7 + l, 0:3 * H]   # [1, 3H]
    def b_eadj(l): return bias[8 + l:9 + l, 0:2 * H]   # [1, 2H]
    b_att = bias[10:11, :]                             # [1, 128]
    b_coh = bias[11:12, :]                             # [1, 128]

    # ---- label-set mean-of-means embeddings: one matmul per embedder ----
    ere_emb = _mm(avg_e_ref[...], etab_ref[...])       # [NE, H]
    stmt_emb = _mm(avg_s_ref[...], stab_ref[...])      # [NS, H]

    ah, atl, ap = adj_ref[0], adj_ref[1], adj_ref[2]   # [NE, NS]
    aht, atlt = adjt_ref[0], adjt_ref[1]               # [NS, NE] (pre-transposed)

    def lin_sq(x, k):
        return _mm(x, w_sq_ref[k]) + b_sq(k)

    # conv_dropout == identity (eval)
    def ere_update(e_in, s_in, k_self, l):
        y = _mm(s_in, w_sadj_ref[l]) + b_sadj(l)       # [NS, 3H]
        out = (lin_sq(e_in, k_self)
               + _mm(ah, y[:, 0:H])
               + _mm(atl, y[:, H:2 * H])
               + _mm(ap, y[:, 2 * H:3 * H]))
        return jnp.maximum(out, 0.0)

    def stmt_update(s_in, e_in, k_self, l):
        y = _mm(e_in, w_eadj_ref[l]) + b_eadj(l)       # [NE, 2H]
        out = (lin_sq(s_in, k_self)
               + _mm(aht, y[:, 0:H])
               + _mm(atlt, y[:, H:2 * H]))
        return jnp.maximum(out, 0.0)

    eres = ere_update(ere_emb, stmt_emb, 0, 0)    # layer 1
    stmts = stmt_update(stmt_emb, eres, 1, 0)
    eres = ere_update(eres, stmts, 2, 1)          # layer 2
    stmts = stmt_update(stmts, eres, 3, 1)

    eres_out_ref[...] = eres
    stmts_out_ref[...] = stmts

    # ---- in-kernel row gathers: one vectorized iota-compare + one matmul ----
    def select_rows(idx_ref, n_out, n_src, table):
        col = jax.lax.broadcasted_iota(jnp.int32, (n_out, n_src), 1)
        oh = jnp.where(col == idx_ref[...], 1.0, 0.0)  # [n_out, n_src] one-hot
        return _mm(oh, table)

    sa = select_rows(qs_ref, QS, NS, stmts)            # [QS, H] query stmts
    ea = select_rows(qe_ref, QE, NE, eres)             # [QE, H] query eres
    attender = select_rows(cand_ref, C, NS, stmts)     # [C,  H] candidates

    # ---- bilinear Score + softmax over attendee axis (dim 0) ----
    u_ss = _mm_bt(lin_sq(sa, 4), attender)             # [QS, C]
    u_es = _mm_bt(lin_sq(ea, 5), attender)             # [QE, C]

    def softmax0(x):
        m = jnp.max(x, axis=0, keepdims=True)
        e = jnp.exp(x - m)
        return e / jnp.sum(e, axis=0, keepdims=True)

    # attention_dropout == identity (eval)
    w_ss = softmax0(u_ss)
    w_es = softmax0(u_es)

    ctx_ss = _mm_at(w_ss, sa)                          # [C, H]
    ctx_es = _mm_at(w_es, ea)                          # [C, H]

    # Attention.linear applied without a lane-axis concat: three accumulated
    # matmuls with the split (and lane-padded) weight blocks.
    att_vec = jnp.tanh(_mm(attender, w_att_ref[0])
                       + _mm(ctx_ss, w_att_ref[1])
                       + _mm(ctx_es, w_att_ref[2])
                       + b_att)                        # [C, 128] (cols >= ATT are 0)
    att_out_ref[...] = att_vec

    # coherence_linear, lane-dense: every lane of the slab holds the score.
    coh_out_ref[...] = _mm(att_vec, w_coh_ref[...]) + b_coh   # [C, 128]


# ------------------------------ pallas_call ---------------------------------
_VMEM = pl.BlockSpec(memory_space=pltpu.MemorySpace.VMEM)

_fused_call = pl.pallas_call(
    coherence_gcn_kernel,
    out_shape=(jax.ShapeDtypeStruct((NE, HID), F32),
               jax.ShapeDtypeStruct((NS, HID), F32),
               jax.ShapeDtypeStruct((C, LANE), F32),
               jax.ShapeDtypeStruct((C, LANE), F32)),
    grid_spec=pltpu.PrefetchScalarGridSpec(
        num_scalar_prefetch=0,
        grid=(1,),
        in_specs=[_VMEM] * 15,
        out_specs=(_VMEM, _VMEM, _VMEM, _VMEM)),
    compiler_params=pltpu.CompilerParams(
        dimension_semantics=("arbitrary",)),
)


# ------------------------------ wrappers ------------------------------------
def build_avg_matrix(labels, n_nodes, vocab):
    """Dense matrix so that avg @ embedder == per-node mean-of-set-means."""
    W = np.zeros((n_nodes, vocab), dtype=np.float32)
    for i, label_sets in enumerate(labels):
        sets = [ls for ls in label_sets if len(ls) > 0]
        m = len(sets)
        for ls in sets:
            for v in ls:
                W[i, v] += 1.0 / (m * len(ls))
    return jnp.asarray(W)


def _pack_kernel_inputs(params, adj_head, adj_tail, adj_type, avg_e, avg_s):
    W, B = params["w_gcn"], params["b_gcn"]
    H, L = HID, LANE
    pad = lambda x: jnp.pad(x, ((0, 0), (0, L - x.shape[1])))

    # stacked self / bilinear weights
    w_sq = jnp.stack([W[0], W[4], W[7], W[11], params["w_ss"], params["w_es"]])
    w_sadj = jnp.stack([jnp.concatenate([W[1], W[2], W[3]], axis=1),
                        jnp.concatenate([W[8], W[9], W[10]], axis=1)])
    w_eadj = jnp.stack([jnp.concatenate([W[5], W[6]], axis=1),
                        jnp.concatenate([W[12], W[13]], axis=1)])

    # attention / coherence weights (lane-padded / lane-broadcast)
    wl = params["w_lin"]                                   # [3H, ATT]
    w_att = jnp.stack([pad(wl[0:H]), pad(wl[H:2 * H]), pad(wl[2 * H:3 * H])])
    w_coh = jnp.pad(jnp.broadcast_to(params["w_coh"], (ATT, L)),
                    ((0, L - ATT), (0, 0)))                # [128, 128]

    # single packed bias slab [12, 128]
    bias = jnp.concatenate([
        pad(B[0]), pad(B[4]), pad(B[7]), pad(B[11]),              # rows 0-3
        pad(params["b_ss"]), pad(params["b_es"]),                 # rows 4-5
        pad(jnp.concatenate([B[1], B[2], B[3]], axis=1)),         # row 6
        pad(jnp.concatenate([B[8], B[9], B[10]], axis=1)),        # row 7
        pad(jnp.concatenate([B[5], B[6]], axis=1)),               # row 8
        pad(jnp.concatenate([B[12], B[13]], axis=1)),             # row 9
        pad(params["b_lin"]),                                     # row 10
        jnp.broadcast_to(params["b_coh"], (1, L)),                # row 11
    ], axis=0)

    adj3 = jnp.stack([adj_head, adj_tail, adj_type])       # [3, NE, NS]
    adjt2 = jnp.stack([adj_head.T, adj_tail.T])            # [2, NS, NE]
    return (avg_e, avg_s, params["ere_embedder"], params["stmt_embedder"],
            adj3, adjt2, w_sq, w_sadj, w_eadj, w_att, w_coh, bias)


@jax.jit
def _forward_jit(params, adj_head, adj_tail, adj_type, avg_e, avg_s,
                 query_stmts, query_eres, candidates):
    kin = _pack_kernel_inputs(params, adj_head, adj_tail, adj_type,
                              avg_e, avg_s)
    qs_col = query_stmts.astype(jnp.int32)[:, None]        # [QS, 1]
    qe_col = query_eres.astype(jnp.int32)[:, None]         # [QE, 1]
    cand_col = candidates.astype(jnp.int32)[:, None]       # [C, 1]
    eres, stmts, att_pad, coh_pad = _fused_call(qs_col, qe_col, cand_col, *kin)
    return att_pad[:, :ATT], coh_pad[:, 0], eres, stmts


def forward(graph_dict, params):
    """CoherenceNetWithGCN.forward (plaus=False branch)."""
    # ragged label handling is host-side (static Python lists, done with numpy)
    avg_e = build_avg_matrix(graph_dict["ere_labels"], NE, V_ERE)
    avg_s = build_avg_matrix(graph_dict["stmt_labels"], NS, V_STMT)
    att_vecs, coh_out, eres, stmts = _forward_jit(
        params, graph_dict["adj_head"], graph_dict["adj_tail"],
        graph_dict["adj_type"], avg_e, avg_s,
        graph_dict["query_stmts"], graph_dict["query_eres"],
        graph_dict["candidates"])
    return att_vecs, coh_out, {"eres": eres, "stmts": stmts}


# ------------------------- pure-JAX reference -------------------------------
def mean_label_embed(labels, emb_mat):
    # Faithful to the Python loops in CoherenceNetWithGCN.gcn (reference only).
    rows = []
    for label_sets in labels:
        set_means = [jnp.mean(emb_mat[jnp.asarray(ls, dtype=jnp.int32)], axis=0)
                     for ls in label_sets if len(ls) > 0]
        rows.append(jnp.mean(jnp.stack(set_means, axis=0), axis=0))
    return jnp.stack(rows, axis=0).astype(F32)


def ref_forward(graph_dict, params):
    ere_emb = mean_label_embed(graph_dict["ere_labels"], params["ere_embedder"])
    stmt_emb = mean_label_embed(graph_dict["stmt_labels"], params["stmt_embedder"])
    ah, atl, ap = (graph_dict["adj_head"], graph_dict["adj_tail"],
                   graph_dict["adj_type"])
    W, B = params["w_gcn"], params["b_gcn"]
    lin = lambda x, k: x @ W[k] + B[k]

    eres = lin(ere_emb, 0) + ah @ lin(stmt_emb, 1) + atl @ lin(stmt_emb, 2) \
        + ap @ lin(stmt_emb, 3)
    eres = jnp.maximum(eres, 0.0)
    stmts = lin(stmt_emb, 4) + ah.T @ lin(eres, 5) + atl.T @ lin(eres, 6)
    stmts = jnp.maximum(stmts, 0.0)
    eres = lin(eres, 7) + ah @ lin(stmts, 8) + atl @ lin(stmts, 9) \
        + ap @ lin(stmts, 10)
    eres = jnp.maximum(eres, 0.0)
    stmts = lin(stmts, 11) + ah.T @ lin(eres, 12) + atl.T @ lin(eres, 13)
    stmts = jnp.maximum(stmts, 0.0)

    sa = stmts[graph_dict["query_stmts"]]
    ea = eres[graph_dict["query_eres"]]
    attender = stmts[graph_dict["candidates"]]

    u_ss = (sa @ params["w_ss"] + params["b_ss"]) @ attender.T
    u_es = (ea @ params["w_es"] + params["b_es"]) @ attender.T
    w_ss = jax.nn.softmax(u_ss, axis=0)
    w_es = jax.nn.softmax(u_es, axis=0)
    ctx_ss = w_ss.T @ sa
    ctx_es = w_es.T @ ea
    cat = jnp.concatenate([attender, ctx_ss, ctx_es], axis=-1)
    att_vec = jnp.tanh(cat @ params["w_lin"] + params["b_lin"])
    coh = (att_vec @ params["w_coh"] + params["b_coh"])[:, 0]
    return att_vec, coh, eres, stmts


# ---------------------------- param / data setup -----------------------------
def xavier(key, shape):
    fan_in, fan_out = shape[-2], shape[-1]
    bound = float(np.sqrt(6.0 / (fan_in + fan_out)))
    return jax.random.uniform(key, shape, minval=-bound, maxval=bound, dtype=F32)


def make_params(key):
    ks = jax.random.split(key, 12)
    u = lambda k, s: jax.random.uniform(k, s, minval=-0.1, maxval=0.1, dtype=F32)
    return {
        "ere_embedder": 0.1 * jax.random.normal(ks[0], (V_ERE, ERE_EMB), F32),
        "stmt_embedder": 0.1 * jax.random.normal(ks[1], (V_STMT, STMT_EMB), F32),
        "w_gcn": xavier(ks[2], (14, HID, HID)),
        "b_gcn": u(ks[3], (14, 1, HID)),
        "w_ss": xavier(ks[4], (HID, HID)),   # Score.score_stmt_to_stmt.bilinear
        "b_ss": u(ks[5], (1, HID)),
        "w_es": xavier(ks[6], (HID, HID)),   # Score.score_ere_to_stmt.bilinear
        "b_es": u(ks[7], (1, HID)),
        "w_lin": xavier(ks[8], (3 * HID, ATT)),   # Attention.linear
        "b_lin": u(ks[9], (1, ATT)),
        "w_coh": xavier(ks[10], (ATT, 1)),        # coherence_linear
        "b_coh": u(ks[11], (1, 1)),
    }


def make_graph_dict(key):
    k1, k2, k3 = jax.random.split(key, 3)
    bern = lambda k: (jax.random.uniform(k, (NE, NS)) < 0.3).astype(F32)
    ere_labels = [[[(3 * i) % V_ERE, (3 * i + 1) % V_ERE],
                   [(5 * i + 2) % V_ERE]] for i in range(NE)]
    stmt_labels = [[[(2 * j) % V_STMT],
                    [(7 * j + 1) % V_STMT, (j + 3) % V_STMT, (4 * j) % V_STMT]]
                   for j in range(NS)]
    return {
        "adj_head": bern(k1),
        "adj_tail": bern(k2),
        "adj_type": bern(k3),
        "ere_labels": ere_labels,
        "stmt_labels": stmt_labels,
        "query_stmts": jnp.array([0, 2, 5, 7], dtype=jnp.int32),
        "query_eres": jnp.array([1, 3, 4], dtype=jnp.int32),
        "candidates": jnp.array([1, 3, 4, 6, 8], dtype=jnp.int32),
    }


if __name__ == "__main__":
    root = jax.random.PRNGKey(0)
    k_params, k_graph = jax.random.split(root)
    params = make_params(k_params)
    graph_dict = make_graph_dict(k_graph)

    att_vecs, coh_out, gcn_embeds = forward(graph_dict, params)
    jax.block_until_ready((att_vecs, coh_out,
                           gcn_embeds["eres"], gcn_embeds["stmts"]))

    ref_att, ref_coh, ref_eres, ref_stmts = ref_forward(graph_dict, params)
    assert att_vecs.shape == (C, ATT) and coh_out.shape == (C,)
    np.testing.assert_allclose(np.asarray(gcn_embeds["eres"]),
                               np.asarray(ref_eres), rtol=1e-4, atol=1e-4)
    np.testing.assert_allclose(np.asarray(gcn_embeds["stmts"]),
                               np.asarray(ref_stmts), rtol=1e-4, atol=1e-4)
    np.testing.assert_allclose(np.asarray(att_vecs), np.asarray(ref_att),
                               rtol=1e-4, atol=1e-4)
    np.testing.assert_allclose(np.asarray(coh_out), np.asarray(ref_coh),
                               rtol=1e-4, atol=1e-4)
    print("KERNEL_OK")
</pallas_src>

<mosaic_0001>
module attributes {stable_mosaic.version = 11 : i64} {
  func.func @coherence_gcn_kernel(%arg0: i32, %arg1: memref<4x1xi32, #tpu.memory_space<vmem>>, %arg2: memref<3x1xi32, #tpu.memory_space<vmem>>, %arg3: memref<5x1xi32, #tpu.memory_space<vmem>>, %arg4: memref<6x20xf32, #tpu.memory_space<vmem>>, %arg5: memref<10x30xf32, #tpu.memory_space<vmem>>, %arg6: memref<20x32xf32, #tpu.memory_space<vmem>>, %arg7: memref<30x32xf32, #tpu.memory_space<vmem>>, %arg8: memref<3x6x10xf32, #tpu.memory_space<vmem>>, %arg9: memref<2x10x6xf32, #tpu.memory_space<vmem>>, %arg10: memref<6x32x32xf32, #tpu.memory_space<vmem>>, %arg11: memref<2x32x96xf32, #tpu.memory_space<vmem>>, %arg12: memref<2x32x64xf32, #tpu.memory_space<vmem>>, %arg13: memref<3x32x128xf32, #tpu.memory_space<vmem>>, %arg14: memref<128x128xf32, #tpu.memory_space<vmem>>, %arg15: memref<12x128xf32, #tpu.memory_space<vmem>>, %arg16: memref<6x32xf32, #tpu.memory_space<vmem>>, %arg17: memref<10x32xf32, #tpu.memory_space<vmem>>, %arg18: memref<5x128xf32, #tpu.memory_space<vmem>>, %arg19: memref<5x128xf32, #tpu.memory_space<vmem>>) attributes {dimension_semantics = [#tpu.dimension_semantics<arbitrary>], iteration_bounds = array<i64: 1>, scalar_prefetch = 0 : i64, scratch_operands = 0 : i64, tpu.core_type = #tpu.core_type<tc>, window_params = [{pipeline_mode = #tpu.pipeline_mode<synchronous>, transform_indices = @transform_0, window_bounds = array<i64: 4, 1>}, {pipeline_mode = #tpu.pipeline_mode<synchronous>, transform_indices = @transform_1, window_bounds = array<i64: 3, 1>}, {pipeline_mode = #tpu.pipeline_mode<synchronous>, transform_indices = @transform_2, window_bounds = array<i64: 5, 1>}, {pipeline_mode = #tpu.pipeline_mode<synchronous>, transform_indices = @transform_3, window_bounds = array<i64: 6, 20>}, {pipeline_mode = #tpu.pipeline_mode<synchronous>, transform_indices = @transform_4, window_bounds = array<i64: 10, 30>}, {pipeline_mode = #tpu.pipeline_mode<synchronous>, transform_indices = @transform_5, window_bounds = array<i64: 20, 32>}, {pipeline_mode = #tpu.pipeline_mode<synchronous>, transform_indices = @transform_6, window_bounds = array<i64: 30, 32>}, {pipeline_mode = #tpu.pipeline_mode<synchronous>, transform_indices = @transform_7, window_bounds = array<i64: 3, 6, 10>}, {pipeline_mode = #tpu.pipeline_mode<synchronous>, transform_indices = @transform_8, window_bounds = array<i64: 2, 10, 6>}, {pipeline_mode = #tpu.pipeline_mode<synchronous>, transform_indices = @transform_9, window_bounds = array<i64: 6, 32, 32>}, {pipeline_mode = #tpu.pipeline_mode<synchronous>, transform_indices = @transform_10, window_bounds = array<i64: 2, 32, 96>}, {pipeline_mode = #tpu.pipeline_mode<synchronous>, transform_indices = @transform_11, window_bounds = array<i64: 2, 32, 64>}, {pipeline_mode = #tpu.pipeline_mode<synchronous>, transform_indices = @transform_12, window_bounds = array<i64: 3, 32, 128>}, {pipeline_mode = #tpu.pipeline_mode<synchronous>, transform_indices = @transform_13, window_bounds = array<i64: 128, 128>}, {pipeline_mode = #tpu.pipeline_mode<synchronous>, transform_indices = @transform_14, window_bounds = array<i64: 12, 128>}, {pipeline_mode = #tpu.pipeline_mode<synchronous>, transform_indices = @transform_15, window_bounds = array<i64: 6, 32>}, {pipeline_mode = #tpu.pipeline_mode<synchronous>, transform_indices = @transform_16, window_bounds = array<i64: 10, 32>}, {pipeline_mode = #tpu.pipeline_mode<synchronous>, transform_indices = @transform_17, window_bounds = array<i64: 5, 128>}, {pipeline_mode = #tpu.pipeline_mode<synchronous>, transform_indices = @transform_18, window_bounds = array<i64: 5, 128>}]} {
    %c0 = arith.constant 0 : index
    %c0_0 = arith.constant 0 : index
    %0 = vector.load %arg15[%c0, %c0_0] : memref<12x128xf32, #tpu.memory_space<vmem>>, vector<12x128xf32>
    %1 = vector.extract_strided_slice %0 {offsets = [10, 0], sizes = [1, 128], strides = [1, 1]} : vector<12x128xf32> to vector<1x128xf32>
    %2 = vector.extract_strided_slice %0 {offsets = [11, 0], sizes = [1, 128], strides = [1, 1]} : vector<12x128xf32> to vector<1x128xf32>
    %c0_1 = arith.constant 0 : index
    %c0_2 = arith.constant 0 : index
    %3 = vector.load %arg4[%c0_1, %c0_2] : memref<6x20xf32, #tpu.memory_space<vmem>>, vector<6x20xf32>
    %c0_3 = arith.constant 0 : index
    %c0_4 = arith.constant 0 : index
    %4 = vector.load %arg6[%c0_3, %c0_4] : memref<20x32xf32, #tpu.memory_space<vmem>>, vector<20x32xf32>
    %cst = arith.constant dense<0.000000e+00> : vector<6x32xf32>
    %5 = tpu.matmul %3, %4, %cst {dimension_numbers = #tpu.dot_dimension_numbers<[1], [0], [0], [1], [0, 0, 1, 1], [], []>} : vector<6x20xf32>, vector<20x32xf32>, vector<6x32xf32> -> vector<6x32xf32>
    %c0_5 = arith.constant 0 : index
    %c0_6 = arith.constant 0 : index
    %6 = vector.load %arg5[%c0_5, %c0_6] : memref<10x30xf32, #tpu.memory_space<vmem>>, vector<10x30xf32>
    %c0_7 = arith.constant 0 : index
    %c0_8 = arith.constant 0 : index
    %7 = vector.load %arg7[%c0_7, %c0_8] : memref<30x32xf32, #tpu.memory_space<vmem>>, vector<30x32xf32>
    %cst_9 = arith.constant dense<0.000000e+00> : vector<10x32xf32>
    %8 = tpu.matmul %6, %7, %cst_9 {dimension_numbers = #tpu.dot_dimension_numbers<[1], [0], [0], [1], [0, 0, 1, 1], [], []>} : vector<10x30xf32>, vector<30x32xf32>, vector<10x32xf32> -> vector<10x32xf32>
    %c0_10 = arith.constant 0 : index
    %c0_11 = arith.constant 0 : index
    %c0_12 = arith.constant 0 : index
    %9 = vector.load %arg8[%c0_10, %c0_11, %c0_12] : memref<3x6x10xf32, #tpu.memory_space<vmem>>, vector<1x6x10xf32>
    %10 = vector.shape_cast %9 : vector<1x6x10xf32> to vector<6x10xf32>
    %c1 = arith.constant 1 : index
    %c0_13 = arith.constant 0 : index
    %c0_14 = arith.constant 0 : index
    %11 = vector.load %arg8[%c1, %c0_13, %c0_14] : memref<3x6x10xf32, #tpu.memory_space<vmem>>, vector<1x6x10xf32>
    %12 = vector.shape_cast %11 : vector<1x6x10xf32> to vector<6x10xf32>
    %c2 = arith.constant 2 : index
    %c0_15 = arith.constant 0 : index
    %c0_16 = arith.constant 0 : index
    %13 = vector.load %arg8[%c2, %c0_15, %c0_16] : memref<3x6x10xf32, #tpu.memory_space<vmem>>, vector<1x6x10xf32>
    %14 = vector.shape_cast %13 : vector<1x6x10xf32> to vector<6x10xf32>
    %c0_17 = arith.constant 0 : index
    %c0_18 = arith.constant 0 : index
    %c0_19 = arith.constant 0 : index
    %15 = vector.load %arg9[%c0_17, %c0_18, %c0_19] : memref<2x10x6xf32, #tpu.memory_space<vmem>>, vector<1x10x6xf32>
    %16 = vector.shape_cast %15 : vector<1x10x6xf32> to vector<10x6xf32>
    %c1_20 = arith.constant 1 : index
    %c0_21 = arith.constant 0 : index
    %c0_22 = arith.constant 0 : index
    %17 = vector.load %arg9[%c1_20, %c0_21, %c0_22] : memref<2x10x6xf32, #tpu.memory_space<vmem>>, vector<1x10x6xf32>
    %18 = vector.shape_cast %17 : vector<1x10x6xf32> to vector<10x6xf32>
    %c0_23 = arith.constant 0 : index
    %c0_24 = arith.constant 0 : index
    %c0_25 = arith.constant 0 : index
    %19 = vector.load %arg11[%c0_23, %c0_24, %c0_25] : memref<2x32x96xf32, #tpu.memory_space<vmem>>, vector<1x32x96xf32>
    %20 = vector.shape_cast %19 : vector<1x32x96xf32> to vector<32x96xf32>
    %cst_26 = arith.constant dense<0.000000e+00> : vector<10x96xf32>
    %21 = tpu.matmul %8, %20, %cst_26 {dimension_numbers = #tpu.dot_dimension_numbers<[1], [0], [0], [1], [0, 0, 1, 1], [], []>} : vector<10x32xf32>, vector<32x96xf32>, vector<10x96xf32> -> vector<10x96xf32>
    %22 = vector.extract_strided_slice %0 {offsets = [6, 0], sizes = [1, 96], strides = [1, 1]} : vector<12x128xf32> to vector<1x96xf32>
    %23 = vector.broadcast %22 : vector<1x96xf32> to vector<10x96xf32>
    %24 = arith.addf %21, %23 : vector<10x96xf32>
    %c0_27 = arith.constant 0 : index
    %c0_28 = arith.constant 0 : index
    %c0_29 = arith.constant 0 : index
    %25 = vector.load %arg10[%c0_27, %c0_28, %c0_29] : memref<6x32x32xf32, #tpu.memory_space<vmem>>, vector<1x32x32xf32>
    %26 = vector.shape_cast %25 : vector<1x32x32xf32> to vector<32x32xf32>
    %cst_30 = arith.constant dense<0.000000e+00> : vector<6x32xf32>
    %27 = tpu.matmul %5, %26, %cst_30 {dimension_numbers = #tpu.dot_dimension_numbers<[1], [0], [0], [1], [0, 0, 1, 1], [], []>} : vector<6x32xf32>, vector<32x32xf32>, vector<6x32xf32> -> vector<6x32xf32>
    %28 = vector.extract_strided_slice %0 {offsets = [0, 0], sizes = [1, 32], strides = [1, 1]} : vector<12x128xf32> to vector<1x32xf32>
    %29 = vector.broadcast %28 : vector<1x32xf32> to vector<6x32xf32>
    %30 = arith.addf %27, %29 : vector<6x32xf32>
    %31 = vector.extract_strided_slice %24 {offsets = [0, 0], sizes = [10, 32], strides = [1, 1]} : vector<10x96xf32> to vector<10x32xf32>
    %cst_31 = arith.constant dense<0.000000e+00> : vector<6x32xf32>
    %32 = tpu.matmul %10, %31, %cst_31 {dimension_numbers = #tpu.dot_dimension_numbers<[1], [0], [0], [1], [0, 0, 1, 1], [], []>} : vector<6x10xf32>, vector<10x32xf32>, vector<6x32xf32> -> vector<6x32xf32>
    %33 = arith.addf %30, %32 : vector<6x32xf32>
    %34 = vector.extract_strided_slice %24 {offsets = [0, 32], sizes = [10, 32], strides = [1, 1]} : vector<10x96xf32> to vector<10x32xf32>
    %cst_32 = arith.constant dense<0.000000e+00> : vector<6x32xf32>
    %35 = tpu.matmul %12, %34, %cst_32 {dimension_numbers = #tpu.dot_dimension_numbers<[1], [0], [0], [1], [0, 0, 1, 1], [], []>} : vector<6x10xf32>, vector<10x32xf32>, vector<6x32xf32> -> vector<6x32xf32>
    %36 = arith.addf %33, %35 : vector<6x32xf32>
    %37 = vector.extract_strided_slice %24 {offsets = [0, 64], sizes = [10, 32], strides = [1, 1]} : vector<10x96xf32> to vector<10x32xf32>
    %cst_33 = arith.constant dense<0.000000e+00> : vector<6x32xf32>
    %38 = tpu.matmul %14, %37, %cst_33 {dimension_numbers = #tpu.dot_dimension_numbers<[1], [0], [0], [1], [0, 0, 1, 1], [], []>} : vector<6x10xf32>, vector<10x32xf32>, vector<6x32xf32> -> vector<6x32xf32>
    %39 = arith.addf %36, %38 : vector<6x32xf32>
    %cst_34 = arith.constant 0.000000e+00 : f32
    %40 = vector.broadcast %cst_34 : f32 to vector<6x32xf32>
    %41 = arith.maximumf %39, %40 : vector<6x32xf32>
    %c0_35 = arith.constant 0 : index
    %c0_36 = arith.constant 0 : index
    %c0_37 = arith.constant 0 : index
    %42 = vector.load %arg12[%c0_35, %c0_36, %c0_37] : memref<2x32x64xf32, #tpu.memory_space<vmem>>, vector<1x32x64xf32>
    %43 = vector.shape_cast %42 : vector<1x32x64xf32> to vector<32x64xf32>
    %cst_38 = arith.constant dense<0.000000e+00> : vector<6x64xf32>
    %44 = tpu.matmul %41, %43, %cst_38 {dimension_numbers = #tpu.dot_dimension_numbers<[1], [0], [0], [1], [0, 0, 1, 1], [], []>} : vector<6x32xf32>, vector<32x64xf32>, vector<6x64xf32> -> vector<6x64xf32>
    %45 = vector.extract_strided_slice %0 {offsets = [8, 0], sizes = [1, 64], strides = [1, 1]} : vector<12x128xf32> to vector<1x64xf32>
    %46 = vector.broadcast %45 : vector<1x64xf32> to vector<6x64xf32>
    %47 = arith.addf %44, %46 : vector<6x64xf32>
    %c1_39 = arith.constant 1 : index
    %c0_40 = arith.constant 0 : index
    %c0_41 = arith.constant 0 : index
    %48 = vector.load %arg10[%c1_39, %c0_40, %c0_41] : memref<6x32x32xf32, #tpu.memory_space<vmem>>, vector<1x32x32xf32>
    %49 = vector.shape_cast %48 : vector<1x32x32xf32> to vector<32x32xf32>
    %cst_42 = arith.constant dense<0.000000e+00> : vector<10x32xf32>
    %50 = tpu.matmul %8, %49, %cst_42 {dimension_numbers = #tpu.dot_dimension_numbers<[1], [0], [0], [1], [0, 0, 1, 1], [], []>} : vector<10x32xf32>, vector<32x32xf32>, vector<10x32xf32> -> vector<10x32xf32>
    %51 = vector.extract_strided_slice %0 {offsets = [1, 0], sizes = [1, 32], strides = [1, 1]} : vector<12x128xf32> to vector<1x32xf32>
    %52 = vector.broadcast %51 : vector<1x32xf32> to vector<10x32xf32>
    %53 = arith.addf %50, %52 : vector<10x32xf32>
    %54 = vector.extract_strided_slice %47 {offsets = [0, 0], sizes = [6, 32], strides = [1, 1]} : vector<6x64xf32> to vector<6x32xf32>
    %cst_43 = arith.constant dense<0.000000e+00> : vector<10x32xf32>
    %55 = tpu.matmul %16, %54, %cst_43 {dimension_numbers = #tpu.dot_dimension_numbers<[1], [0], [0], [1], [0, 0, 1, 1], [], []>} : vector<10x6xf32>, vector<6x32xf32>, vector<10x32xf32> -> vector<10x32xf32>
    %56 = arith.addf %53, %55 : vector<10x32xf32>
    %57 = vector.extract_strided_slice %47 {offsets = [0, 32], sizes = [6, 32], strides = [1, 1]} : vector<6x64xf32> to vector<6x32xf32>
    %cst_44 = arith.constant dense<0.000000e+00> : vector<10x32xf32>
    %58 = tpu.matmul %18, %57, %cst_44 {dimension_numbers = #tpu.dot_dimension_numbers<[1], [0], [0], [1], [0, 0, 1, 1], [], []>} : vector<10x6xf32>, vector<6x32xf32>, vector<10x32xf32> -> vector<10x32xf32>
    %59 = arith.addf %56, %58 : vector<10x32xf32>
    %cst_45 = arith.constant 0.000000e+00 : f32
    %60 = vector.broadcast %cst_45 : f32 to vector<10x32xf32>
    %61 = arith.maximumf %59, %60 : vector<10x32xf32>
    %c1_46 = arith.constant 1 : index
    %c0_47 = arith.constant 0 : index
    %c0_48 = arith.constant 0 : index
    %62 = vector.load %arg11[%c1_46, %c0_47, %c0_48] : memref<2x32x96xf32, #tpu.memory_space<vmem>>, vector<1x32x96xf32>
    %63 = vector.shape_cast %62 : vector<1x32x96xf32> to vector<32x96xf32>
    %cst_49 = arith.constant dense<0.000000e+00> : vector<10x96xf32>
    %64 = tpu.matmul %61, %63, %cst_49 {dimension_numbers = #tpu.dot_dimension_numbers<[1], [0], [0], [1], [0, 0, 1, 1], [], []>} : vector<10x32xf32>, vector<32x96xf32>, vector<10x96xf32> -> vector<10x96xf32>
    %65 = vector.extract_strided_slice %0 {offsets = [7, 0], sizes = [1, 96], strides = [1, 1]} : vector<12x128xf32> to vector<1x96xf32>
    %66 = vector.broadcast %65 : vector<1x96xf32> to vector<10x96xf32>
    %67 = arith.addf %64, %66 : vector<10x96xf32>
    %c2_50 = arith.constant 2 : index
    %c0_51 = arith.constant 0 : index
    %c0_52 = arith.constant 0 : index
    %68 = vector.load %arg10[%c2_50, %c0_51, %c0_52] : memref<6x32x32xf32, #tpu.memory_space<vmem>>, vector<1x32x32xf32>
    %69 = vector.shape_cast %68 : vector<1x32x32xf32> to vector<32x32xf32>
    %cst_53 = arith.constant dense<0.000000e+00> : vector<6x32xf32>
    %70 = tpu.matmul %41, %69, %cst_53 {dimension_numbers = #tpu.dot_dimension_numbers<[1], [0], [0], [1], [0, 0, 1, 1], [], []>} : vector<6x32xf32>, vector<32x32xf32>, vector<6x32xf32> -> vector<6x32xf32>
    %71 = vector.extract_strided_slice %0 {offsets = [2, 0], sizes = [1, 32], strides = [1, 1]} : vector<12x128xf32> to vector<1x32xf32>
    %72 = vector.broadcast %71 : vector<1x32xf32> to vector<6x32xf32>
    %73 = arith.addf %70, %72 : vector<6x32xf32>
    %74 = vector.extract_strided_slice %67 {offsets = [0, 0], sizes = [10, 32], strides = [1, 1]} : vector<10x96xf32> to vector<10x32xf32>
    %cst_54 = arith.constant dense<0.000000e+00> : vector<6x32xf32>
    %75 = tpu.matmul %10, %74, %cst_54 {dimension_numbers = #tpu.dot_dimension_numbers<[1], [0], [0], [1], [0, 0, 1, 1], [], []>} : vector<6x10xf32>, vector<10x32xf32>, vector<6x32xf32> -> vector<6x32xf32>
    %76 = arith.addf %73, %75 : vector<6x32xf32>
    %77 = vector.extract_strided_slice %67 {offsets = [0, 32], sizes = [10, 32], strides = [1, 1]} : vector<10x96xf32> to vector<10x32xf32>
    %cst_55 = arith.constant dense<0.000000e+00> : vector<6x32xf32>
    %78 = tpu.matmul %12, %77, %cst_55 {dimension_numbers = #tpu.dot_dimension_numbers<[1], [0], [0], [1], [0, 0, 1, 1], [], []>} : vector<6x10xf32>, vector<10x32xf32>, vector<6x32xf32> -> vector<6x32xf32>
    %79 = arith.addf %76, %78 : vector<6x32xf32>
    %80 = vector.extract_strided_slice %67 {offsets = [0, 64], sizes = [10, 32], strides = [1, 1]} : vector<10x96xf32> to vector<10x32xf32>
    %cst_56 = arith.constant dense<0.000000e+00> : vector<6x32xf32>
    %81 = tpu.matmul %14, %80, %cst_56 {dimension_numbers = #tpu.dot_dimension_numbers<[1], [0], [0], [1], [0, 0, 1, 1], [], []>} : vector<6x10xf32>, vector<10x32xf32>, vector<6x32xf32> -> vector<6x32xf32>
    %82 = arith.addf %79, %81 : vector<6x32xf32>
    %cst_57 = arith.constant 0.000000e+00 : f32
    %83 = vector.broadcast %cst_57 : f32 to vector<6x32xf32>
    %84 = arith.maximumf %82, %83 : vector<6x32xf32>
    %c1_58 = arith.constant 1 : index
    %c0_59 = arith.constant 0 : index
    %c0_60 = arith.constant 0 : index
    %85 = vector.load %arg12[%c1_58, %c0_59, %c0_60] : memref<2x32x64xf32, #tpu.memory_space<vmem>>, vector<1x32x64xf32>
    %86 = vector.shape_cast %85 : vector<1x32x64xf32> to vector<32x64xf32>
    %cst_61 = arith.constant dense<0.000000e+00> : vector<6x64xf32>
    %87 = tpu.matmul %84, %86, %cst_61 {dimension_numbers = #tpu.dot_dimension_numbers<[1], [0], [0], [1], [0, 0, 1, 1], [], []>} : vector<6x32xf32>, vector<32x64xf32>, vector<6x64xf32> -> vector<6x64xf32>
    %88 = vector.extract_strided_slice %0 {offsets = [9, 0], sizes = [1, 64], strides = [1, 1]} : vector<12x128xf32> to vector<1x64xf32>
    %89 = vector.broadcast %88 : vector<1x64xf32> to vector<6x64xf32>
    %90 = arith.addf %87, %89 : vector<6x64xf32>
    %c3 = arith.constant 3 : index
    %c0_62 = arith.constant 0 : index
    %c0_63 = arith.constant 0 : index
    %91 = vector.load %arg10[%c3, %c0_62, %c0_63] : memref<6x32x32xf32, #tpu.memory_space<vmem>>, vector<1x32x32xf32>
    %92 = vector.shape_cast %91 : vector<1x32x32xf32> to vector<32x32xf32>
    %cst_64 = arith.constant dense<0.000000e+00> : vector<10x32xf32>
    %93 = tpu.matmul %61, %92, %cst_64 {dimension_numbers = #tpu.dot_dimension_numbers<[1], [0], [0], [1], [0, 0, 1, 1], [], []>} : vector<10x32xf32>, vector<32x32xf32>, vector<10x32xf32> -> vector<10x32xf32>
    %94 = vector.extract_strided_slice %0 {offsets = [3, 0], sizes = [1, 32], strides = [1, 1]} : vector<12x128xf32> to vector<1x32xf32>
    %95 = vector.broadcast %94 : vector<1x32xf32> to vector<10x32xf32>
    %96 = arith.addf %93, %95 : vector<10x32xf32>
    %97 = vector.extract_strided_slice %90 {offsets = [0, 0], sizes = [6, 32], strides = [1, 1]} : vector<6x64xf32> to vector<6x32xf32>
    %cst_65 = arith.constant dense<0.000000e+00> : vector<10x32xf32>
    %98 = tpu.matmul %16, %97, %cst_65 {dimension_numbers = #tpu.dot_dimension_numbers<[1], [0], [0], [1], [0, 0, 1, 1], [], []>} : vector<10x6xf32>, vector<6x32xf32>, vector<10x32xf32> -> vector<10x32xf32>
    %99 = arith.addf %96, %98 : vector<10x32xf32>
    %100 = vector.extract_strided_slice %90 {offsets = [0, 32], sizes = [6, 32], strides = [1, 1]} : vector<6x64xf32> to vector<6x32xf32>
    %cst_66 = arith.constant dense<0.000000e+00> : vector<10x32xf32>
    %101 = tpu.matmul %18, %100, %cst_66 {dimension_numbers = #tpu.dot_dimension_numbers<[1], [0], [0], [1], [0, 0, 1, 1], [], []>} : vector<10x6xf32>, vector<6x32xf32>, vector<10x32xf32> -> vector<10x32xf32>
    %102 = arith.addf %99, %101 : vector<10x32xf32>
    %cst_67 = arith.constant 0.000000e+00 : f32
    %103 = vector.broadcast %cst_67 : f32 to vector<10x32xf32>
    %104 = arith.maximumf %102, %103 : vector<10x32xf32>
    %c0_68 = arith.constant 0 : index
    %c0_69 = arith.constant 0 : index
    %105 = vector.load %arg16[%c0_68, %c0_69] : memref<6x32xf32, #tpu.memory_space<vmem>>, vector<6x32xf32>
    tpu.vector_store %arg16[%c0_68, %c0_69], %84 {strides = array<i32>} : memref<6x32xf32, #tpu.memory_space<vmem>>, vector<6x32xf32>,
    %c0_70 = arith.constant 0 : index
    %c0_71 = arith.constant 0 : index
    %106 = vector.load %arg17[%c0_70, %c0_71] : memref<10x32xf32, #tpu.memory_space<vmem>>, vector<10x32xf32>
    tpu.vector_store %arg17[%c0_70, %c0_71], %104 {strides = array<i32>} : memref<10x32xf32, #tpu.memory_space<vmem>>, vector<10x32xf32>,
    %107 = tpu.iota {dimensions = array<i32: 1>} : vector<4x10xi32>
    %c0_72 = arith.constant 0 : index
    %c0_73 = arith.constant 0 : index
    %108 = vector.load %arg1[%c0_72, %c0_73] : memref<4x1xi32, #tpu.memory_space<vmem>>, vector<4x1xi32>
    %109 = vector.broadcast %108 : vector<4x1xi32> to vector<4x10xi32>
    %110 = arith.cmpi eq, %107, %109 : vector<4x10xi32>
    %cst_74 = arith.constant 1.000000e+00 : f32
    %cst_75 = arith.constant 0.000000e+00 : f32
    %111 = vector.broadcast %cst_74 : f32 to vector<4x10xf32>
    %112 = vector.broadcast %cst_75 : f32 to vector<4x10xf32>
    %113 = arith.select %110, %111, %112 : vector<4x10xi1>, vector<4x10xf32>
    %cst_76 = arith.constant dense<0.000000e+00> : vector<4x32xf32>
    %114 = tpu.matmul %113, %104, %cst_76 {dimension_numbers = #tpu.dot_dimension_numbers<[1], [0], [0], [1], [0, 0, 1, 1], [], []>} : vector<4x10xf32>, vector<10x32xf32>, vector<4x32xf32> -> vector<4x32xf32>
    %115 = tpu.iota {dimensions = array<i32: 1>} : vector<3x6xi32>
    %c0_77 = arith.constant 0 : index
    %c0_78 = arith.constant 0 : index
    %116 = vector.load %arg2[%c0_77, %c0_78] : memref<3x1xi32, #tpu.memory_space<vmem>>, vector<3x1xi32>
    %117 = vector.broadcast %116 : vector<3x1xi32> to vector<3x6xi32>
    %118 = arith.cmpi eq, %115, %117 : vector<3x6xi32>
    %cst_79 = arith.constant 1.000000e+00 : f32
    %cst_80 = arith.constant 0.000000e+00 : f32
    %119 = vector.broadcast %cst_79 : f32 to vector<3x6xf32>
    %120 = vector.broadcast %cst_80 : f32 to vector<3x6xf32>
    %121 = arith.select %118, %119, %120 : vector<3x6xi1>, vector<3x6xf32>
    %cst_81 = arith.constant dense<0.000000e+00> : vector<3x32xf32>
    %122 = tpu.matmul %121, %84, %cst_81 {dimension_numbers = #tpu.dot_dimension_numbers<[1], [0], [0], [1], [0, 0, 1, 1], [], []>} : vector<3x6xf32>, vector<6x32xf32>, vector<3x32xf32> -> vector<3x32xf32>
    %123 = tpu.iota {dimensions = array<i32: 1>} : vector<5x10xi32>
    %c0_82 = arith.constant 0 : index
    %c0_83 = arith.constant 0 : index
    %124 = vector.load %arg3[%c0_82, %c0_83] : memref<5x1xi32, #tpu.memory_space<vmem>>, vector<5x1xi32>
    %125 = vector.broadcast %124 : vector<5x1xi32> to vector<5x10xi32>
    %126 = arith.cmpi eq, %123, %125 : vector<5x10xi32>
    %cst_84 = arith.constant 1.000000e+00 : f32
    %cst_85 = arith.constant 0.000000e+00 : f32
    %127 = vector.broadcast %cst_84 : f32 to vector<5x10xf32>
    %128 = vector.broadcast %cst_85 : f32 to vector<5x10xf32>
    %129 = arith.select %126, %127, %128 : vector<5x10xi1>, vector<5x10xf32>
    %cst_86 = arith.constant dense<0.000000e+00> : vector<5x32xf32>
    %130 = tpu.matmul %129, %104, %cst_86 {dimension_numbers = #tpu.dot_dimension_numbers<[1], [0], [0], [1], [0, 0, 1, 1], [], []>} : vector<5x10xf32>, vector<10x32xf32>, vector<5x32xf32> -> vector<5x32xf32>
    %c4 = arith.constant 4 : index
    %c0_87 = arith.constant 0 : index
    %c0_88 = arith.constant 0 : index
    %131 = vector.load %arg10[%c4, %c0_87, %c0_88] : memref<6x32x32xf32, #tpu.memory_space<vmem>>, vector<1x32x32xf32>
    %132 = vector.shape_cast %131 : vector<1x32x32xf32> to vector<32x32xf32>
    %cst_89 = arith.constant dense<0.000000e+00> : vector<4x32xf32>
    %133 = tpu.matmul %114, %132, %cst_89 {dimension_numbers = #tpu.dot_dimension_numbers<[1], [0], [0], [1], [0, 0, 1, 1], [], []>} : vector<4x32xf32>, vector<32x32xf32>, vector<4x32xf32> -> vector<4x32xf32>
    %134 = vector.extract_strided_slice %0 {offsets = [4, 0], sizes = [1, 32], strides = [1, 1]} : vector<12x128xf32> to vector<1x32xf32>
    %135 = vector.broadcast %134 : vector<1x32xf32> to vector<4x32xf32>
    %136 = arith.addf %133, %135 : vector<4x32xf32>
    %cst_90 = arith.constant dense<0.000000e+00> : vector<4x5xf32>
    %137 = tpu.matmul %136, %130, %cst_90 {dimension_numbers = #tpu.dot_dimension_numbers<[1], [1], [0], [0], [0, 0, 1, 0], [], []>} : vector<4x32xf32>, vector<5x32xf32>, vector<4x5xf32> -> vector<4x5xf32>
    %c5 = arith.constant 5 : index
    %c0_91 = arith.constant 0 : index
    %c0_92 = arith.constant 0 : index
    %138 = vector.load %arg10[%c5, %c0_91, %c0_92] : memref<6x32x32xf32, #tpu.memory_space<vmem>>, vector<1x32x32xf32>
    %139 = vector.shape_cast %138 : vector<1x32x32xf32> to vector<32x32xf32>
    %cst_93 = arith.constant dense<0.000000e+00> : vector<3x32xf32>
    %140 = tpu.matmul %122, %139, %cst_93 {dimension_numbers = #tpu.dot_dimension_numbers<[1], [0], [0], [1], [0, 0, 1, 1], [], []>} : vector<3x32xf32>, vector<32x32xf32>, vector<3x32xf32> -> vector<3x32xf32>
    %141 = vector.extract_strided_slice %0 {offsets = [5, 0], sizes = [1, 32], strides = [1, 1]} : vector<12x128xf32> to vector<1x32xf32>
    %142 = vector.broadcast %141 : vector<1x32xf32> to vector<3x32xf32>
    %143 = arith.addf %140, %142 : vector<3x32xf32>
    %cst_94 = arith.constant dense<0.000000e+00> : vector<3x5xf32>
    %144 = tpu.matmul %143, %130, %cst_94 {dimension_numbers = #tpu.dot_dimension_numbers<[1], [1], [0], [0], [0, 0, 1, 0], [], []>} : vector<3x32xf32>, vector<5x32xf32>, vector<3x5xf32> -> vector<3x5xf32>
    %cst_95 = arith.constant dense<0xFF800000> : vector<5xf32>
    %145 = vector.multi_reduction <maximumf>, %137, %cst_95 [0] : vector<4x5xf32> to vector<5xf32>
    %146 = vector.shape_cast %145 : vector<5xf32> to vector<1x5xf32>
    %147 = vector.broadcast %146 : vector<1x5xf32> to vector<4x5xf32>
    %148 = arith.subf %137, %147 : vector<4x5xf32>
    %149 = math.exp %148 : vector<4x5xf32>
    %cst_96 = arith.constant dense<0.000000e+00> : vector<5xf32>
    %150 = vector.multi_reduction <add>, %149, %cst_96 [0] : vector<4x5xf32> to vector<5xf32>
    %151 = vector.shape_cast %150 : vector<5xf32> to vector<1x5xf32>
    %152 = vector.broadcast %151 : vector<1x5xf32> to vector<4x5xf32>
    %153 = arith.divf %149, %152 : vector<4x5xf32>
    %cst_97 = arith.constant dense<0xFF800000> : vector<5xf32>
    %154 = vector.multi_reduction <maximumf>, %144, %cst_97 [0] : vector<3x5xf32> to vector<5xf32>
    %155 = vector.shape_cast %154 : vector<5xf32> to vector<1x5xf32>
    %156 = vector.broadcast %155 : vector<1x5xf32> to vector<3x5xf32>
    %157 = arith.subf %144, %156 : vector<3x5xf32>
    %158 = math.exp %157 : vector<3x5xf32>
    %cst_98 = arith.constant dense<0.000000e+00> : vector<5xf32>
    %159 = vector.multi_reduction <add>, %158, %cst_98 [0] : vector<3x5xf32> to vector<5xf32>
    %160 = vector.shape_cast %159 : vector<5xf32> to vector<1x5xf32>
    %161 = vector.broadcast %160 : vector<1x5xf32> to vector<3x5xf32>
    %162 = arith.divf %158, %161 : vector<3x5xf32>
    %cst_99 = arith.constant dense<0.000000e+00> : vector<5x32xf32>
    %163 = tpu.matmul %153, %114, %cst_99 {dimension_numbers = #tpu.dot_dimension_numbers<[0], [0], [1], [1], [0, 1, 1, 1], [], []>} : vector<4x5xf32>, vector<4x32xf32>, vector<5x32xf32> -> vector<5x32xf32>
    %cst_100 = arith.constant dense<0.000000e+00> : vector<5x32xf32>
    %164 = tpu.matmul %162, %122, %cst_100 {dimension_numbers = #tpu.dot_dimension_numbers<[0], [0], [1], [1], [0, 1, 1, 1], [], []>} : vector<3x5xf32>, vector<3x32xf32>, vector<5x32xf32> -> vector<5x32xf32>
    %c0_101 = arith.constant 0 : index
    %c0_102 = arith.constant 0 : index
    %c0_103 = arith.constant 0 : index
    %165 = vector.load %arg13[%c0_101, %c0_102, %c0_103] : memref<3x32x128xf32, #tpu.memory_space<vmem>>, vector<1x32x128xf32>
    %166 = vector.shape_cast %165 : vector<1x32x128xf32> to vector<32x128xf32>
    %cst_104 = arith.constant dense<0.000000e+00> : vector<5x128xf32>
    %167 = tpu.matmul %130, %166, %cst_104 {dimension_numbers = #tpu.dot_dimension_numbers<[1], [0], [0], [1], [0, 0, 1, 1], [], []>} : vector<5x32xf32>, vector<32x128xf32>, vector<5x128xf32> -> vector<5x128xf32>
    %c1_105 = arith.constant 1 : index
    %c0_106 = arith.constant 0 : index
    %c0_107 = arith.constant 0 : index
    %168 = vector.load %arg13[%c1_105, %c0_106, %c0_107] : memref<3x32x128xf32, #tpu.memory_space<vmem>>, vector<1x32x128xf32>
    %169 = vector.shape_cast %168 : vector<1x32x128xf32> to vector<32x128xf32>
    %cst_108 = arith.constant dense<0.000000e+00> : vector<5x128xf32>
    %170 = tpu.matmul %163, %169, %cst_108 {dimension_numbers = #tpu.dot_dimension_numbers<[1], [0], [0], [1], [0, 0, 1, 1], [], []>} : vector<5x32xf32>, vector<32x128xf32>, vector<5x128xf32> -> vector<5x128xf32>
    %171 = arith.addf %167, %170 : vector<5x128xf32>
    %c2_109 = arith.constant 2 : index
    %c0_110 = arith.constant 0 : index
    %c0_111 = arith.constant 0 : index
    %172 = vector.load %arg13[%c2_109, %c0_110, %c0_111] : memref<3x32x128xf32, #tpu.memory_space<vmem>>, vector<1x32x128xf32>
    %173 = vector.shape_cast %172 : vector<1x32x128xf32> to vector<32x128xf32>
    %cst_112 = arith.constant dense<0.000000e+00> : vector<5x128xf32>
    %174 = tpu.matmul %164, %173, %cst_112 {dimension_numbers = #tpu.dot_dimension_numbers<[1], [0], [0], [1], [0, 0, 1, 1], [], []>} : vector<5x32xf32>, vector<32x128xf32>, vector<5x128xf32> -> vector<5x128xf32>
    %175 = arith.addf %171, %174 : vector<5x128xf32>
    %176 = vector.broadcast %1 : vector<1x128xf32> to vector<5x128xf32>
    %177 = arith.addf %175, %176 : vector<5x128xf32>
    %178 = math.tanh %177 : vector<5x128xf32>
    %c0_113 = arith.constant 0 : index
    %c0_114 = arith.constant 0 : index
    %179 = vector.load %arg18[%c0_113, %c0_114] : memref<5x128xf32, #tpu.memory_space<vmem>>, vector<5x128xf32>
    tpu.vector_store %arg18[%c0_113, %c0_114], %178 {strides = array<i32>} : memref<5x128xf32, #tpu.memory_space<vmem>>, vector<5x128xf32>,
    %c0_115 = arith.constant 0 : index
    %c0_116 = arith.constant 0 : index
    %180 = vector.load %arg14[%c0_115, %c0_116] : memref<128x128xf32, #tpu.memory_space<vmem>>, vector<128x128xf32>
    %cst_117 = arith.constant dense<0.000000e+00> : vector<5x128xf32>
    %181 = tpu.matmul %178, %180, %cst_117 {dimension_numbers = #tpu.dot_dimension_numbers<[1], [0], [0], [1], [0, 0, 1, 1], [], []>} : vector<5x128xf32>, vector<128x128xf32>, vector<5x128xf32> -> vector<5x128xf32>
    %182 = vector.broadcast %2 : vector<1x128xf32> to vector<5x128xf32>
    %183 = arith.addf %181, %182 : vector<5x128xf32>
    %c0_118 = arith.constant 0 : index
    %c0_119 = arith.constant 0 : index
    %184 = vector.load %arg19[%c0_118, %c0_119] : memref<5x128xf32, #tpu.memory_space<vmem>>, vector<5x128xf32>
    tpu.vector_store %arg19[%c0_118, %c0_119], %183 {strides = array<i32>} : memref<5x128xf32, #tpu.memory_space<vmem>>, vector<5x128xf32>,
    return
  }
  func.func @transform_0(%arg0: i32) -> (i32, i32) {
    %c0_i32 = arith.constant 0 : i32
    %c0_i32_0 = arith.constant 0 : i32
    %c0_i32_1 = arith.constant 0 : i32
    return %c0_i32, %c0_i32_0 : i32, i32
  }
  func.func @transform_1(%arg0: i32) -> (i32, i32) {
    %c0_i32 = arith.constant 0 : i32
    %c0_i32_0 = arith.constant 0 : i32
    %c0_i32_1 = arith.constant 0 : i32
    return %c0_i32, %c0_i32_0 : i32, i32
  }
  func.func @transform_2(%arg0: i32) -> (i32, i32) {
    %c0_i32 = arith.constant 0 : i32
    %c0_i32_0 = arith.constant 0 : i32
    %c0_i32_1 = arith.constant 0 : i32
    return %c0_i32, %c0_i32_0 : i32, i32
  }
  func.func @transform_3(%arg0: i32) -> (i32, i32) {
    %c0_i32 = arith.constant 0 : i32
    %c0_i32_0 = arith.constant 0 : i32
    %c0_i32_1 = arith.constant 0 : i32
    return %c0_i32, %c0_i32_0 : i32, i32
  }
  func.func @transform_4(%arg0: i32) -> (i32, i32) {
    %c0_i32 = arith.constant 0 : i32
    %c0_i32_0 = arith.constant 0 : i32
    %c0_i32_1 = arith.constant 0 : i32
    return %c0_i32, %c0_i32_0 : i32, i32
  }
  func.func @transform_5(%arg0: i32) -> (i32, i32) {
    %c0_i32 = arith.constant 0 : i32
    %c0_i32_0 = arith.constant 0 : i32
    %c0_i32_1 = arith.constant 0 : i32
    return %c0_i32, %c0_i32_0 : i32, i32
  }
  func.func @transform_6(%arg0: i32) -> (i32, i32) {
    %c0_i32 = arith.constant 0 : i32
    %c0_i32_0 = arith.constant 0 : i32
    %c0_i32_1 = arith.constant 0 : i32
    return %c0_i32, %c0_i32_0 : i32, i32
  }
  func.func @transform_7(%arg0: i32) -> (i32, i32, i32) {
    %c0_i32 = arith.constant 0 : i32
    %c0_i32_0 = arith.constant 0 : i32
    %c0_i32_1 = arith.constant 0 : i32
    %c0_i32_2 = arith.constant 0 : i32
    return %c0_i32, %c0_i32_0, %c0_i32_1 : i32, i32, i32
  }
  func.func @transform_8(%arg0: i32) -> (i32, i32, i32) {
    %c0_i32 = arith.constant 0 : i32
    %c0_i32_0 = arith.constant 0 : i32
    %c0_i32_1 = arith.constant 0 : i32
    %c0_i32_2 = arith.constant 0 : i32
    return %c0_i32, %c0_i32_0, %c0_i32_1 : i32, i32, i32
  }
  func.func @transform_9(%arg0: i32) -> (i32, i32, i32) {
    %c0_i32 = arith.constant 0 : i32
    %c0_i32_0 = arith.constant 0 : i32
    %c0_i32_1 = arith.constant 0 : i32
    %c0_i32_2 = arith.constant 0 : i32
    return %c0_i32, %c0_i32_0, %c0_i32_1 : i32, i32, i32
  }
  func.func @transform_10(%arg0: i32) -> (i32, i32, i32) {
    %c0_i32 = arith.constant 0 : i32
    %c0_i32_0 = arith.constant 0 : i32
    %c0_i32_1 = arith.constant 0 : i32
    %c0_i32_2 = arith.constant 0 : i32
    return %c0_i32, %c0_i32_0, %c0_i32_1 : i32, i32, i32
  }
  func.func @transform_11(%arg0: i32) -> (i32, i32, i32) {
    %c0_i32 = arith.constant 0 : i32
    %c0_i32_0 = arith.constant 0 : i32
    %c0_i32_1 = arith.constant 0 : i32
    %c0_i32_2 = arith.constant 0 : i32
    return %c0_i32, %c0_i32_0, %c0_i32_1 : i32, i32, i32
  }
  func.func @transform_12(%arg0: i32) -> (i32, i32, i32) {
    %c0_i32 = arith.constant 0 : i32
    %c0_i32_0 = arith.constant 0 : i32
    %c0_i32_1 = arith.constant 0 : i32
    %c0_i32_2 = arith.constant 0 : i32
    return %c0_i32, %c0_i32_0, %c0_i32_1 : i32, i32, i32
  }
  func.func @transform_13(%arg0: i32) -> (i32, i32) {
    %c0_i32 = arith.constant 0 : i32
    %c0_i32_0 = arith.constant 0 : i32
    %c0_i32_1 = arith.constant 0 : i32
    return %c0_i32, %c0_i32_0 : i32, i32
  }
  func.func @transform_14(%arg0: i32) -> (i32, i32) {
    %c0_i32 = arith.constant 0 : i32
    %c0_i32_0 = arith.constant 0 : i32
    %c0_i32_1 = arith.constant 0 : i32
    return %c0_i32, %c0_i32_0 : i32, i32
  }
  func.func @transform_15(%arg0: i32) -> (i32, i32) {
    %c0_i32 = arith.constant 0 : i32
    %c0_i32_0 = arith.constant 0 : i32
    %c0_i32_1 = arith.constant 0 : i32
    return %c0_i32, %c0_i32_0 : i32, i32
  }
  func.func @transform_16(%arg0: i32) -> (i32, i32) {
    %c0_i32 = arith.constant 0 : i32
    %c0_i32_0 = arith.constant 0 : i32
    %c0_i32_1 = arith.constant 0 : i32
    return %c0_i32, %c0_i32_0 : i32, i32
  }
  func.func @transform_17(%arg0: i32) -> (i32, i32) {
    %c0_i32 = arith.constant 0 : i32
    %c0_i32_0 = arith.constant 0 : i32
    %c0_i32_1 = arith.constant 0 : i32
    return %c0_i32, %c0_i32_0 : i32, i32
  }
  func.func @transform_18(%arg0: i32) -> (i32, i32) {
    %c0_i32 = arith.constant 0 : i32
    %c0_i32_0 = arith.constant 0 : i32
    %c0_i32_1 = arith.constant 0 : i32
    return %c0_i32, %c0_i32_0 : i32, i32
  }
}

</mosaic_0001>

<llo_original>
// kernel: _forward_jit.1
$region0: #{_forward_jit.1}
  #allocation0 [shape = 'u32[]', space=smem, size = 0x4, offset = 0x4, fixed_abs, tag = 'smem constant byte address 0x4 - core index']
  #allocation1 [shape = 'u32[144,128]{1,0:T(1,128)}', space=vmem, size = 0x12000, scoped, tag = 'internal scratch']
  %s0 = inlined_call_operand.vmem [shape: s32[4,1], index: 0, kind: input, shape index: {}]
  %s1 = inlined_call_operand.vmem [shape: s32[3,1], index: 1, kind: input, shape index: {}]
  %s2 = inlined_call_operand.vmem [shape: s32[5,1], index: 2, kind: input, shape index: {}]
  %s3 = inlined_call_operand.vmem [shape: f32[6,20], index: 3, kind: input, shape index: {}]
  %s4 = inlined_call_operand.vmem [shape: f32[10,30], index: 4, kind: input, shape index: {}]
  %s5 = inlined_call_operand.vmem [shape: f32[20,32], index: 5, kind: input, shape index: {}]
  %s6 = inlined_call_operand.vmem [shape: f32[30,32], index: 6, kind: input, shape index: {}]
  %s7 = inlined_call_operand.vmem [shape: f32[3,6,10], index: 7, kind: input, shape index: {}]
  %s8 = inlined_call_operand.vmem [shape: f32[2,10,6], index: 8, kind: input, shape index: {}]
  %s9 = inlined_call_operand.vmem [shape: f32[6,32,32], index: 9, kind: input, shape index: {}]
  %s10 = inlined_call_operand.vmem [shape: f32[2,32,96], index: 10, kind: input, shape index: {}]
  %s11 = inlined_call_operand.vmem [shape: f32[2,32,64], index: 11, kind: input, shape index: {}]
  %s12 = inlined_call_operand.vmem [shape: f32[3,32,128], index: 12, kind: input, shape index: {}]
  %s13 = inlined_call_operand.vmem [shape: f32[128,128], index: 13, kind: input, shape index: {}]
  %s14 = inlined_call_operand.vmem [shape: f32[12,128], index: 14, kind: input, shape index: {}]
  %s15 = inlined_call_operand.hbm [shape: f32[6,32], index: 15, kind: output, shape index: {0}]
  %s16 = inlined_call_operand.hbm [shape: f32[10,32], index: 16, kind: output, shape index: {1}]
  %s17 = inlined_call_operand.hbm [shape: f32[5,128], index: 17, kind: output, shape index: {2}]
  %s18 = inlined_call_operand.vmem [shape: f32[5,128], index: 18, kind: output, shape index: {3}]
  %19 = xla_tuple %s15, %s16, %s17, %s18
  %s20 = sld [smem:[#allocation0]]
  $region94: #{_forward_jit.1} parent=0
    _
  %s22 = ssub.s32 1, %s20
  %s23 = scalar_select 0, %s22, %s20
  $region1: #{_forward_jit.1} parent=0
    #allocation2 [shape = 'u8[4096]{0}', space=vmem, size = 0x1000, scoped, tag = 'output window, operand 0, single buffered']
    #allocation3 [shape = 's32[1]{0}', space=sflag, size = 0x4, scoped, tag = 'scoped memory for _forward_jit.1']
    #allocation4 [shape = 'u8[8192]{0}', space=vmem, size = 0x2000, scoped, tag = 'output window, operand 1, single buffered']
    #allocation5 [shape = 's32[1]{0}', space=sflag, size = 0x4, scoped, tag = 'scoped memory for _forward_jit.1']
    #allocation6 [shape = 'u8[4096]{0}', space=vmem, size = 0x1000, scoped, tag = 'output window, operand 2, single buffered']
    %24 = vsyncpa [#allocation3], 0
    %25 = vsyncpa [#allocation5], 0
    // Predicated region
    $region2: #{_forward_jit.1} parent=1 // pred_check
      _
    $region3: #{_forward_jit.1} parent=1 // pred_check_branch
      %27 = sbr.rel (0) target = $region5
    $region4: #{_forward_jit.1} parent=1 // pred_region
      _
    $region5: #{_forward_jit.1} parent=1 // pred_fallthru
      _
    // Predicated region
    $region6: #{_forward_jit.1} parent=1 // pred_check
      _
    $region7: #{_forward_jit.1} parent=1 // pred_check_branch
      %29 = sbr.rel (0) target = $region9
    $region8: #{_forward_jit.1} parent=1 // pred_region
      _
    $region9: #{_forward_jit.1} parent=1 // pred_fallthru
      _
    // Predicated region
    $region10: #{_forward_jit.1} parent=1 // pred_check
      _
    $region11: #{_forward_jit.1} parent=1 // pred_check_branch
      %31 = sbr.rel (0) target = $region13
    $region12: #{_forward_jit.1} parent=1 // pred_region
      _
    $region13: #{_forward_jit.1} parent=1 // pred_fallthru
      _
    // Predicated region
    $region14: #{_forward_jit.1} parent=1 // pred_check
      _
    $region15: #{_forward_jit.1} parent=1 // pred_check_branch
      %33 = sbr.rel (0) target = $region17
    $region16: #{_forward_jit.1} parent=1 // pred_region
      _
    $region17: #{_forward_jit.1} parent=1 // pred_fallthru
      _
    // Predicated region
    $region18: #{_forward_jit.1} parent=1 // pred_check
      _
    $region19: #{_forward_jit.1} parent=1 // pred_check_branch
      %35 = sbr.rel (0) target = $region21
    $region20: #{_forward_jit.1} parent=1 // pred_region
      _
    $region21: #{_forward_jit.1} parent=1 // pred_fallthru
      _
    // Predicated region
    $region22: #{_forward_jit.1} parent=1 // pred_check
      _
    $region23: #{_forward_jit.1} parent=1 // pred_check_branch
      %37 = sbr.rel (0) target = $region25
    $region24: #{_forward_jit.1} parent=1 // pred_region
      _
    $region25: #{_forward_jit.1} parent=1 // pred_fallthru
      _
    // Predicated region
    $region26: #{_forward_jit.1} parent=1 // pred_check
      _
    $region27: #{_forward_jit.1} parent=1 // pred_check_branch
      %39 = sbr.rel (0) target = $region29
    $region28: #{_forward_jit.1} parent=1 // pred_region
      _
    $region29: #{_forward_jit.1} parent=1 // pred_fallthru
      _
    // Predicated region
    $region30: #{_forward_jit.1} parent=1 // pred_check
      _
    $region31: #{_forward_jit.1} parent=1 // pred_check_branch
      %41 = sbr.rel (0) target = $region33
    $region32: #{_forward_jit.1} parent=1 // pred_region
      _
    $region33: #{_forward_jit.1} parent=1 // pred_fallthru
      _
    // Predicated region
    $region34: #{_forward_jit.1} parent=1 // pred_check
      _
    $region35: #{_forward_jit.1} parent=1 // pred_check_branch
      %43 = sbr.rel (0) target = $region37
    $region36: #{_forward_jit.1} parent=1 // pred_region
      _
    $region37: #{_forward_jit.1} parent=1 // pred_fallthru
      _
    // Predicated region
    $region38: #{_forward_jit.1} parent=1 // pred_check
      _
    $region39: #{_forward_jit.1} parent=1 // pred_check_branch
      %45 = sbr.rel (0) target = $region41
    $region40: #{_forward_jit.1} parent=1 // pred_region
      _
    $region41: #{_forward_jit.1} parent=1 // pred_fallthru
      _
    // Predicated region
    $region42: #{_forward_jit.1} parent=1 // pred_check
      _
    $region43: #{_forward_jit.1} parent=1 // pred_check_branch
      %47 = sbr.rel (0) target = $region45
    $region44: #{_forward_jit.1} parent=1 // pred_region
      _
    $region45: #{_forward_jit.1} parent=1 // pred_fallthru
      _
    // Predicated region
    $region46: #{_forward_jit.1} parent=1 // pred_check
      _
    $region47: #{_forward_jit.1} parent=1 // pred_check_branch
      %49 = sbr.rel (0) target = $region49
    $region48: #{_forward_jit.1} parent=1 // pred_region
      _
    $region49: #{_forward_jit.1} parent=1 // pred_fallthru
      _
    // Predicated region
    $region50: #{_forward_jit.1} parent=1 // pred_check
      _
    $region51: #{_forward_jit.1} parent=1 // pred_check_branch
      %51 = sbr.rel (0) target = $region53
    $region52: #{_forward_jit.1} parent=1 // pred_region
      _
    $region53: #{_forward_jit.1} parent=1 // pred_fallthru
      _
    // Predicated region
    $region54: #{_forward_jit.1} parent=1 // pred_check
      _
    $region55: #{_forward_jit.1} parent=1 // pred_check_branch
      %53 = sbr.rel (0) target = $region57
    $region56: #{_forward_jit.1} parent=1 // pred_region
      _
    $region57: #{_forward_jit.1} parent=1 // pred_fallthru
      _
    // Predicated region
    $region58: #{_forward_jit.1} parent=1 // pred_check
      _
    $region59: #{_forward_jit.1} parent=1 // pred_check_branch
      %55 = sbr.rel (0) target = $region61
    $region60: #{_forward_jit.1} parent=1 // pred_region
      _
    $region61: #{_forward_jit.1} parent=1 // pred_fallthru
      _
    %v56 = vld [vmem:[%s14] sm:$0xff]
    %v57 = vld [vmem:[%s14 + $0x8] sm:$0xf]
    %v58 = vld [vmem:[%s3] sm:$0x3f]
    %v59 = vld [vmem:[%s5] sm:$0xff]
    %v60 = vld [vmem:[%s5 + $0x8] sm:$0xff]
    %v61 = vld [vmem:[%s5 + $0x10] sm:$0xf]
    %vm62 = vcmask 162816
    %v64 = vsel %vm62, %v58, 0
    %vm66 = vcmask 1043456
    %v68 = vsel %vm66, %v61, 0
    %70 = vmatprep.subr.mxu0 0.0
    %71 = vmatpush1.msra.mxu0 0.0
    %72 = vmatprep.subr.mxu0 0.0
    %73 = vmatpush1.msra.mxu0 0.0
    %74 = vmatprep.subr.mxu0 0.0
    %75 = vmatpush1.msra.mxu0 0.0
    %76 = vmatprep.subr.mxu0 0.0
    %77 = vmatpush1.msra.mxu0 0.0
    %78 = vmatprep.subr.mxu0 0.0
    %79 = vmatpush1.msra.mxu0 0.0
    %80 = vmatprep.subr.mxu0 0.0
    %81 = vmatpush1.msra.mxu0 0.0
    %82 = vmatprep.subr.mxu0 0.0
    %83 = vmatpush1.msra.mxu0 0.0
    %84 = vmatprep.subr.mxu0 0.0
    %85 = vmatpush1.msra.mxu0 0.0
    %86 = vmatprep.subr.mxu0 0.0
    %87 = vmatpush1.msra.mxu0 0.0
    %88 = vmatprep.subr.mxu0 0.0
    %89 = vmatpush1.msra.mxu0 0.0
    %90 = vmatprep.subr.mxu0 0.0
    %91 = vmatpush1.msra.mxu0 0.0
    %92 = vmatprep.subr.mxu0 0.0
    %93 = vmatpush1.msra.mxu0 0.0
    %94 = vmatprep.subr.mxu0 0.0
    %95 = vmatpush1.msra.mxu0 0.0
    %96 = vmatprep.subr.mxu0 0.0
    %97 = vmatpush1.msra.mxu0 %v68
    %98 = vmatprep.subr.mxu0 0.0
    %99 = vmatpush1.msra.mxu0 %v60
    %100 = vmatprep.subr.mxu0 0.0
    %101 = vmatpush1.msra.mxu0 %v59
    %102 = vmatprep.subr.mxu0 0.0
    %103 = vmatpush2.msra.mxu0 0.0
    %104 = vmatprep.subr.mxu0 0.0
    %105 = vmatpush2.msra.mxu0 0.0
    %106 = vmatprep.subr.mxu0 0.0
    %107 = vmatpush2.msra.mxu0 0.0
    %108 = vmatprep.subr.mxu0 0.0
    %109 = vmatpush2.msra.mxu0 0.0
    %110 = vmatprep.subr.mxu0 0.0
    %111 = vmatpush2.msra.mxu0 0.0
    %112 = vmatprep.subr.mxu0 0.0
    %113 = vmatpush2.msra.mxu0 0.0
    %114 = vmatprep.subr.mxu0 0.0
    %115 = vmatpush2.msra.mxu0 0.0
    %116 = vmatprep.subr.mxu0 0.0
    %117 = vmatpush2.msra.mxu0 0.0
    %118 = vmatprep.subr.mxu0 0.0
    %119 = vmatpush2.msra.mxu0 0.0
    %120 = vmatprep.subr.mxu0 0.0
    %121 = vmatpush2.msra.mxu0 0.0
    %122 = vmatprep.subr.mxu0 0.0
    %123 = vmatpush2.msra.mxu0 0.0
    %124 = vmatprep.subr.mxu0 0.0
    %125 = vmatpush2.msra.mxu0 0.0
    %126 = vmatprep.subr.mxu0 0.0
    %127 = vmatpush2.msra.mxu0 0.0
    %128 = vmatprep.subr.mxu0 0.0
    %129 = vmatpush2.msra.mxu0 0.0
    %130 = vmatprep.subr.mxu0 0.0
    %131 = vmatpush2.msra.mxu0 0.0
    %132 = vmatprep.subr.mxu0 0.0
    %133 = vmatpush2.msra.mxu0 0.0
    %134 = vmatprep.mubr.f32.mxu0 0.0
    %135 = vmatmul.mubr.f32.gmra.mxu0 %v64
    %v136 = vpop.f32.mrf.mxu0
    %v137 = vadd.f32 0.0, %v136
    %v138 = vpop.f32.mrf.mxu0
    %139 = vdwg.mxu0
    %v140 = vld [vmem:[%s4] sm:$0xff]
    %v141 = vld [vmem:[%s4 + $0x8] sm:$0x3]
    %v142 = vld [vmem:[%s6] sm:$0xff]
    %v143 = vld [vmem:[%s6 + $0x8] sm:$0xff]
    %v144 = vld [vmem:[%s6 + $0x10] sm:$0xff]
    %v145 = vld [vmem:[%s6 + $0x18] sm:$0x3f]
    %vm146 = vcmask 244736
    %v148 = vsel %vm146, %v140, 0
    %v151 = vsel %vm146, %v141, 0
    %vm153 = vcmask 1045504
    %v155 = vsel %vm153, %v145, 0
    %157 = vmatprep.subr.mxu0 0.0
    %158 = vmatpush1.msra.mxu0 0.0
    %159 = vmatprep.subr.mxu0 0.0
    %160 = vmatpush1.msra.mxu0 0.0
    %161 = vmatprep.subr.mxu0 0.0
    %162 = vmatpush1.msra.mxu0 0.0
    %163 = vmatprep.subr.mxu0 0.0
    %164 = vmatpush1.msra.mxu0 0.0
    %165 = vmatprep.subr.mxu0 0.0
    %166 = vmatpush1.msra.mxu0 0.0
    %167 = vmatprep.subr.mxu0 0.0
    %168 = vmatpush1.msra.mxu0 0.0
    %169 = vmatprep.subr.mxu0 0.0
    %170 = vmatpush1.msra.mxu0 0.0
    %171 = vmatprep.subr.mxu0 0.0
    %172 = vmatpush1.msra.mxu0 0.0
    %173 = vmatprep.subr.mxu0 0.0
    %174 = vmatpush1.msra.mxu0 0.0
    %175 = vmatprep.subr.mxu0 0.0
    %176 = vmatpush1.msra.mxu0 0.0
    %177 = vmatprep.subr.mxu0 0.0
    %178 = vmatpush1.msra.mxu0 0.0
    %179 = vmatprep.subr.mxu0 0.0
    %180 = vmatpush1.msra.mxu0 0.0
    %181 = vmatprep.subr.mxu0 0.0
    %182 = vmatpush1.msra.mxu0 %v155
    %183 = vmatprep.subr.mxu0 0.0
    %184 = vmatpush1.msra.mxu0 %v144
    %185 = vmatprep.subr.mxu0 0.0
    %186 = vmatpush1.msra.mxu0 %v143
    %187 = vmatprep.subr.mxu0 0.0
    %188 = vmatpush1.msra.mxu0 %v142
    %189 = vmatprep.subr.mxu0 0.0
    %190 = vmatpush2.msra.mxu0 0.0
    %191 = vmatprep.subr.mxu0 0.0
    %192 = vmatpush2.msra.mxu0 0.0
    %193 = vmatprep.subr.mxu0 0.0
    %194 = vmatpush2.msra.mxu0 0.0
    %195 = vmatprep.subr.mxu0 0.0
    %196 = vmatpush2.msra.mxu0 0.0
    %197 = vmatprep.subr.mxu0 0.0
    %198 = vmatpush2.msra.mxu0 0.0
    %199 = vmatprep.subr.mxu0 0.0
    %200 = vmatpush2.msra.mxu0 0.0
    %201 = vmatprep.subr.mxu0 0.0
    %202 = vmatpush2.msra.mxu0 0.0
    %203 = vmatprep.subr.mxu0 0.0
    %204 = vmatpush2.msra.mxu0 0.0
    %205 = vmatprep.subr.mxu0 0.0
    %206 = vmatpush2.msra.mxu0 0.0
    %207 = vmatprep.subr.mxu0 0.0
    %208 = vmatpush2.msra.mxu0 0.0
    %209 = vmatprep.subr.mxu0 0.0
    %210 = vmatpush2.msra.mxu0 0.0
    %211 = vmatprep.subr.mxu0 0.0
    %212 = vmatpush2.msra.mxu0 0.0
    %213 = vmatprep.subr.mxu0 0.0
    %214 = vmatpush2.msra.mxu0 0.0
    %215 = vmatprep.subr.mxu0 0.0
    %216 = vmatpush2.msra.mxu0 0.0
    %217 = vmatprep.subr.mxu0 0.0
    %218 = vmatpush2.msra.mxu0 0.0
    %219 = vmatprep.subr.mxu0 0.0
    %220 = vmatpush2.msra.mxu0 0.0
    %221 = vmatprep.mubr.f32.mxu0 0.0
    %222 = vmatmul.mubr.f32.gmra.mxu0 %v148
    %v223 = vpop.f32.mrf.mxu0
    %v224 = vadd.f32 0.0, %v223
    %v225 = vpop.f32.mrf.mxu0
    %226 = vmatprep.mubr.f32.mxu0 0.0
    %227 = vmatmul.mubr.f32.gmra.mxu0 %v151
    %v228 = vpop.f32.mrf.mxu0
    %v229 = vadd.f32 0.0, %v228
    %v230 = vpop.f32.mrf.mxu0
    %231 = vdwg.mxu0
    %v232 = vld [vmem:[%s7] sm:$0x3f]
    %s233 = scalar_lea.vmem %s7, 8
    %v234 = vld [vmem:[%s233] sm:$0x3f]
    %s235 = scalar_lea.vmem %s7, 16
    %v236 = vld [vmem:[%s235] sm:$0x3f]
    %v237 = vld [vmem:[%s8] sm:$0xff]
    %v238 = vld [vmem:[%s8 + $0x8] sm:$0x3]
    %s239 = scalar_lea.vmem %s8, 16
    %v240 = vld [vmem:[%s239] sm:$0xff]
    %v241 = vld [vmem:[%s239 + $0x8] sm:$0x3]
    %v242 = vld [vmem:[%s10] sm:$0xff]
    %v243 = vld [vmem:[%s10 + $0x8] sm:$0xff]
    %v244 = vld [vmem:[%s10 + $0x10] sm:$0xff]
    %v245 = vld [vmem:[%s10 + $0x18] sm:$0xff]
    %v246 = vlaneseq
    %v247 = vshrl.u32 %v246, 7
    %v248 = vsub.s32 6, %v247
    %v249 = vrot.slane %v56, %v248
    %vm250 = vcmask 261120
    %v252 = vsel %vm250, %v224, 0
    %v255 = vsel %vm250, %v229, 0
    %257 = vmatprep.subr.mxu0 0.0
    %258 = vmatpush1.msra.mxu0 0.0
    %259 = vmatprep.subr.mxu0 0.0
    %260 = vmatpush1.msra.mxu0 0.0
    %261 = vmatprep.subr.mxu0 0.0
    %262 = vmatpush1.msra.mxu0 0.0
    %263 = vmatprep.subr.mxu0 0.0
    %264 = vmatpush1.msra.mxu0 0.0
    %265 = vmatprep.subr.mxu0 0.0
    %266 = vmatpush1.msra.mxu0 0.0
    %267 = vmatprep.subr.mxu0 0.0
    %268 = vmatpush1.msra.mxu0 0.0
    %269 = vmatprep.subr.mxu0 0.0
    %270 = vmatpush1.msra.mxu0 0.0
    %271 = vmatprep.subr.mxu0 0.0
    %272 = vmatpush1.msra.mxu0 0.0
    %273 = vmatprep.subr.mxu0 0.0
    %274 = vmatpush1.msra.mxu0 0.0
    %275 = vmatprep.subr.mxu0 0.0
    %276 = vmatpush1.msra.mxu0 0.0
    %277 = vmatprep.subr.mxu0 0.0
    %278 = vmatpush1.msra.mxu0 0.0
    %279 = vmatprep.subr.mxu0 0.0
    %280 = vmatpush1.msra.mxu0 0.0
    %281 = vmatprep.subr.mxu0 0.0
    %282 = vmatpush1.msra.mxu0 %v245
    %283 = vmatprep.subr.mxu0 0.0
    %284 = vmatpush1.msra.mxu0 %v244
    %285 = vmatprep.subr.mxu0 0.0
    %286 = vmatpush1.msra.mxu0 %v243
    %287 = vmatprep.subr.mxu0 0.0
    %288 = vmatpush1.msra.mxu0 %v242
    %289 = vmatprep.subr.mxu0 0.0
    %290 = vmatpush2.msra.mxu0 0.0
    %291 = vmatprep.subr.mxu0 0.0
    %292 = vmatpush2.msra.mxu0 0.0
    %293 = vmatprep.subr.mxu0 0.0
    %294 = vmatpush2.msra.mxu0 0.0
    %295 = vmatprep.subr.mxu0 0.0
    %296 = vmatpush2.msra.mxu0 0.0
    %297 = vmatprep.subr.mxu0 0.0
    %298 = vmatpush2.msra.mxu0 0.0
    %299 = vmatprep.subr.mxu0 0.0
    %300 = vmatpush2.msra.mxu0 0.0
    %301 = vmatprep.subr.mxu0 0.0
    %302 = vmatpush2.msra.mxu0 0.0
    %303 = vmatprep.subr.mxu0 0.0
    %304 = vmatpush2.msra.mxu0 0.0
    %305 = vmatprep.subr.mxu0 0.0
    %306 = vmatpush2.msra.mxu0 0.0
    %307 = vmatprep.subr.mxu0 0.0
    %308 = vmatpush2.msra.mxu0 0.0
    %309 = vmatprep.subr.mxu0 0.0
    %310 = vmatpush2.msra.mxu0 0.0
    %311 = vmatprep.subr.mxu0 0.0
    %312 = vmatpush2.msra.mxu0 0.0
    %313 = vmatprep.subr.mxu0 0.0
    %314 = vmatpush2.msra.mxu0 0.0
    %315 = vmatprep.subr.mxu0 0.0
    %316 = vmatpush2.msra.mxu0 0.0
    %317 = vmatprep.subr.mxu0 0.0
    %318 = vmatpush2.msra.mxu0 0.0
    %319 = vmatprep.subr.mxu0 0.0
    %320 = vmatpush2.msra.mxu0 0.0
    %321 = vmatprep.mubr.f32.mxu0 0.0
    %322 = vmatmul.mubr.f32.gmra.mxu0 %v252
    %v323 = vpop.f32.mrf.mxu0
    %v324 = vadd.f32 %v249, %v323
    %v325 = vpop.f32.mrf.mxu0
    %326 = vmatprep.mubr.f32.mxu0 0.0
    %327 = vmatmul.mubr.f32.gmra.mxu0 %v255
    %v328 = vpop.f32.mrf.mxu0
    %v329 = vadd.f32 %v249, %v328
    %v330 = vpop.f32.mrf.mxu0
    %331 = vdwg.mxu0
    %v332 = vld [vmem:[%s9] sm:$0xff]
    %v333 = vld [vmem:[%s9 + $0x8] sm:$0xff]
    %v334 = vld [vmem:[%s9 + $0x10] sm:$0xff]
    %v335 = vld [vmem:[%s9 + $0x18] sm:$0xff]
    %v336 = vlaneseq
    %v337 = vshrl.u32 %v336, 7
    %v338 = vsub.s32 0, %v337
    %v339 = vrot.slane %v56, %v338
    %v341 = vsel %vm250, %v137, 0
    %343 = vmatprep.subr.mxu0 0.0
    %344 = vmatpush1.msra.mxu0 0.0
    %345 = vmatprep.subr.mxu0 0.0
    %346 = vmatpush1.msra.mxu0 0.0
    %347 = vmatprep.subr.mxu0 0.0
    %348 = vmatpush1.msra.mxu0 0.0
    %349 = vmatprep.subr.mxu0 0.0
    %350 = vmatpush1.msra.mxu0 0.0
    %351 = vmatprep.subr.mxu0 0.0
    %352 = vmatpush1.msra.mxu0 0.0
    %353 = vmatprep.subr.mxu0 0.0
    %354 = vmatpush1.msra.mxu0 0.0
    %355 = vmatprep.subr.mxu0 0.0
    %356 = vmatpush1.msra.mxu0 0.0
    %357 = vmatprep.subr.mxu0 0.0
    %358 = vmatpush1.msra.mxu0 0.0
    %359 = vmatprep.subr.mxu0 0.0
    %360 = vmatpush1.msra.mxu0 0.0
    %361 = vmatprep.subr.mxu0 0.0
    %362 = vmatpush1.msra.mxu0 0.0
    %363 = vmatprep.subr.mxu0 0.0
    %364 = vmatpush1.msra.mxu0 0.0
    %365 = vmatprep.subr.mxu0 0.0
    %366 = vmatpush1.msra.mxu0 0.0
    %367 = vmatprep.subr.mxu0 0.0
    %368 = vmatpush1.msra.mxu0 %v335
    %369 = vmatprep.subr.mxu0 0.0
    %370 = vmatpush1.msra.mxu0 %v334
    %371 = vmatprep.subr.mxu0 0.0
    %372 = vmatpush1.msra.mxu0 %v333
    %373 = vmatprep.subr.mxu0 0.0
    %374 = vmatpush1.msra.mxu0 %v332
    %375 = vmatprep.subr.mxu0 0.0
    %376 = vmatpush2.msra.mxu0 0.0
    %377 = vmatprep.subr.mxu0 0.0
    %378 = vmatpush2.msra.mxu0 0.0
    %379 = vmatprep.subr.mxu0 0.0
    %380 = vmatpush2.msra.mxu0 0.0
    %381 = vmatprep.subr.mxu0 0.0
    %382 = vmatpush2.msra.mxu0 0.0
    %383 = vmatprep.subr.mxu0 0.0
    %384 = vmatpush2.msra.mxu0 0.0
    %385 = vmatprep.subr.mxu0 0.0
    %386 = vmatpush2.msra.mxu0 0.0
    %387 = vmatprep.subr.mxu0 0.0
    %388 = vmatpush2.msra.mxu0 0.0
    %389 = vmatprep.subr.mxu0 0.0
    %390 = vmatpush2.msra.mxu0 0.0
    %391 = vmatprep.subr.mxu0 0.0
    %392 = vmatpush2.msra.mxu0 0.0
    %393 = vmatprep.subr.mxu0 0.0
    %394 = vmatpush2.msra.mxu0 0.0
    %395 = vmatprep.subr.mxu0 0.0
    %396 = vmatpush2.msra.mxu0 0.0
    %397 = vmatprep.subr.mxu0 0.0
    %398 = vmatpush2.msra.mxu0 0.0
    %399 = vmatprep.subr.mxu0 0.0
    %400 = vmatpush2.msra.mxu0 0.0
    %401 = vmatprep.subr.mxu0 0.0
    %402 = vmatpush2.msra.mxu0 0.0
    %403 = vmatprep.subr.mxu0 0.0
    %404 = vmatpush2.msra.mxu0 0.0
    %405 = vmatprep.subr.mxu0 0.0
    %406 = vmatpush2.msra.mxu0 0.0
    %407 = vmatprep.mubr.f32.mxu0 0.0
    %408 = vmatmul.mubr.f32.gmra.mxu0 %v341
    %v409 = vpop.f32.mrf.mxu0
    %v410 = vadd.f32 %v339, %v409
    %v411 = vpop.f32.mrf.mxu0
    %412 = vdwg.mxu0
    %vm413 = vcmask 80896
    %v415 = vsel %vm413, %v232, 0
    %vm417 = vcmask 1041408
    %v419 = vsel %vm417, %v329, 0
    %421 = vmatprep.subr.mxu0 0.0
    %422 = vmatpush1.msra.mxu0 0.0
    %423 = vmatprep.subr.mxu0 0.0
    %424 = vmatpush1.msra.mxu0 0.0
    %425 = vmatprep.subr.mxu0 0.0
    %426 = vmatpush1.msra.mxu0 0.0
    %427 = vmatprep.subr.mxu0 0.0
    %428 = vmatpush1.msra.mxu0 0.0
    %429 = vmatprep.subr.mxu0 0.0
    %430 = vmatpush1.msra.mxu0 0.0
    %431 = vmatprep.subr.mxu0 0.0
    %432 = vmatpush1.msra.mxu0 0.0
    %433 = vmatprep.subr.mxu0 0.0
    %434 = vmatpush1.msra.mxu0 0.0
    %435 = vmatprep.subr.mxu0 0.0
    %436 = vmatpush1.msra.mxu0 0.0
    %437 = vmatprep.subr.mxu0 0.0
    %438 = vmatpush1.msra.mxu0 0.0
    %439 = vmatprep.subr.mxu0 0.0
    %440 = vmatpush1.msra.mxu0 0.0
    %441 = vmatprep.subr.mxu0 0.0
    %442 = vmatpush1.msra.mxu0 0.0
    %443 = vmatprep.subr.mxu0 0.0
    %444 = vmatpush1.msra.mxu0 0.0
    %445 = vmatprep.subr.mxu0 0.0
    %446 = vmatpush1.msra.mxu0 0.0
    %447 = vmatprep.subr.mxu0 0.0
    %448 = vmatpush1.msra.mxu0 0.0
    %449 = vmatprep.subr.mxu0 0.0
    %450 = vmatpush1.msra.mxu0 %v419
    %451 = vmatprep.subr.mxu0 0.0
    %452 = vmatpush1.msra.mxu0 %v324
    %453 = vmatprep.subr.mxu0 0.0
    %454 = vmatpush2.msra.mxu0 0.0
    %455 = vmatprep.subr.mxu0 0.0
    %456 = vmatpush2.msra.mxu0 0.0
    %457 = vmatprep.subr.mxu0 0.0
    %458 = vmatpush2.msra.mxu0 0.0
    %459 = vmatprep.subr.mxu0 0.0
    %460 = vmatpush2.msra.mxu0 0.0
    %461 = vmatprep.subr.mxu0 0.0
    %462 = vmatpush2.msra.mxu0 0.0
    %463 = vmatprep.subr.mxu0 0.0
    %464 = vmatpush2.msra.mxu0 0.0
    %465 = vmatprep.subr.mxu0 0.0
    %466 = vmatpush2.msra.mxu0 0.0
    %467 = vmatprep.subr.mxu0 0.0
    %468 = vmatpush2.msra.mxu0 0.0
    %469 = vmatprep.subr.mxu0 0.0
    %470 = vmatpush2.msra.mxu0 0.0
    %471 = vmatprep.subr.mxu0 0.0
    %472 = vmatpush2.msra.mxu0 0.0
    %473 = vmatprep.subr.mxu0 0.0
    %474 = vmatpush2.msra.mxu0 0.0
    %475 = vmatprep.subr.mxu0 0.0
    %476 = vmatpush2.msra.mxu0 0.0
    %477 = vmatprep.subr.mxu0 0.0
    %478 = vmatpush2.msra.mxu0 0.0
    %479 = vmatprep.subr.mxu0 0.0
    %480 = vmatpush2.msra.mxu0 0.0
    %481 = vmatprep.subr.mxu0 0.0
    %482 = vmatpush2.msra.mxu0 0.0
    %483 = vmatprep.subr.mxu0 0.0
    %484 = vmatpush2.msra.mxu0 0.0
    %485 = vmatprep.mubr.f32.mxu0 0.0
    %486 = vmatmul.mubr.f32.gmra.mxu0 %v415
    %v487 = vpop.f32.mrf.mxu0
    %v488 = vadd.f32 0.0, %v487
    %v489 = vpop.f32.mrf.mxu0
    %490 = vdwg.mxu0
    %v491 = vadd.f32 %v410, %v488
    %493 = vrot.lane.b32.xlu0 %v324, 96
    %v494 = vpop.permute.xlu0 %493
    %495 = vrot.lane.b32.xlu0 %v329, 96
    %v496 = vpop.permute.xlu0 %495
    %v499 = vsel %vm413, %v234, 0
    %v501 = vsel %vm417, %v496, 0
    %503 = vmatprep.subr.mxu0 0.0
    %504 = vmatpush1.msra.mxu0 0.0
    %505 = vmatprep.subr.mxu0 0.0
    %506 = vmatpush1.msra.mxu0 0.0
    %507 = vmatprep.subr.mxu0 0.0
    %508 = vmatpush1.msra.mxu0 0.0
    %509 = vmatprep.subr.mxu0 0.0
    %510 = vmatpush1.msra.mxu0 0.0
    %511 = vmatprep.subr.mxu0 0.0
    %512 = vmatpush1.msra.mxu0 0.0
    %513 = vmatprep.subr.mxu0 0.0
    %514 = vmatpush1.msra.mxu0 0.0
    %515 = vmatprep.subr.mxu0 0.0
    %516 = vmatpush1.msra.mxu0 0.0
    %517 = vmatprep.subr.mxu0 0.0
    %518 = vmatpush1.msra.mxu0 0.0
    %519 = vmatprep.subr.mxu0 0.0
    %520 = vmatpush1.msra.mxu0 0.0
    %521 = vmatprep.subr.mxu0 0.0
    %522 = vmatpush1.msra.mxu0 0.0
    %523 = vmatprep.subr.mxu0 0.0
    %524 = vmatpush1.msra.mxu0 0.0
    %525 = vmatprep.subr.mxu0 0.0
    %526 = vmatpush1.msra.mxu0 0.0
    %527 = vmatprep.subr.mxu0 0.0
    %528 = vmatpush1.msra.mxu0 0.0
    %529 = vmatprep.subr.mxu0 0.0
    %530 = vmatpush1.msra.mxu0 0.0
    %531 = vmatprep.subr.mxu0 0.0
    %532 = vmatpush1.msra.mxu0 %v501
    %533 = vmatprep.subr.mxu0 0.0
    %534 = vmatpush1.msra.mxu0 %v494
    %535 = vmatprep.subr.mxu0 0.0
    %536 = vmatpush2.msra.mxu0 0.0
    %537 = vmatprep.subr.mxu0 0.0
    %538 = vmatpush2.msra.mxu0 0.0
    %539 = vmatprep.subr.mxu0 0.0
    %540 = vmatpush2.msra.mxu0 0.0
    %541 = vmatprep.subr.mxu0 0.0
    %542 = vmatpush2.msra.mxu0 0.0
    %543 = vmatprep.subr.mxu0 0.0
    %544 = vmatpush2.msra.mxu0 0.0
    %545 = vmatprep.subr.mxu0 0.0
    %546 = vmatpush2.msra.mxu0 0.0
    %547 = vmatprep.subr.mxu0 0.0
    %548 = vmatpush2.msra.mxu0 0.0
    %549 = vmatprep.subr.mxu0 0.0
    %550 = vmatpush2.msra.mxu0 0.0
    %551 = vmatprep.subr.mxu0 0.0
    %552 = vmatpush2.msra.mxu0 0.0
    %553 = vmatprep.subr.mxu0 0.0
    %554 = vmatpush2.msra.mxu0 0.0
    %555 = vmatprep.subr.mxu0 0.0
    %556 = vmatpush2.msra.mxu0 0.0
    %557 = vmatprep.subr.mxu0 0.0
    %558 = vmatpush2.msra.mxu0 0.0
    %559 = vmatprep.subr.mxu0 0.0
    %560 = vmatpush2.msra.mxu0 0.0
    %561 = vmatprep.subr.mxu0 0.0
    %562 = vmatpush2.msra.mxu0 0.0
    %563 = vmatprep.subr.mxu0 0.0
    %564 = vmatpush2.msra.mxu0 0.0
    %565 = vmatprep.subr.mxu0 0.0
    %566 = vmatpush2.msra.mxu0 0.0
    %567 = vmatprep.mubr.f32.mxu0 0.0
    %568 = vmatmul.mubr.f32.gmra.mxu0 %v499
    %v569 = vpop.f32.mrf.mxu0
    %v570 = vadd.f32 0.0, %v569
    %v571 = vpop.f32.mrf.mxu0
    %572 = vdwg.mxu0
    %v573 = vadd.f32 %v491, %v570
    %574 = vrot.lane.b32.xlu0 %v324, 64
    %v575 = vpop.permute.xlu0 %574
    %576 = vrot.lane.b32.xlu0 %v329, 64
    %v577 = vpop.permute.xlu0 %576
    %v580 = vsel %vm413, %v236, 0
    %v582 = vsel %vm417, %v577, 0
    %584 = vmatprep.subr.mxu0 0.0
    %585 = vmatpush1.msra.mxu0 0.0
    %586 = vmatprep.subr.mxu0 0.0
    %587 = vmatpush1.msra.mxu0 0.0
    %588 = vmatprep.subr.mxu0 0.0
    %589 = vmatpush1.msra.mxu0 0.0
    %590 = vmatprep.subr.mxu0 0.0
    %591 = vmatpush1.msra.mxu0 0.0
    %592 = vmatprep.subr.mxu0 0.0
    %593 = vmatpush1.msra.mxu0 0.0
    %594 = vmatprep.subr.mxu0 0.0
    %595 = vmatpush1.msra.mxu0 0.0
    %596 = vmatprep.subr.mxu0 0.0
    %597 = vmatpush1.msra.mxu0 0.0
    %598 = vmatprep.subr.mxu0 0.0
    %599 = vmatpush1.msra.mxu0 0.0
    %600 = vmatprep.subr.mxu0 0.0
    %601 = vmatpush1.msra.mxu0 0.0
    %602 = vmatprep.subr.mxu0 0.0
    %603 = vmatpush1.msra.mxu0 0.0
    %604 = vmatprep.subr.mxu0 0.0
    %605 = vmatpush1.msra.mxu0 0.0
    %606 = vmatprep.subr.mxu0 0.0
    %607 = vmatpush1.msra.mxu0 0.0
    %608 = vmatprep.subr.mxu0 0.0
    %609 = vmatpush1.msra.mxu0 0.0
    %610 = vmatprep.subr.mxu0 0.0
    %611 = vmatpush1.msra.mxu0 0.0
    %612 = vmatprep.subr.mxu0 0.0
    %613 = vmatpush1.msra.mxu0 %v582
    %614 = vmatprep.subr.mxu0 0.0
    %615 = vmatpush1.msra.mxu0 %v575
    %616 = vmatprep.subr.mxu0 0.0
    %617 = vmatpush2.msra.mxu0 0.0
    %618 = vmatprep.subr.mxu0 0.0
    %619 = vmatpush2.msra.mxu0 0.0
    %620 = vmatprep.subr.mxu0 0.0
    %621 = vmatpush2.msra.mxu0 0.0
    %622 = vmatprep.subr.mxu0 0.0
    %623 = vmatpush2.msra.mxu0 0.0
    %624 = vmatprep.subr.mxu0 0.0
    %625 = vmatpush2.msra.mxu0 0.0
    %626 = vmatprep.subr.mxu0 0.0
    %627 = vmatpush2.msra.mxu0 0.0
    %628 = vmatprep.subr.mxu0 0.0
    %629 = vmatpush2.msra.mxu0 0.0
    %630 = vmatprep.subr.mxu0 0.0
    %631 = vmatpush2.msra.mxu0 0.0
    %632 = vmatprep.subr.mxu0 0.0
    %633 = vmatpush2.msra.mxu0 0.0
    %634 = vmatprep.subr.mxu0 0.0
    %635 = vmatpush2.msra.mxu0 0.0
    %636 = vmatprep.subr.mxu0 0.0
    %637 = vmatpush2.msra.mxu0 0.0
    %638 = vmatprep.subr.mxu0 0.0
    %639 = vmatpush2.msra.mxu0 0.0
    %640 = vmatprep.subr.mxu0 0.0
    %641 = vmatpush2.msra.mxu0 0.0
    %642 = vmatprep.subr.mxu0 0.0
    %643 = vmatpush2.msra.mxu0 0.0
    %644 = vmatprep.subr.mxu0 0.0
    %645 = vmatpush2.msra.mxu0 0.0
    %646 = vmatprep.subr.mxu0 0.0
    %647 = vmatpush2.msra.mxu0 0.0
    %648 = vmatprep.mubr.f32.mxu0 0.0
    %649 = vmatmul.mubr.f32.gmra.mxu0 %v580
    %v650 = vpop.f32.mrf.mxu0
    %v651 = vadd.f32 0.0, %v650
    %v652 = vpop.f32.mrf.mxu0
    %653 = vdwg.mxu0
    %v654 = vadd.f32 %v573, %v651
    %v655 = vmax.f32 %v654, 0.0
    %v656 = vld [vmem:[%s11] sm:$0xff]
    %v657 = vld [vmem:[%s11 + $0x8] sm:$0xff]
    %v658 = vld [vmem:[%s11 + $0x10] sm:$0xff]
    %v659 = vld [vmem:[%s11 + $0x18] sm:$0xff]
    %v660 = vlaneseq
    %v661 = vshrl.u32 %v660, 7
    %v662 = vsub.s32 0, %v661
    %v663 = vrot.slane %v57, %v662
    %v665 = vsel %vm250, %v655, 0
    %667 = vmatprep.subr.mxu0 0.0
    %668 = vmatpush1.msra.mxu0 0.0
    %669 = vmatprep.subr.mxu0 0.0
    %670 = vmatpush1.msra.mxu0 0.0
    %671 = vmatprep.subr.mxu0 0.0
    %672 = vmatpush1.msra.mxu0 0.0
    %673 = vmatprep.subr.mxu0 0.0
    %674 = vmatpush1.msra.mxu0 0.0
    %675 = vmatprep.subr.mxu0 0.0
    %676 = vmatpush1.msra.mxu0 0.0
    %677 = vmatprep.subr.mxu0 0.0
    %678 = vmatpush1.msra.mxu0 0.0
    %679 = vmatprep.subr.mxu0 0.0
    %680 = vmatpush1.msra.mxu0 0.0
    %681 = vmatprep.subr.mxu0 0.0
    %682 = vmatpush1.msra.mxu0 0.0
    %683 = vmatprep.subr.mxu0 0.0
    %684 = vmatpush1.msra.mxu0 0.0
    %685 = vmatprep.subr.mxu0 0.0
    %686 = vmatpush1.msra.mxu0 0.0
    %687 = vmatprep.subr.mxu0 0.0
    %688 = vmatpush1.msra.mxu0 0.0
    %689 = vmatprep.subr.mxu0 0.0
    %690 = vmatpush1.msra.mxu0 0.0
    %691 = vmatprep.subr.mxu0 0.0
    %692 = vmatpush1.msra.mxu0 %v659
    %693 = vmatprep.subr.mxu0 0.0
    %694 = vmatpush1.msra.mxu0 %v658
    %695 = vmatprep.subr.mxu0 0.0
    %696 = vmatpush1.msra.mxu0 %v657
    %697 = vmatprep.subr.mxu0 0.0
    %698 = vmatpush1.msra.mxu0 %v656
    %699 = vmatprep.subr.mxu0 0.0
    %700 = vmatpush2.msra.mxu0 0.0
    %701 = vmatprep.subr.mxu0 0.0
    %702 = vmatpush2.msra.mxu0 0.0
    %703 = vmatprep.subr.mxu0 0.0
    %704 = vmatpush2.msra.mxu0 0.0
    %705 = vmatprep.subr.mxu0 0.0
    %706 = vmatpush2.msra.mxu0 0.0
    %707 = vmatprep.subr.mxu0 0.0
    %708 = vmatpush2.msra.mxu0 0.0
    %709 = vmatprep.subr.mxu0 0.0
    %710 = vmatpush2.msra.mxu0 0.0
    %711 = vmatprep.subr.mxu0 0.0
    %712 = vmatpush2.msra.mxu0 0.0
    %713 = vmatprep.subr.mxu0 0.0
    %714 = vmatpush2.msra.mxu0 0.0
    %715 = vmatprep.subr.mxu0 0.0
    %716 = vmatpush2.msra.mxu0 0.0
    %717 = vmatprep.subr.mxu0 0.0
    %718 = vmatpush2.msra.mxu0 0.0
    %719 = vmatprep.subr.mxu0 0.0
    %720 = vmatpush2.msra.mxu0 0.0
    %721 = vmatprep.subr.mxu0 0.0
    %722 = vmatpush2.msra.mxu0 0.0
    %723 = vmatprep.subr.mxu0 0.0
    %724 = vmatpush2.msra.mxu0 0.0
    %725 = vmatprep.subr.mxu0 0.0
    %726 = vmatpush2.msra.mxu0 0.0
    %727 = vmatprep.subr.mxu0 0.0
    %728 = vmatpush2.msra.mxu0 0.0
    %729 = vmatprep.subr.mxu0 0.0
    %730 = vmatpush2.msra.mxu0 0.0
    %731 = vmatprep.mubr.f32.mxu0 0.0
    %732 = vmatmul.mubr.f32.gmra.mxu0 %v665
    %v733 = vpop.f32.mrf.mxu0
    %v734 = vadd.f32 %v663, %v733
    %v735 = vpop.f32.mrf.mxu0
    %736 = vdwg.mxu0
    %s737 = scalar_lea.vmem %s9, 32
    %v738 = vld [vmem:[%s737] sm:$0xff]
    %v739 = vld [vmem:[%s737 + $0x8] sm:$0xff]
    %v740 = vld [vmem:[%s737 + $0x10] sm:$0xff]
    %v741 = vld [vmem:[%s737 + $0x18] sm:$0xff]
    %v742 = vlaneseq
    %v743 = vshrl.u32 %v742, 7
    %v744 = vsub.s32 1, %v743
    %v745 = vrot.slane %v56, %v744
    %746 = vmatprep.subr.mxu0 0.0
    %747 = vmatpush1.msra.mxu0 0.0
    %748 = vmatprep.subr.mxu0 0.0
    %749 = vmatpush1.msra.mxu0 0.0
    %750 = vmatprep.subr.mxu0 0.0
    %751 = vmatpush1.msra.mxu0 0.0
    %752 = vmatprep.subr.mxu0 0.0
    %753 = vmatpush1.msra.mxu0 0.0
    %754 = vmatprep.subr.mxu0 0.0
    %755 = vmatpush1.msra.mxu0 0.0
    %756 = vmatprep.subr.mxu0 0.0
    %757 = vmatpush1.msra.mxu0 0.0
    %758 = vmatprep.subr.mxu0 0.0
    %759 = vmatpush1.msra.mxu0 0.0
    %760 = vmatprep.subr.mxu0 0.0
    %761 = vmatpush1.msra.mxu0 0.0
    %762 = vmatprep.subr.mxu0 0.0
    %763 = vmatpush1.msra.mxu0 0.0
    %764 = vmatprep.subr.mxu0 0.0
    %765 = vmatpush1.msra.mxu0 0.0
    %766 = vmatprep.subr.mxu0 0.0
    %767 = vmatpush1.msra.mxu0 0.0
    %768 = vmatprep.subr.mxu0 0.0
    %769 = vmatpush1.msra.mxu0 0.0
    %770 = vmatprep.subr.mxu0 0.0
    %771 = vmatpush1.msra.mxu0 %v741
    %772 = vmatprep.subr.mxu0 0.0
    %773 = vmatpush1.msra.mxu0 %v740
    %774 = vmatprep.subr.mxu0 0.0
    %775 = vmatpush1.msra.mxu0 %v739
    %776 = vmatprep.subr.mxu0 0.0
    %777 = vmatpush1.msra.mxu0 %v738
    %778 = vmatprep.subr.mxu0 0.0
    %779 = vmatpush2.msra.mxu0 0.0
    %780 = vmatprep.subr.mxu0 0.0
    %781 = vmatpush2.msra.mxu0 0.0
    %782 = vmatprep.subr.mxu0 0.0
    %783 = vmatpush2.msra.mxu0 0.0
    %784 = vmatprep.subr.mxu0 0.0
    %785 = vmatpush2.msra.mxu0 0.0
    %786 = vmatprep.subr.mxu0 0.0
    %787 = vmatpush2.msra.mxu0 0.0
    %788 = vmatprep.subr.mxu0 0.0
    %789 = vmatpush2.msra.mxu0 0.0
    %790 = vmatprep.subr.mxu0 0.0
    %791 = vmatpush2.msra.mxu0 0.0
    %792 = vmatprep.subr.mxu0 0.0
    %793 = vmatpush2.msra.mxu0 0.0
    %794 = vmatprep.subr.mxu0 0.0
    %795 = vmatpush2.msra.mxu0 0.0
    %796 = vmatprep.subr.mxu0 0.0
    %797 = vmatpush2.msra.mxu0 0.0
    %798 = vmatprep.subr.mxu0 0.0
    %799 = vmatpush2.msra.mxu0 0.0
    %800 = vmatprep.subr.mxu0 0.0
    %801 = vmatpush2.msra.mxu0 0.0
    %802 = vmatprep.subr.mxu0 0.0
    %803 = vmatpush2.msra.mxu0 0.0
    %804 = vmatprep.subr.mxu0 0.0
    %805 = vmatpush2.msra.mxu0 0.0
    %806 = vmatprep.subr.mxu0 0.0
    %807 = vmatpush2.msra.mxu0 0.0
    %808 = vmatprep.subr.mxu0 0.0
    %809 = vmatpush2.msra.mxu0 0.0
    %810 = vmatprep.mubr.f32.mxu0 0.0
    %811 = vmatmul.mubr.f32.gmra.mxu0 %v252
    %v812 = vpop.f32.mrf.mxu0
    %v813 = vadd.f32 %v745, %v812
    %v814 = vpop.f32.mrf.mxu0
    %815 = vmatprep.mubr.f32.mxu0 0.0
    %816 = vmatmul.mubr.f32.gmra.mxu0 %v255
    %v817 = vpop.f32.mrf.mxu0
    %v818 = vadd.f32 %v745, %v817
    %v819 = vpop.f32.mrf.mxu0
    %820 = vdwg.mxu0
    %vm821 = vcmask 48128
    %v823 = vsel %vm821, %v237, 0
    %v826 = vsel %vm821, %v238, 0
    %v829 = vsel %vm153, %v734, 0
    %831 = vmatprep.subr.mxu0 0.0
    %832 = vmatpush1.msra.mxu0 0.0
    %833 = vmatprep.subr.mxu0 0.0
    %834 = vmatpush1.msra.mxu0 0.0
    %835 = vmatprep.subr.mxu0 0.0
    %836 = vmatpush1.msra.mxu0 0.0
    %837 = vmatprep.subr.mxu0 0.0
    %838 = vmatpush1.msra.mxu0 0.0
    %839 = vmatprep.subr.mxu0 0.0
    %840 = vmatpush1.msra.mxu0 0.0
    %841 = vmatprep.subr.mxu0 0.0
    %842 = vmatpush1.msra.mxu0 0.0
    %843 = vmatprep.subr.mxu0 0.0
    %844 = vmatpush1.msra.mxu0 0.0
    %845 = vmatprep.subr.mxu0 0.0
    %846 = vmatpush1.msra.mxu0 0.0
    %847 = vmatprep.subr.mxu0 0.0
    %848 = vmatpush1.msra.mxu0 0.0
    %849 = vmatprep.subr.mxu0 0.0
    %850 = vmatpush1.msra.mxu0 0.0
    %851 = vmatprep.subr.mxu0 0.0
    %852 = vmatpush1.msra.mxu0 0.0
    %853 = vmatprep.subr.mxu0 0.0
    %854 = vmatpush1.msra.mxu0 0.0
    %855 = vmatprep.subr.mxu0 0.0
    %856 = vmatpush1.msra.mxu0 0.0
    %857 = vmatprep.subr.mxu0 0.0
    %858 = vmatpush1.msra.mxu0 0.0
    %859 = vmatprep.subr.mxu0 0.0
    %860 = vmatpush1.msra.mxu0 0.0
    %861 = vmatprep.subr.mxu0 0.0
    %862 = vmatpush1.msra.mxu0 %v829
    %863 = vmatprep.subr.mxu0 0.0
    %864 = vmatpush2.msra.mxu0 0.0
    %865 = vmatprep.subr.mxu0 0.0
    %866 = vmatpush2.msra.mxu0 0.0
    %867 = vmatprep.subr.mxu0 0.0
    %868 = vmatpush2.msra.mxu0 0.0
    %869 = vmatprep.subr.mxu0 0.0
    %870 = vmatpush2.msra.mxu0 0.0
    %871 = vmatprep.subr.mxu0 0.0
    %872 = vmatpush2.msra.mxu0 0.0
    %873 = vmatprep.subr.mxu0 0.0
    %874 = vmatpush2.msra.mxu0 0.0
    %875 = vmatprep.subr.mxu0 0.0
    %876 = vmatpush2.msra.mxu0 0.0
    %877 = vmatprep.subr.mxu0 0.0
    %878 = vmatpush2.msra.mxu0 0.0
    %879 = vmatprep.subr.mxu0 0.0
    %880 = vmatpush2.msra.mxu0 0.0
    %881 = vmatprep.subr.mxu0 0.0
    %882 = vmatpush2.msra.mxu0 0.0
    %883 = vmatprep.subr.mxu0 0.0
    %884 = vmatpush2.msra.mxu0 0.0
    %885 = vmatprep.subr.mxu0 0.0
    %886 = vmatpush2.msra.mxu0 0.0
    %887 = vmatprep.subr.mxu0 0.0
    %888 = vmatpush2.msra.mxu0 0.0
    %889 = vmatprep.subr.mxu0 0.0
    %890 = vmatpush2.msra.mxu0 0.0
    %891 = vmatprep.subr.mxu0 0.0
    %892 = vmatpush2.msra.mxu0 0.0
    %893 = vmatprep.subr.mxu0 0.0
    %894 = vmatpush2.msra.mxu0 0.0
    %895 = vmatprep.mubr.f32.mxu0 0.0
    %896 = vmatmul.mubr.f32.gmra.mxu0 %v823
    %v897 = vpop.f32.mrf.mxu0
    %v898 = vadd.f32 0.0, %v897
    %v899 = vpop.f32.mrf.mxu0
    %900 = vmatprep.mubr.f32.mxu0 0.0
    %901 = vmatmul.mubr.f32.gmra.mxu0 %v826
    %v902 = vpop.f32.mrf.mxu0
    %v903 = vadd.f32 0.0, %v902
    %v904 = vpop.f32.mrf.mxu0
    %905 = vdwg.mxu0
    %v906 = vadd.f32 %v813, %v898
    %v907 = vadd.f32 %v818, %v903
    %908 = vrot.lane.b32.xlu0 %v734, 96
    %v909 = vpop.permute.xlu0 %908
    %v911 = vsel %vm821, %v240, 0
    %v914 = vsel %vm821, %v241, 0
    %v916 = vsel %vm153, %v909, 0
    %918 = vmatprep.subr.mxu0 0.0
    %919 = vmatpush1.msra.mxu0 0.0
    %920 = vmatprep.subr.mxu0 0.0
    %921 = vmatpush1.msra.mxu0 0.0
    %922 = vmatprep.subr.mxu0 0.0
    %923 = vmatpush1.msra.mxu0 0.0
    %924 = vmatprep.subr.mxu0 0.0
    %925 = vmatpush1.msra.mxu0 0.0
    %926 = vmatprep.subr.mxu0 0.0
    %927 = vmatpush1.msra.mxu0 0.0
    %928 = vmatprep.subr.mxu0 0.0
    %929 = vmatpush1.msra.mxu0 0.0
    %930 = vmatprep.subr.mxu0 0.0
    %931 = vmatpush1.msra.mxu0 0.0
    %932 = vmatprep.subr.mxu0 0.0
    %933 = vmatpush1.msra.mxu0 0.0
    %934 = vmatprep.subr.mxu0 0.0
    %935 = vmatpush1.msra.mxu0 0.0
    %936 = vmatprep.subr.mxu0 0.0
    %937 = vmatpush1.msra.mxu0 0.0
    %938 = vmatprep.subr.mxu0 0.0
    %939 = vmatpush1.msra.mxu0 0.0
    %940 = vmatprep.subr.mxu0 0.0
    %941 = vmatpush1.msra.mxu0 0.0
    %942 = vmatprep.subr.mxu0 0.0
    %943 = vmatpush1.msra.mxu0 0.0
    %944 = vmatprep.subr.mxu0 0.0
    %945 = vmatpush1.msra.mxu0 0.0
    %946 = vmatprep.subr.mxu0 0.0
    %947 = vmatpush1.msra.mxu0 0.0
    %948 = vmatprep.subr.mxu0 0.0
    %949 = vmatpush1.msra.mxu0 %v916
    %950 = vmatprep.subr.mxu0 0.0
    %951 = vmatpush2.msra.mxu0 0.0
    %952 = vmatprep.subr.mxu0 0.0
    %953 = vmatpush2.msra.mxu0 0.0
    %954 = vmatprep.subr.mxu0 0.0
    %955 = vmatpush2.msra.mxu0 0.0
    %956 = vmatprep.subr.mxu0 0.0
    %957 = vmatpush2.msra.mxu0 0.0
    %958 = vmatprep.subr.mxu0 0.0
    %959 = vmatpush2.msra.mxu0 0.0
    %960 = vmatprep.subr.mxu0 0.0
    %961 = vmatpush2.msra.mxu0 0.0
    %962 = vmatprep.subr.mxu0 0.0
    %963 = vmatpush2.msra.mxu0 0.0
    %964 = vmatprep.subr.mxu0 0.0
    %965 = vmatpush2.msra.mxu0 0.0
    %966 = vmatprep.subr.mxu0 0.0
    %967 = vmatpush2.msra.mxu0 0.0
    %968 = vmatprep.subr.mxu0 0.0
    %969 = vmatpush2.msra.mxu0 0.0
    %970 = vmatprep.subr.mxu0 0.0
    %971 = vmatpush2.msra.mxu0 0.0
    %972 = vmatprep.subr.mxu0 0.0
    %973 = vmatpush2.msra.mxu0 0.0
    %974 = vmatprep.subr.mxu0 0.0
    %975 = vmatpush2.msra.mxu0 0.0
    %976 = vmatprep.subr.mxu0 0.0
    %977 = vmatpush2.msra.mxu0 0.0
    %978 = vmatprep.subr.mxu0 0.0
    %979 = vmatpush2.msra.mxu0 0.0
    %980 = vmatprep.subr.mxu0 0.0
    %981 = vmatpush2.msra.mxu0 0.0
    %982 = vmatprep.mubr.f32.mxu0 0.0
    %983 = vmatmul.mubr.f32.gmra.mxu0 %v911
    %v984 = vpop.f32.mrf.mxu0
    %v985 = vadd.f32 0.0, %v984
    %v986 = vpop.f32.mrf.mxu0
    %987 = vmatprep.mubr.f32.mxu0 0.0
    %988 = vmatmul.mubr.f32.gmra.mxu0 %v914
    %v989 = vpop.f32.mrf.mxu0
    %v990 = vadd.f32 0.0, %v989
    %v991 = vpop.f32.mrf.mxu0
    %992 = vdwg.mxu0
    %v993 = vadd.f32 %v906, %v985
    %v994 = vadd.f32 %v907, %v990
    %v995 = vmax.f32 %v993, 0.0
    %v996 = vmax.f32 %v994, 0.0
    %s997 = scalar_lea.vmem %s10, 32
    %v998 = vld [vmem:[%s997] sm:$0xff]
    %v999 = vld [vmem:[%s997 + $0x8] sm:$0xff]
    %v1000 = vld [vmem:[%s997 + $0x10] sm:$0xff]
    %v1001 = vld [vmem:[%s997 + $0x18] sm:$0xff]
    %v1002 = vlaneseq
    %v1003 = vshrl.u32 %v1002, 7
    %v1004 = vsub.s32 7, %v1003
    %v1005 = vrot.slane %v56, %v1004
    %v1007 = vsel %vm250, %v995, 0
    %v1010 = vsel %vm250, %v996, 0
    %1012 = vmatprep.subr.mxu0 0.0
    %1013 = vmatpush1.msra.mxu0 0.0
    %1014 = vmatprep.subr.mxu0 0.0
    %1015 = vmatpush1.msra.mxu0 0.0
    %1016 = vmatprep.subr.mxu0 0.0
    %1017 = vmatpush1.msra.mxu0 0.0
    %1018 = vmatprep.subr.mxu0 0.0
    %1019 = vmatpush1.msra.mxu0 0.0
    %1020 = vmatprep.subr.mxu0 0.0
    %1021 = vmatpush1.msra.mxu0 0.0
    %1022 = vmatprep.subr.mxu0 0.0
    %1023 = vmatpush1.msra.mxu0 0.0
    %1024 = vmatprep.subr.mxu0 0.0
    %1025 = vmatpush1.msra.mxu0 0.0
    %1026 = vmatprep.subr.mxu0 0.0
    %1027 = vmatpush1.msra.mxu0 0.0
    %1028 = vmatprep.subr.mxu0 0.0
    %1029 = vmatpush1.msra.mxu0 0.0
    %1030 = vmatprep.subr.mxu0 0.0
    %1031 = vmatpush1.msra.mxu0 0.0
    %1032 = vmatprep.subr.mxu0 0.0
    %1033 = vmatpush1.msra.mxu0 0.0
    %1034 = vmatprep.subr.mxu0 0.0
    %1035 = vmatpush1.msra.mxu0 0.0
    %1036 = vmatprep.subr.mxu0 0.0
    %1037 = vmatpush1.msra.mxu0 %v1001
    %1038 = vmatprep.subr.mxu0 0.0
    %1039 = vmatpush1.msra.mxu0 %v1000
    %1040 = vmatprep.subr.mxu0 0.0
    %1041 = vmatpush1.msra.mxu0 %v999
    %1042 = vmatprep.subr.mxu0 0.0
    %1043 = vmatpush1.msra.mxu0 %v998
    %1044 = vmatprep.subr.mxu0 0.0
    %1045 = vmatpush2.msra.mxu0 0.0
    %1046 = vmatprep.subr.mxu0 0.0
    %1047 = vmatpush2.msra.mxu0 0.0
    %1048 = vmatprep.subr.mxu0 0.0
    %1049 = vmatpush2.msra.mxu0 0.0
    %1050 = vmatprep.subr.mxu0 0.0
    %1051 = vmatpush2.msra.mxu0 0.0
    %1052 = vmatprep.subr.mxu0 0.0
    %1053 = vmatpush2.msra.mxu0 0.0
    %1054 = vmatprep.subr.mxu0 0.0
    %1055 = vmatpush2.msra.mxu0 0.0
    %1056 = vmatprep.subr.mxu0 0.0
    %1057 = vmatpush2.msra.mxu0 0.0
    %1058 = vmatprep.subr.mxu0 0.0
    %1059 = vmatpush2.msra.mxu0 0.0
    %1060 = vmatprep.subr.mxu0 0.0
    %1061 = vmatpush2.msra.mxu0 0.0
    %1062 = vmatprep.subr.mxu0 0.0
    %1063 = vmatpush2.msra.mxu0 0.0
    %1064 = vmatprep.subr.mxu0 0.0
    %1065 = vmatpush2.msra.mxu0 0.0
    %1066 = vmatprep.subr.mxu0 0.0
    %1067 = vmatpush2.msra.mxu0 0.0
    %1068 = vmatprep.subr.mxu0 0.0
    %1069 = vmatpush2.msra.mxu0 0.0
    %1070 = vmatprep.subr.mxu0 0.0
    %1071 = vmatpush2.msra.mxu0 0.0
    %1072 = vmatprep.subr.mxu0 0.0
    %1073 = vmatpush2.msra.mxu0 0.0
    %1074 = vmatprep.subr.mxu0 0.0
    %1075 = vmatpush2.msra.mxu0 0.0
    %1076 = vmatprep.mubr.f32.mxu0 0.0
    %1077 = vmatmul.mubr.f32.gmra.mxu0 %v1007
    %v1078 = vpop.f32.mrf.mxu0
    %v1079 = vadd.f32 %v1005, %v1078
    %v1080 = vpop.f32.mrf.mxu0
    %1081 = vmatprep.mubr.f32.mxu0 0.0
    %1082 = vmatmul.mubr.f32.gmra.mxu0 %v1010
    %v1083 = vpop.f32.mrf.mxu0
    %v1084 = vadd.f32 %v1005, %v1083
    %v1085 = vpop.f32.mrf.mxu0
    %1086 = vdwg.mxu0
    %s1087 = scalar_lea.vmem %s9, 64
    %v1088 = vld [vmem:[%s1087] sm:$0xff]
    %v1089 = vld [vmem:[%s1087 + $0x8] sm:$0xff]
    %v1090 = vld [vmem:[%s1087 + $0x10] sm:$0xff]
    %v1091 = vld [vmem:[%s1087 + $0x18] sm:$0xff]
    %v1092 = vlaneseq
    %v1093 = vshrl.u32 %v1092, 7
    %v1094 = vsub.s32 2, %v1093
    %v1095 = vrot.slane %v56, %v1094
    %1096 = vmatprep.subr.mxu0 0.0
    %1097 = vmatpush1.msra.mxu0 0.0
    %1098 = vmatprep.subr.mxu0 0.0
    %1099 = vmatpush1.msra.mxu0 0.0
    %1100 = vmatprep.subr.mxu0 0.0
    %1101 = vmatpush1.msra.mxu0 0.0
    %1102 = vmatprep.subr.mxu0 0.0
    %1103 = vmatpush1.msra.mxu0 0.0
    %1104 = vmatprep.subr.mxu0 0.0
    %1105 = vmatpush1.msra.mxu0 0.0
    %1106 = vmatprep.subr.mxu0 0.0
    %1107 = vmatpush1.msra.mxu0 0.0
    %1108 = vmatprep.subr.mxu0 0.0
    %1109 = vmatpush1.msra.mxu0 0.0
    %1110 = vmatprep.subr.mxu0 0.0
    %1111 = vmatpush1.msra.mxu0 0.0
    %1112 = vmatprep.subr.mxu0 0.0
    %1113 = vmatpush1.msra.mxu0 0.0
    %1114 = vmatprep.subr.mxu0 0.0
    %1115 = vmatpush1.msra.mxu0 0.0
    %1116 = vmatprep.subr.mxu0 0.0
    %1117 = vmatpush1.msra.mxu0 0.0
    %1118 = vmatprep.subr.mxu0 0.0
    %1119 = vmatpush1.msra.mxu0 0.0
    %1120 = vmatprep.subr.mxu0 0.0
    %1121 = vmatpush1.msra.mxu0 %v1091
    %1122 = vmatprep.subr.mxu0 0.0
    %1123 = vmatpush1.msra.mxu0 %v1090
    %1124 = vmatprep.subr.mxu0 0.0
    %1125 = vmatpush1.msra.mxu0 %v1089
    %1126 = vmatprep.subr.mxu0 0.0
    %1127 = vmatpush1.msra.mxu0 %v1088
    %1128 = vmatprep.subr.mxu0 0.0
    %1129 = vmatpush2.msra.mxu0 0.0
    %1130 = vmatprep.subr.mxu0 0.0
    %1131 = vmatpush2.msra.mxu0 0.0
    %1132 = vmatprep.subr.mxu0 0.0
    %1133 = vmatpush2.msra.mxu0 0.0
    %1134 = vmatprep.subr.mxu0 0.0
    %1135 = vmatpush2.msra.mxu0 0.0
    %1136 = vmatprep.subr.mxu0 0.0
    %1137 = vmatpush2.msra.mxu0 0.0
    %1138 = vmatprep.subr.mxu0 0.0
    %1139 = vmatpush2.msra.mxu0 0.0
    %1140 = vmatprep.subr.mxu0 0.0
    %1141 = vmatpush2.msra.mxu0 0.0
    %1142 = vmatprep.subr.mxu0 0.0
    %1143 = vmatpush2.msra.mxu0 0.0
    %1144 = vmatprep.subr.mxu0 0.0
    %1145 = vmatpush2.msra.mxu0 0.0
    %1146 = vmatprep.subr.mxu0 0.0
    %1147 = vmatpush2.msra.mxu0 0.0
    %1148 = vmatprep.subr.mxu0 0.0
    %1149 = vmatpush2.msra.mxu0 0.0
    %1150 = vmatprep.subr.mxu0 0.0
    %1151 = vmatpush2.msra.mxu0 0.0
    %1152 = vmatprep.subr.mxu0 0.0
    %1153 = vmatpush2.msra.mxu0 0.0
    %1154 = vmatprep.subr.mxu0 0.0
    %1155 = vmatpush2.msra.mxu0 0.0
    %1156 = vmatprep.subr.mxu0 0.0
    %1157 = vmatpush2.msra.mxu0 0.0
    %1158 = vmatprep.subr.mxu0 0.0
    %1159 = vmatpush2.msra.mxu0 0.0
    %1160 = vmatprep.mubr.f32.mxu0 0.0
    %1161 = vmatmul.mubr.f32.gmra.mxu0 %v665
    %v1162 = vpop.f32.mrf.mxu0
    %v1163 = vadd.f32 %v1095, %v1162
    %v1164 = vpop.f32.mrf.mxu0
    %1165 = vdwg.mxu0
    %v1167 = vsel %vm417, %v1084, 0
    %1169 = vmatprep.subr.mxu0 0.0
    %1170 = vmatpush1.msra.mxu0 0.0
    %1171 = vmatprep.subr.mxu0 0.0
    %1172 = vmatpush1.msra.mxu0 0.0
    %1173 = vmatprep.subr.mxu0 0.0
    %1174 = vmatpush1.msra.mxu0 0.0
    %1175 = vmatprep.subr.mxu0 0.0
    %1176 = vmatpush1.msra.mxu0 0.0
    %1177 = vmatprep.subr.mxu0 0.0
    %1178 = vmatpush1.msra.mxu0 0.0
    %1179 = vmatprep.subr.mxu0 0.0
    %1180 = vmatpush1.msra.mxu0 0.0
    %1181 = vmatprep.subr.mxu0 0.0
    %1182 = vmatpush1.msra.mxu0 0.0
    %1183 = vmatprep.subr.mxu0 0.0
    %1184 = vmatpush1.msra.mxu0 0.0
    %1185 = vmatprep.subr.mxu0 0.0
    %1186 = vmatpush1.msra.mxu0 0.0
    %1187 = vmatprep.subr.mxu0 0.0
    %1188 = vmatpush1.msra.mxu0 0.0
    %1189 = vmatprep.subr.mxu0 0.0
    %1190 = vmatpush1.msra.mxu0 0.0
    %1191 = vmatprep.subr.mxu0 0.0
    %1192 = vmatpush1.msra.mxu0 0.0
    %1193 = vmatprep.subr.mxu0 0.0
    %1194 = vmatpush1.msra.mxu0 0.0
    %1195 = vmatprep.subr.mxu0 0.0
    %1196 = vmatpush1.msra.mxu0 0.0
    %1197 = vmatprep.subr.mxu0 0.0
    %1198 = vmatpush1.msra.mxu0 %v1167
    %1199 = vmatprep.subr.mxu0 0.0
    %1200 = vmatpush1.msra.mxu0 %v1079
    %1201 = vmatprep.subr.mxu0 0.0
    %1202 = vmatpush2.msra.mxu0 0.0
    %1203 = vmatprep.subr.mxu0 0.0
    %1204 = vmatpush2.msra.mxu0 0.0
    %1205 = vmatprep.subr.mxu0 0.0
    %1206 = vmatpush2.msra.mxu0 0.0
    %1207 = vmatprep.subr.mxu0 0.0
    %1208 = vmatpush2.msra.mxu0 0.0
    %1209 = vmatprep.subr.mxu0 0.0
    %1210 = vmatpush2.msra.mxu0 0.0
    %1211 = vmatprep.subr.mxu0 0.0
    %1212 = vmatpush2.msra.mxu0 0.0
    %1213 = vmatprep.subr.mxu0 0.0
    %1214 = vmatpush2.msra.mxu0 0.0
    %1215 = vmatprep.subr.mxu0 0.0
    %1216 = vmatpush2.msra.mxu0 0.0
    %1217 = vmatprep.subr.mxu0 0.0
    %1218 = vmatpush2.msra.mxu0 0.0
    %1219 = vmatprep.subr.mxu0 0.0
    %1220 = vmatpush2.msra.mxu0 0.0
    %1221 = vmatprep.subr.mxu0 0.0
    %1222 = vmatpush2.msra.mxu0 0.0
    %1223 = vmatprep.subr.mxu0 0.0
    %1224 = vmatpush2.msra.mxu0 0.0
    %1225 = vmatprep.subr.mxu0 0.0
    %1226 = vmatpush2.msra.mxu0 0.0
    %1227 = vmatprep.subr.mxu0 0.0
    %1228 = vmatpush2.msra.mxu0 0.0
    %1229 = vmatprep.subr.mxu0 0.0
    %1230 = vmatpush2.msra.mxu0 0.0
    %1231 = vmatprep.subr.mxu0 0.0
    %1232 = vmatpush2.msra.mxu0 0.0
    %1233 = vmatprep.mubr.f32.mxu0 0.0
    %1234 = vmatmul.mubr.f32.gmra.mxu0 %v415
    %v1235 = vpop.f32.mrf.mxu0
    %v1236 = vadd.f32 0.0, %v1235
    %v1237 = vpop.f32.mrf.mxu0
    %1238 = vdwg.mxu0
    %v1239 = vadd.f32 %v1163, %v1236
    %1241 = vrot.lane.b32.xlu0 %v1079, 96
    %v1242 = vpop.permute.xlu0 %1241
    %1243 = vrot.lane.b32.xlu0 %v1084, 96
    %v1244 = vpop.permute.xlu0 %1243
    %v1246 = vsel %vm417, %v1244, 0
    %1248 = vmatprep.subr.mxu0 0.0
    %1249 = vmatpush1.msra.mxu0 0.0
    %1250 = vmatprep.subr.mxu0 0.0
    %1251 = vmatpush1.msra.mxu0 0.0
    %1252 = vmatprep.subr.mxu0 0.0
    %1253 = vmatpush1.msra.mxu0 0.0
    %1254 = vmatprep.subr.mxu0 0.0
    %1255 = vmatpush1.msra.mxu0 0.0
    %1256 = vmatprep.subr.mxu0 0.0
    %1257 = vmatpush1.msra.mxu0 0.0
    %1258 = vmatprep.subr.mxu0 0.0
    %1259 = vmatpush1.msra.mxu0 0.0
    %1260 = vmatprep.subr.mxu0 0.0
    %1261 = vmatpush1.msra.mxu0 0.0
    %1262 = vmatprep.subr.mxu0 0.0
    %1263 = vmatpush1.msra.mxu0 0.0
    %1264 = vmatprep.subr.mxu0 0.0
    %1265 = vmatpush1.msra.mxu0 0.0
    %1266 = vmatprep.subr.mxu0 0.0
    %1267 = vmatpush1.msra.mxu0 0.0
    %1268 = vmatprep.subr.mxu0 0.0
    %1269 = vmatpush1.msra.mxu0 0.0
    %1270 = vmatprep.subr.mxu0 0.0
    %1271 = vmatpush1.msra.mxu0 0.0
    %1272 = vmatprep.subr.mxu0 0.0
    %1273 = vmatpush1.msra.mxu0 0.0
    %1274 = vmatprep.subr.mxu0 0.0
    %1275 = vmatpush1.msra.mxu0 0.0
    %1276 = vmatprep.subr.mxu0 0.0
    %1277 = vmatpush1.msra.mxu0 %v1246
    %1278 = vmatprep.subr.mxu0 0.0
    %1279 = vmatpush1.msra.mxu0 %v1242
    %1280 = vmatprep.subr.mxu0 0.0
    %1281 = vmatpush2.msra.mxu0 0.0
    %1282 = vmatprep.subr.mxu0 0.0
    %1283 = vmatpush2.msra.mxu0 0.0
    %1284 = vmatprep.subr.mxu0 0.0
    %1285 = vmatpush2.msra.mxu0 0.0
    %1286 = vmatprep.subr.mxu0 0.0
    %1287 = vmatpush2.msra.mxu0 0.0
    %1288 = vmatprep.subr.mxu0 0.0
    %1289 = vmatpush2.msra.mxu0 0.0
    %1290 = vmatprep.subr.mxu0 0.0
    %1291 = vmatpush2.msra.mxu0 0.0
    %1292 = vmatprep.subr.mxu0 0.0
    %1293 = vmatpush2.msra.mxu0 0.0
    %1294 = vmatprep.subr.mxu0 0.0
    %1295 = vmatpush2.msra.mxu0 0.0
    %1296 = vmatprep.subr.mxu0 0.0
    %1297 = vmatpush2.msra.mxu0 0.0
    %1298 = vmatprep.subr.mxu0 0.0
    %1299 = vmatpush2.msra.mxu0 0.0
    %1300 = vmatprep.subr.mxu0 0.0
    %1301 = vmatpush2.msra.mxu0 0.0
    %1302 = vmatprep.subr.mxu0 0.0
    %1303 = vmatpush2.msra.mxu0 0.0
    %1304 = vmatprep.subr.mxu0 0.0
    %1305 = vmatpush2.msra.mxu0 0.0
    %1306 = vmatprep.subr.mxu0 0.0
    %1307 = vmatpush2.msra.mxu0 0.0
    %1308 = vmatprep.subr.mxu0 0.0
    %1309 = vmatpush2.msra.mxu0 0.0
    %1310 = vmatprep.subr.mxu0 0.0
    %1311 = vmatpush2.msra.mxu0 0.0
    %1312 = vmatprep.mubr.f32.mxu0 0.0
    %1313 = vmatmul.mubr.f32.gmra.mxu0 %v499
    %v1314 = vpop.f32.mrf.mxu0
    %v1315 = vadd.f32 0.0, %v1314
    %v1316 = vpop.f32.mrf.mxu0
    %1317 = vdwg.mxu0
    %v1318 = vadd.f32 %v1239, %v1315
    %1319 = vrot.lane.b32.xlu0 %v1079, 64
    %v1320 = vpop.permute.xlu0 %1319
    %1321 = vrot.lane.b32.xlu0 %v1084, 64
    %v1322 = vpop.permute.xlu0 %1321
    %v1324 = vsel %vm417, %v1322, 0
    %1326 = vmatprep.subr.mxu0 0.0
    %1327 = vmatpush1.msra.mxu0 0.0
    %1328 = vmatprep.subr.mxu0 0.0
    %1329 = vmatpush1.msra.mxu0 0.0
    %1330 = vmatprep.subr.mxu0 0.0
    %1331 = vmatpush1.msra.mxu0 0.0
    %1332 = vmatprep.subr.mxu0 0.0
    %1333 = vmatpush1.msra.mxu0 0.0
    %1334 = vmatprep.subr.mxu0 0.0
    %1335 = vmatpush1.msra.mxu0 0.0
    %1336 = vmatprep.subr.mxu0 0.0
    %1337 = vmatpush1.msra.mxu0 0.0
    %1338 = vmatprep.subr.mxu0 0.0
    %1339 = vmatpush1.msra.mxu0 0.0
    %1340 = vmatprep.subr.mxu0 0.0
    %1341 = vmatpush1.msra.mxu0 0.0
    %1342 = vmatprep.subr.mxu0 0.0
    %1343 = vmatpush1.msra.mxu0 0.0
    %1344 = vmatprep.subr.mxu0 0.0
    %1345 = vmatpush1.msra.mxu0 0.0
    %1346 = vmatprep.subr.mxu0 0.0
    %1347 = vmatpush1.msra.mxu0 0.0
    %1348 = vmatprep.subr.mxu0 0.0
    %1349 = vmatpush1.msra.mxu0 0.0
    %1350 = vmatprep.subr.mxu0 0.0
    %1351 = vmatpush1.msra.mxu0 0.0
    %1352 = vmatprep.subr.mxu0 0.0
    %1353 = vmatpush1.msra.mxu0 0.0
    %1354 = vmatprep.subr.mxu0 0.0
    %1355 = vmatpush1.msra.mxu0 %v1324
    %1356 = vmatprep.subr.mxu0 0.0
    %1357 = vmatpush1.msra.mxu0 %v1320
    %1358 = vmatprep.subr.mxu0 0.0
    %1359 = vmatpush2.msra.mxu0 0.0
    %1360 = vmatprep.subr.mxu0 0.0
    %1361 = vmatpush2.msra.mxu0 0.0
    %1362 = vmatprep.subr.mxu0 0.0
    %1363 = vmatpush2.msra.mxu0 0.0
    %1364 = vmatprep.subr.mxu0 0.0
    %1365 = vmatpush2.msra.mxu0 0.0
    %1366 = vmatprep.subr.mxu0 0.0
    %1367 = vmatpush2.msra.mxu0 0.0
    %1368 = vmatprep.subr.mxu0 0.0
    %1369 = vmatpush2.msra.mxu0 0.0
    %1370 = vmatprep.subr.mxu0 0.0
    %1371 = vmatpush2.msra.mxu0 0.0
    %1372 = vmatprep.subr.mxu0 0.0
    %1373 = vmatpush2.msra.mxu0 0.0
    %1374 = vmatprep.subr.mxu0 0.0
    %1375 = vmatpush2.msra.mxu0 0.0
    %1376 = vmatprep.subr.mxu0 0.0
    %1377 = vmatpush2.msra.mxu0 0.0
    %1378 = vmatprep.subr.mxu0 0.0
    %1379 = vmatpush2.msra.mxu0 0.0
    %1380 = vmatprep.subr.mxu0 0.0
    %1381 = vmatpush2.msra.mxu0 0.0
    %1382 = vmatprep.subr.mxu0 0.0
    %1383 = vmatpush2.msra.mxu0 0.0
    %1384 = vmatprep.subr.mxu0 0.0
    %1385 = vmatpush2.msra.mxu0 0.0
    %1386 = vmatprep.subr.mxu0 0.0
    %1387 = vmatpush2.msra.mxu0 0.0
    %1388 = vmatprep.subr.mxu0 0.0
    %1389 = vmatpush2.msra.mxu0 0.0
    %1390 = vmatprep.mubr.f32.mxu0 0.0
    %1391 = vmatmul.mubr.f32.gmra.mxu0 %v580
    %v1392 = vpop.f32.mrf.mxu0
    %v1393 = vadd.f32 0.0, %v1392
    %v1394 = vpop.f32.mrf.mxu0
    %1395 = vdwg.mxu0
    %v1396 = vadd.f32 %v1318, %v1393
    %v1397 = vmax.f32 %v1396, 0.0
    %s1398 = scalar_lea.vmem %s11, 32
    %v1399 = vld [vmem:[%s1398] sm:$0xff]
    %v1400 = vld [vmem:[%s1398 + $0x8] sm:$0xff]
    %v1401 = vld [vmem:[%s1398 + $0x10] sm:$0xff]
    %v1402 = vld [vmem:[%s1398 + $0x18] sm:$0xff]
    %v1403 = vlaneseq
    %v1404 = vshrl.u32 %v1403, 7
    %v1405 = vsub.s32 1, %v1404
    %v1406 = vrot.slane %v57, %v1405
    %v1408 = vsel %vm250, %v1397, 0
    %1410 = vmatprep.subr.mxu0 0.0
    %1411 = vmatpush1.msra.mxu0 0.0
    %1412 = vmatprep.subr.mxu0 0.0
    %1413 = vmatpush1.msra.mxu0 0.0
    %1414 = vmatprep.subr.mxu0 0.0
    %1415 = vmatpush1.msra.mxu0 0.0
    %1416 = vmatprep.subr.mxu0 0.0
    %1417 = vmatpush1.msra.mxu0 0.0
    %1418 = vmatprep.subr.mxu0 0.0
    %1419 = vmatpush1.msra.mxu0 0.0
    %1420 = vmatprep.subr.mxu0 0.0
    %1421 = vmatpush1.msra.mxu0 0.0
    %1422 = vmatprep.subr.mxu0 0.0
    %1423 = vmatpush1.msra.mxu0 0.0
    %1424 = vmatprep.subr.mxu0 0.0
    %1425 = vmatpush1.msra.mxu0 0.0
    %1426 = vmatprep.subr.mxu0 0.0
    %1427 = vmatpush1.msra.mxu0 0.0
    %1428 = vmatprep.subr.mxu0 0.0
    %1429 = vmatpush1.msra.mxu0 0.0
    %1430 = vmatprep.subr.mxu0 0.0
    %1431 = vmatpush1.msra.mxu0 0.0
    %1432 = vmatprep.subr.mxu0 0.0
    %1433 = vmatpush1.msra.mxu0 0.0
    %1434 = vmatprep.subr.mxu0 0.0
    %1435 = vmatpush1.msra.mxu0 %v1402
    %1436 = vmatprep.subr.mxu0 0.0
    %1437 = vmatpush1.msra.mxu0 %v1401
    %1438 = vmatprep.subr.mxu0 0.0
    %1439 = vmatpush1.msra.mxu0 %v1400
    %1440 = vmatprep.subr.mxu0 0.0
    %1441 = vmatpush1.msra.mxu0 %v1399
    %1442 = vmatprep.subr.mxu0 0.0
    %1443 = vmatpush2.msra.mxu0 0.0
    %1444 = vmatprep.subr.mxu0 0.0
    %1445 = vmatpush2.msra.mxu0 0.0
    %1446 = vmatprep.subr.mxu0 0.0
    %1447 = vmatpush2.msra.mxu0 0.0
    %1448 = vmatprep.subr.mxu0 0.0
    %1449 = vmatpush2.msra.mxu0 0.0
    %1450 = vmatprep.subr.mxu0 0.0
    %1451 = vmatpush2.msra.mxu0 0.0
    %1452 = vmatprep.subr.mxu0 0.0
    %1453 = vmatpush2.msra.mxu0 0.0
    %1454 = vmatprep.subr.mxu0 0.0
    %1455 = vmatpush2.msra.mxu0 0.0
    %1456 = vmatprep.subr.mxu0 0.0
    %1457 = vmatpush2.msra.mxu0 0.0
    %1458 = vmatprep.subr.mxu0 0.0
    %1459 = vmatpush2.msra.mxu0 0.0
    %1460 = vmatprep.subr.mxu0 0.0
    %1461 = vmatpush2.msra.mxu0 0.0
    %1462 = vmatprep.subr.mxu0 0.0
    %1463 = vmatpush2.msra.mxu0 0.0
    %1464 = vmatprep.subr.mxu0 0.0
    %1465 = vmatpush2.msra.mxu0 0.0
    %1466 = vmatprep.subr.mxu0 0.0
    %1467 = vmatpush2.msra.mxu0 0.0
    %1468 = vmatprep.subr.mxu0 0.0
    %1469 = vmatpush2.msra.mxu0 0.0
    %1470 = vmatprep.subr.mxu0 0.0
    %1471 = vmatpush2.msra.mxu0 0.0
    %1472 = vmatprep.subr.mxu0 0.0
    %1473 = vmatpush2.msra.mxu0 0.0
    %1474 = vmatprep.mubr.f32.mxu0 0.0
    %1475 = vmatmul.mubr.f32.gmra.mxu0 %v1408
    %v1476 = vpop.f32.mrf.mxu0
    %v1477 = vadd.f32 %v1406, %v1476
    %v1478 = vpop.f32.mrf.mxu0
    %1479 = vdwg.mxu0
    %s1480 = scalar_lea.vmem %s9, 96
    %v1481 = vld [vmem:[%s1480] sm:$0xff]
    %v1482 = vld [vmem:[%s1480 + $0x8] sm:$0xff]
    %v1483 = vld [vmem:[%s1480 + $0x10] sm:$0xff]
    %v1484 = vld [vmem:[%s1480 + $0x18] sm:$0xff]
    %v1485 = vlaneseq
    %v1486 = vshrl.u32 %v1485, 7
    %v1487 = vsub.s32 3, %v1486
    %v1488 = vrot.slane %v56, %v1487
    %1489 = vmatprep.subr.mxu0 0.0
    %1490 = vmatpush1.msra.mxu0 0.0
    %1491 = vmatprep.subr.mxu0 0.0
    %1492 = vmatpush1.msra.mxu0 0.0
    %1493 = vmatprep.subr.mxu0 0.0
    %1494 = vmatpush1.msra.mxu0 0.0
    %1495 = vmatprep.subr.mxu0 0.0
    %1496 = vmatpush1.msra.mxu0 0.0
    %1497 = vmatprep.subr.mxu0 0.0
    %1498 = vmatpush1.msra.mxu0 0.0
    %1499 = vmatprep.subr.mxu0 0.0
    %1500 = vmatpush1.msra.mxu0 0.0
    %1501 = vmatprep.subr.mxu0 0.0
    %1502 = vmatpush1.msra.mxu0 0.0
    %1503 = vmatprep.subr.mxu0 0.0
    %1504 = vmatpush1.msra.mxu0 0.0
    %1505 = vmatprep.subr.mxu0 0.0
    %1506 = vmatpush1.msra.mxu0 0.0
    %1507 = vmatprep.subr.mxu0 0.0
    %1508 = vmatpush1.msra.mxu0 0.0
    %1509 = vmatprep.subr.mxu0 0.0
    %1510 = vmatpush1.msra.mxu0 0.0
    %1511 = vmatprep.subr.mxu0 0.0
    %1512 = vmatpush1.msra.mxu0 0.0
    %1513 = vmatprep.subr.mxu0 0.0
    %1514 = vmatpush1.msra.mxu0 %v1484
    %1515 = vmatprep.subr.mxu0 0.0
    %1516 = vmatpush1.msra.mxu0 %v1483
    %1517 = vmatprep.subr.mxu0 0.0
    %1518 = vmatpush1.msra.mxu0 %v1482
    %1519 = vmatprep.subr.mxu0 0.0
    %1520 = vmatpush1.msra.mxu0 %v1481
    %1521 = vmatprep.subr.mxu0 0.0
    %1522 = vmatpush2.msra.mxu0 0.0
    %1523 = vmatprep.subr.mxu0 0.0
    %1524 = vmatpush2.msra.mxu0 0.0
    %1525 = vmatprep.subr.mxu0 0.0
    %1526 = vmatpush2.msra.mxu0 0.0
    %1527 = vmatprep.subr.mxu0 0.0
    %1528 = vmatpush2.msra.mxu0 0.0
    %1529 = vmatprep.subr.mxu0 0.0
    %1530 = vmatpush2.msra.mxu0 0.0
    %1531 = vmatprep.subr.mxu0 0.0
    %1532 = vmatpush2.msra.mxu0 0.0
    %1533 = vmatprep.subr.mxu0 0.0
    %1534 = vmatpush2.msra.mxu0 0.0
    %1535 = vmatprep.subr.mxu0 0.0
    %1536 = vmatpush2.msra.mxu0 0.0
    %1537 = vmatprep.subr.mxu0 0.0
    %1538 = vmatpush2.msra.mxu0 0.0
    %1539 = vmatprep.subr.mxu0 0.0
    %1540 = vmatpush2.msra.mxu0 0.0
    %1541 = vmatprep.subr.mxu0 0.0
    %1542 = vmatpush2.msra.mxu0 0.0
    %1543 = vmatprep.subr.mxu0 0.0
    %1544 = vmatpush2.msra.mxu0 0.0
    %1545 = vmatprep.subr.mxu0 0.0
    %1546 = vmatpush2.msra.mxu0 0.0
    %1547 = vmatprep.subr.mxu0 0.0
    %1548 = vmatpush2.msra.mxu0 0.0
    %1549 = vmatprep.subr.mxu0 0.0
    %1550 = vmatpush2.msra.mxu0 0.0
    %1551 = vmatprep.subr.mxu0 0.0
    %1552 = vmatpush2.msra.mxu0 0.0
    %1553 = vmatprep.mubr.f32.mxu0 0.0
    %1554 = vmatmul.mubr.f32.gmra.mxu0 %v1007
    %v1555 = vpop.f32.mrf.mxu0
    %v1556 = vadd.f32 %v1488, %v1555
    %v1557 = vpop.f32.mrf.mxu0
    %1558 = vmatprep.mubr.f32.mxu0 0.0
    %1559 = vmatmul.mubr.f32.gmra.mxu0 %v1010
    %v1560 = vpop.f32.mrf.mxu0
    %v1561 = vadd.f32 %v1488, %v1560
    %v1562 = vpop.f32.mrf.mxu0
    %1563 = vdwg.mxu0
    %v1565 = vsel %vm153, %v1477, 0
    %1567 = vmatprep.subr.mxu0 0.0
    %1568 = vmatpush1.msra.mxu0 0.0
    %1569 = vmatprep.subr.mxu0 0.0
    %1570 = vmatpush1.msra.mxu0 0.0
    %1571 = vmatprep.subr.mxu0 0.0
    %1572 = vmatpush1.msra.mxu0 0.0
    %1573 = vmatprep.subr.mxu0 0.0
    %1574 = vmatpush1.msra.mxu0 0.0
    %1575 = vmatprep.subr.mxu0 0.0
    %1576 = vmatpush1.msra.mxu0 0.0
    %1577 = vmatprep.subr.mxu0 0.0
    %1578 = vmatpush1.msra.mxu0 0.0
    %1579 = vmatprep.subr.mxu0 0.0
    %1580 = vmatpush1.msra.mxu0 0.0
    %1581 = vmatprep.subr.mxu0 0.0
    %1582 = vmatpush1.msra.mxu0 0.0
    %1583 = vmatprep.subr.mxu0 0.0
    %1584 = vmatpush1.msra.mxu0 0.0
    %1585 = vmatprep.subr.mxu0 0.0
    %1586 = vmatpush1.msra.mxu0 0.0
    %1587 = vmatprep.subr.mxu0 0.0
    %1588 = vmatpush1.msra.mxu0 0.0
    %1589 = vmatprep.subr.mxu0 0.0
    %1590 = vmatpush1.msra.mxu0 0.0
    %1591 = vmatprep.subr.mxu0 0.0
    %1592 = vmatpush1.msra.mxu0 0.0
    %1593 = vmatprep.subr.mxu0 0.0
    %1594 = vmatpush1.msra.mxu0 0.0
    %1595 = vmatprep.subr.mxu0 0.0
    %1596 = vmatpush1.msra.mxu0 0.0
    %1597 = vmatprep.subr.mxu0 0.0
    %1598 = vmatpush1.msra.mxu0 %v1565
    %1599 = vmatprep.subr.mxu0 0.0
    %1600 = vmatpush2.msra.mxu0 0.0
    %1601 = vmatprep.subr.mxu0 0.0
    %1602 = vmatpush2.msra.mxu0 0.0
    %1603 = vmatprep.subr.mxu0 0.0
    %1604 = vmatpush2.msra.mxu0 0.0
    %1605 = vmatprep.subr.mxu0 0.0
    %1606 = vmatpush2.msra.mxu0 0.0
    %1607 = vmatprep.subr.mxu0 0.0
    %1608 = vmatpush2.msra.mxu0 0.0
    %1609 = vmatprep.subr.mxu0 0.0
    %1610 = vmatpush2.msra.mxu0 0.0
    %1611 = vmatprep.subr.mxu0 0.0
    %1612 = vmatpush2.msra.mxu0 0.0
    %1613 = vmatprep.subr.mxu0 0.0
    %1614 = vmatpush2.msra.mxu0 0.0
    %1615 = vmatprep.subr.mxu0 0.0
    %1616 = vmatpush2.msra.mxu0 0.0
    %1617 = vmatprep.subr.mxu0 0.0
    %1618 = vmatpush2.msra.mxu0 0.0
    %1619 = vmatprep.subr.mxu0 0.0
    %1620 = vmatpush2.msra.mxu0 0.0
    %1621 = vmatprep.subr.mxu0 0.0
    %1622 = vmatpush2.msra.mxu0 0.0
    %1623 = vmatprep.subr.mxu0 0.0
    %1624 = vmatpush2.msra.mxu0 0.0
    %1625 = vmatprep.subr.mxu0 0.0
    %1626 = vmatpush2.msra.mxu0 0.0
    %1627 = vmatprep.subr.mxu0 0.0
    %1628 = vmatpush2.msra.mxu0 0.0
    %1629 = vmatprep.subr.mxu0 0.0
    %1630 = vmatpush2.msra.mxu0 0.0
    %1631 = vmatprep.mubr.f32.mxu0 0.0
    %1632 = vmatmul.mubr.f32.gmra.mxu0 %v823
    %v1633 = vpop.f32.mrf.mxu0
    %v1634 = vadd.f32 0.0, %v1633
    %v1635 = vpop.f32.mrf.mxu0
    %1636 = vmatprep.mubr.f32.mxu0 0.0
    %1637 = vmatmul.mubr.f32.gmra.mxu0 %v826
    %v1638 = vpop.f32.mrf.mxu0
    %v1639 = vadd.f32 0.0, %v1638
    %v1640 = vpop.f32.mrf.mxu0
    %1641 = vdwg.mxu0
    %v1642 = vadd.f32 %v1556, %v1634
    %v1643 = vadd.f32 %v1561, %v1639
    %1644 = vrot.lane.b32.xlu0 %v1477, 96
    %v1645 = vpop.permute.xlu0 %1644
    %v1646 = vsel %vm153, %v1645, 0
    %1648 = vmatprep.subr.mxu0 0.0
    %1649 = vmatpush1.msra.mxu0 0.0
    %1650 = vmatprep.subr.mxu0 0.0
    %1651 = vmatpush1.msra.mxu0 0.0
    %1652 = vmatprep.subr.mxu0 0.0
    %1653 = vmatpush1.msra.mxu0 0.0
    %1654 = vmatprep.subr.mxu0 0.0
    %1655 = vmatpush1.msra.mxu0 0.0
    %1656 = vmatprep.subr.mxu0 0.0
    %1657 = vmatpush1.msra.mxu0 0.0
    %1658 = vmatprep.subr.mxu0 0.0
    %1659 = vmatpush1.msra.mxu0 0.0
    %1660 = vmatprep.subr.mxu0 0.0
    %1661 = vmatpush1.msra.mxu0 0.0
    %1662 = vmatprep.subr.mxu0 0.0
    %1663 = vmatpush1.msra.mxu0 0.0
    %1664 = vmatprep.subr.mxu0 0.0
    %1665 = vmatpush1.msra.mxu0 0.0
    %1666 = vmatprep.subr.mxu0 0.0
    %1667 = vmatpush1.msra.mxu0 0.0
    %1668 = vmatprep.subr.mxu0 0.0
    %1669 = vmatpush1.msra.mxu0 0.0
    %1670 = vmatprep.subr.mxu0 0.0
    %1671 = vmatpush1.msra.mxu0 0.0
    %1672 = vmatprep.subr.mxu0 0.0
    %1673 = vmatpush1.msra.mxu0 0.0
    %1674 = vmatprep.subr.mxu0 0.0
    %1675 = vmatpush1.msra.mxu0 0.0
    %1676 = vmatprep.subr.mxu0 0.0
    %1677 = vmatpush1.msra.mxu0 0.0
    %1678 = vmatprep.subr.mxu0 0.0
    %1679 = vmatpush1.msra.mxu0 %v1646
    %1680 = vmatprep.subr.mxu0 0.0
    %1681 = vmatpush2.msra.mxu0 0.0
    %1682 = vmatprep.subr.mxu0 0.0
    %1683 = vmatpush2.msra.mxu0 0.0
    %1684 = vmatprep.subr.mxu0 0.0
    %1685 = vmatpush2.msra.mxu0 0.0
    %1686 = vmatprep.subr.mxu0 0.0
    %1687 = vmatpush2.msra.mxu0 0.0
    %1688 = vmatprep.subr.mxu0 0.0
    %1689 = vmatpush2.msra.mxu0 0.0
    %1690 = vmatprep.subr.mxu0 0.0
    %1691 = vmatpush2.msra.mxu0 0.0
    %1692 = vmatprep.subr.mxu0 0.0
    %1693 = vmatpush2.msra.mxu0 0.0
    %1694 = vmatprep.subr.mxu0 0.0
    %1695 = vmatpush2.msra.mxu0 0.0
    %1696 = vmatprep.subr.mxu0 0.0
    %1697 = vmatpush2.msra.mxu0 0.0
    %1698 = vmatprep.subr.mxu0 0.0
    %1699 = vmatpush2.msra.mxu0 0.0
    %1700 = vmatprep.subr.mxu0 0.0
    %1701 = vmatpush2.msra.mxu0 0.0
    %1702 = vmatprep.subr.mxu0 0.0
    %1703 = vmatpush2.msra.mxu0 0.0
    %1704 = vmatprep.subr.mxu0 0.0
    %1705 = vmatpush2.msra.mxu0 0.0
    %1706 = vmatprep.subr.mxu0 0.0
    %1707 = vmatpush2.msra.mxu0 0.0
    %1708 = vmatprep.subr.mxu0 0.0
    %1709 = vmatpush2.msra.mxu0 0.0
    %1710 = vmatprep.subr.mxu0 0.0
    %1711 = vmatpush2.msra.mxu0 0.0
    %1712 = vmatprep.mubr.f32.mxu0 0.0
    %1713 = vmatmul.mubr.f32.gmra.mxu0 %v911
    %v1714 = vpop.f32.mrf.mxu0
    %v1715 = vadd.f32 0.0, %v1714
    %v1716 = vpop.f32.mrf.mxu0
    %1717 = vmatprep.mubr.f32.mxu0 0.0
    %1718 = vmatmul.mubr.f32.gmra.mxu0 %v914
    %v1719 = vpop.f32.mrf.mxu0
    %v1720 = vadd.f32 0.0, %v1719
    %v1721 = vpop.f32.mrf.mxu0
    %1722 = vdwg.mxu0
    %v1723 = vadd.f32 %v1642, %v1715
    %v1724 = vadd.f32 %v1643, %v1720
    %v1725 = vmax.f32 %v1723, 0.0
    %v1726 = vmax.f32 %v1724, 0.0
    %vm1727 = vcmask 259072
    %1728 = vst.msk [vmem:[#allocation2] sm:$0x3f] %vm1727, %v1397
    %1729 = vst.msk [vmem:[#allocation4] sm:$0xff] %vm250, %v1725
    %vm1730 = vcmask 254976
    %1731 = vst.msk [vmem:[#allocation4 + $0x8] sm:$0x3] %vm1730, %v1726
    %v1732 = vlaneseq
    %v1733 = vand.u32 %v1732, 127
    %v1734 = vld [vmem:[%s0] sm:$0xf]
    %1735 = vset.pattern.permute.xlu0 0
    %1736 = vperm.xlu0 %1735, %v1734
    %v1737 = vpop.permute.xlu0 %1736
    %vm1738 = vcmp.eq.s32.totalorder %v1733, %v1737
    %v1739 = vsel %vm1738, 1.0, 0.0
    %v1741 = vsel %vm413, %v1739, 0
    %v1744 = vsel %vm417, %v1726, 0
    %1746 = vmatprep.subr.mxu0 0.0
    %1747 = vmatpush1.msra.mxu0 0.0
    %1748 = vmatprep.subr.mxu0 0.0
    %1749 = vmatpush1.msra.mxu0 0.0
    %1750 = vmatprep.subr.mxu0 0.0
    %1751 = vmatpush1.msra.mxu0 0.0
    %1752 = vmatprep.subr.mxu0 0.0
    %1753 = vmatpush1.msra.mxu0 0.0
    %1754 = vmatprep.subr.mxu0 0.0
    %1755 = vmatpush1.msra.mxu0 0.0
    %1756 = vmatprep.subr.mxu0 0.0
    %1757 = vmatpush1.msra.mxu0 0.0
    %1758 = vmatprep.subr.mxu0 0.0
    %1759 = vmatpush1.msra.mxu0 0.0
    %1760 = vmatprep.subr.mxu0 0.0
    %1761 = vmatpush1.msra.mxu0 0.0
    %1762 = vmatprep.subr.mxu0 0.0
    %1763 = vmatpush1.msra.mxu0 0.0
    %1764 = vmatprep.subr.mxu0 0.0
    %1765 = vmatpush1.msra.mxu0 0.0
    %1766 = vmatprep.subr.mxu0 0.0
    %1767 = vmatpush1.msra.mxu0 0.0
    %1768 = vmatprep.subr.mxu0 0.0
    %1769 = vmatpush1.msra.mxu0 0.0
    %1770 = vmatprep.subr.mxu0 0.0
    %1771 = vmatpush1.msra.mxu0 0.0
    %1772 = vmatprep.subr.mxu0 0.0
    %1773 = vmatpush1.msra.mxu0 0.0
    %1774 = vmatprep.subr.mxu0 0.0
    %1775 = vmatpush1.msra.mxu0 %v1744
    %1776 = vmatprep.subr.mxu0 0.0
    %1777 = vmatpush1.msra.mxu0 %v1725
    %1778 = vmatprep.subr.mxu0 0.0
    %1779 = vmatpush2.msra.mxu0 0.0
    %1780 = vmatprep.subr.mxu0 0.0
    %1781 = vmatpush2.msra.mxu0 0.0
    %1782 = vmatprep.subr.mxu0 0.0
    %1783 = vmatpush2.msra.mxu0 0.0
    %1784 = vmatprep.subr.mxu0 0.0
    %1785 = vmatpush2.msra.mxu0 0.0
    %1786 = vmatprep.subr.mxu0 0.0
    %1787 = vmatpush2.msra.mxu0 0.0
    %1788 = vmatprep.subr.mxu0 0.0
    %1789 = vmatpush2.msra.mxu0 0.0
    %1790 = vmatprep.subr.mxu0 0.0
    %1791 = vmatpush2.msra.mxu0 0.0
    %1792 = vmatprep.subr.mxu0 0.0
    %1793 = vmatpush2.msra.mxu0 0.0
    %1794 = vmatprep.subr.mxu0 0.0
    %1795 = vmatpush2.msra.mxu0 0.0
    %1796 = vmatprep.subr.mxu0 0.0
    %1797 = vmatpush2.msra.mxu0 0.0
    %1798 = vmatprep.subr.mxu0 0.0
    %1799 = vmatpush2.msra.mxu0 0.0
    %1800 = vmatprep.subr.mxu0 0.0
    %1801 = vmatpush2.msra.mxu0 0.0
    %1802 = vmatprep.subr.mxu0 0.0
    %1803 = vmatpush2.msra.mxu0 0.0
    %1804 = vmatprep.subr.mxu0 0.0
    %1805 = vmatpush2.msra.mxu0 0.0
    %1806 = vmatprep.subr.mxu0 0.0
    %1807 = vmatpush2.msra.mxu0 0.0
    %1808 = vmatprep.subr.mxu0 0.0
    %1809 = vmatpush2.msra.mxu0 0.0
    %1810 = vmatprep.mubr.f32.mxu0 0.0
    %1811 = vmatmul.mubr.f32.gmra.mxu0 %v1741
    %v1812 = vpop.f32.mrf.mxu0
    %v1813 = vadd.f32 0.0, %v1812
    %v1814 = vpop.f32.mrf.mxu0
    %1815 = vdwg.mxu0
    %v1816 = vld [vmem:[%s1] sm:$0x7]
    %1817 = vset.pattern.permute.xlu0 0
    %1818 = vperm.xlu0 %1817, %v1816
    %v1819 = vpop.permute.xlu0 %1818
    %vm1820 = vcmp.eq.s32.totalorder %v1733, %v1819
    %v1821 = vsel %vm1820, 1.0, 0.0
    %v1823 = vsel %vm821, %v1821, 0
    %v1825 = vsel %vm153, %v1397, 0
    %1827 = vmatprep.subr.mxu0 0.0
    %1828 = vmatpush1.msra.mxu0 0.0
    %1829 = vmatprep.subr.mxu0 0.0
    %1830 = vmatpush1.msra.mxu0 0.0
    %1831 = vmatprep.subr.mxu0 0.0
    %1832 = vmatpush1.msra.mxu0 0.0
    %1833 = vmatprep.subr.mxu0 0.0
    %1834 = vmatpush1.msra.mxu0 0.0
    %1835 = vmatprep.subr.mxu0 0.0
    %1836 = vmatpush1.msra.mxu0 0.0
    %1837 = vmatprep.subr.mxu0 0.0
    %1838 = vmatpush1.msra.mxu0 0.0
    %1839 = vmatprep.subr.mxu0 0.0
    %1840 = vmatpush1.msra.mxu0 0.0
    %1841 = vmatprep.subr.mxu0 0.0
    %1842 = vmatpush1.msra.mxu0 0.0
    %1843 = vmatprep.subr.mxu0 0.0
    %1844 = vmatpush1.msra.mxu0 0.0
    %1845 = vmatprep.subr.mxu0 0.0
    %1846 = vmatpush1.msra.mxu0 0.0
    %1847 = vmatprep.subr.mxu0 0.0
    %1848 = vmatpush1.msra.mxu0 0.0
    %1849 = vmatprep.subr.mxu0 0.0
    %1850 = vmatpush1.msra.mxu0 0.0
    %1851 = vmatprep.subr.mxu0 0.0
    %1852 = vmatpush1.msra.mxu0 0.0
    %1853 = vmatprep.subr.mxu0 0.0
    %1854 = vmatpush1.msra.mxu0 0.0
    %1855 = vmatprep.subr.mxu0 0.0
    %1856 = vmatpush1.msra.mxu0 0.0
    %1857 = vmatprep.subr.mxu0 0.0
    %1858 = vmatpush1.msra.mxu0 %v1825
    %1859 = vmatprep.subr.mxu0 0.0
    %1860 = vmatpush2.msra.mxu0 0.0
    %1861 = vmatprep.subr.mxu0 0.0
    %1862 = vmatpush2.msra.mxu0 0.0
    %1863 = vmatprep.subr.mxu0 0.0
    %1864 = vmatpush2.msra.mxu0 0.0
    %1865 = vmatprep.subr.mxu0 0.0
    %1866 = vmatpush2.msra.mxu0 0.0
    %1867 = vmatprep.subr.mxu0 0.0
    %1868 = vmatpush2.msra.mxu0 0.0
    %1869 = vmatprep.subr.mxu0 0.0
    %1870 = vmatpush2.msra.mxu0 0.0
    %1871 = vmatprep.subr.mxu0 0.0
    %1872 = vmatpush2.msra.mxu0 0.0
    %1873 = vmatprep.subr.mxu0 0.0
    %1874 = vmatpush2.msra.mxu0 0.0
    %1875 = vmatprep.subr.mxu0 0.0
    %1876 = vmatpush2.msra.mxu0 0.0
    %1877 = vmatprep.subr.mxu0 0.0
    %1878 = vmatpush2.msra.mxu0 0.0
    %1879 = vmatprep.subr.mxu0 0.0
    %1880 = vmatpush2.msra.mxu0 0.0
    %1881 = vmatprep.subr.mxu0 0.0
    %1882 = vmatpush2.msra.mxu0 0.0
    %1883 = vmatprep.subr.mxu0 0.0
    %1884 = vmatpush2.msra.mxu0 0.0
    %1885 = vmatprep.subr.mxu0 0.0
    %1886 = vmatpush2.msra.mxu0 0.0
    %1887 = vmatprep.subr.mxu0 0.0
    %1888 = vmatpush2.msra.mxu0 0.0
    %1889 = vmatprep.subr.mxu0 0.0
    %1890 = vmatpush2.msra.mxu0 0.0
    %1891 = vmatprep.mubr.f32.mxu0 0.0
    %1892 = vmatmul.mubr.f32.gmra.mxu0 %v1823
    %v1893 = vpop.f32.mrf.mxu0
    %v1894 = vadd.f32 0.0, %v1893
    %v1895 = vpop.f32.mrf.mxu0
    %1896 = vdwg.mxu0
    %v1897 = vld [vmem:[%s2] sm:$0x1f]
    %1898 = vset.pattern.permute.xlu0 0
    %1899 = vperm.xlu0 %1898, %v1897
    %v1900 = vpop.permute.xlu0 %1899
    %vm1901 = vcmp.eq.s32.totalorder %v1733, %v1900
    %v1902 = vsel %vm1901, 1.0, 0.0
    %v1904 = vsel %vm413, %v1902, 0
    %1906 = vmatprep.subr.mxu0 0.0
    %1907 = vmatpush1.msra.mxu0 0.0
    %1908 = vmatprep.subr.mxu0 0.0
    %1909 = vmatpush1.msra.mxu0 0.0
    %1910 = vmatprep.subr.mxu0 0.0
    %1911 = vmatpush1.msra.mxu0 0.0
    %1912 = vmatprep.subr.mxu0 0.0
    %1913 = vmatpush1.msra.mxu0 0.0
    %1914 = vmatprep.subr.mxu0 0.0
    %1915 = vmatpush1.msra.mxu0 0.0
    %1916 = vmatprep.subr.mxu0 0.0
    %1917 = vmatpush1.msra.mxu0 0.0
    %1918 = vmatprep.subr.mxu0 0.0
    %1919 = vmatpush1.msra.mxu0 0.0
    %1920 = vmatprep.subr.mxu0 0.0
    %1921 = vmatpush1.msra.mxu0 0.0
    %1922 = vmatprep.subr.mxu0 0.0
    %1923 = vmatpush1.msra.mxu0 0.0
    %1924 = vmatprep.subr.mxu0 0.0
    %1925 = vmatpush1.msra.mxu0 0.0
    %1926 = vmatprep.subr.mxu0 0.0
    %1927 = vmatpush1.msra.mxu0 0.0
    %1928 = vmatprep.subr.mxu0 0.0
    %1929 = vmatpush1.msra.mxu0 0.0
    %1930 = vmatprep.subr.mxu0 0.0
    %1931 = vmatpush1.msra.mxu0 0.0
    %1932 = vmatprep.subr.mxu0 0.0
    %1933 = vmatpush1.msra.mxu0 0.0
    %1934 = vmatprep.subr.mxu0 0.0
    %1935 = vmatpush1.msra.mxu0 %v1744
    %1936 = vmatprep.subr.mxu0 0.0
    %1937 = vmatpush1.msra.mxu0 %v1725
    %1938 = vmatprep.subr.mxu0 0.0
    %1939 = vmatpush2.msra.mxu0 0.0
    %1940 = vmatprep.subr.mxu0 0.0
    %1941 = vmatpush2.msra.mxu0 0.0
    %1942 = vmatprep.subr.mxu0 0.0
    %1943 = vmatpush2.msra.mxu0 0.0
    %1944 = vmatprep.subr.mxu0 0.0
    %1945 = vmatpush2.msra.mxu0 0.0
    %1946 = vmatprep.subr.mxu0 0.0
    %1947 = vmatpush2.msra.mxu0 0.0
    %1948 = vmatprep.subr.mxu0 0.0
    %1949 = vmatpush2.msra.mxu0 0.0
    %1950 = vmatprep.subr.mxu0 0.0
    %1951 = vmatpush2.msra.mxu0 0.0
    %1952 = vmatprep.subr.mxu0 0.0
    %1953 = vmatpush2.msra.mxu0 0.0
    %1954 = vmatprep.subr.mxu0 0.0
    %1955 = vmatpush2.msra.mxu0 0.0
    %1956 = vmatprep.subr.mxu0 0.0
    %1957 = vmatpush2.msra.mxu0 0.0
    %1958 = vmatprep.subr.mxu0 0.0
    %1959 = vmatpush2.msra.mxu0 0.0
    %1960 = vmatprep.subr.mxu0 0.0
    %1961 = vmatpush2.msra.mxu0 0.0
    %1962 = vmatprep.subr.mxu0 0.0
    %1963 = vmatpush2.msra.mxu0 0.0
    %1964 = vmatprep.subr.mxu0 0.0
    %1965 = vmatpush2.msra.mxu0 0.0
    %1966 = vmatprep.subr.mxu0 0.0
    %1967 = vmatpush2.msra.mxu0 0.0
    %1968 = vmatprep.subr.mxu0 0.0
    %1969 = vmatpush2.msra.mxu0 0.0
    %1970 = vmatprep.mubr.f32.mxu0 0.0
    %1971 = vmatmul.mubr.f32.gmra.mxu0 %v1904
    %v1972 = vpop.f32.mrf.mxu0
    %v1973 = vadd.f32 0.0, %v1972
    %v1974 = vpop.f32.mrf.mxu0
    %1975 = vdwg.mxu0
    %s1976 = scalar_lea.vmem %s9, 128
    %v1977 = vld [vmem:[%s1976] sm:$0xff]
    %v1978 = vld [vmem:[%s1976 + $0x8] sm:$0xff]
    %v1979 = vld [vmem:[%s1976 + $0x10] sm:$0xff]
    %v1980 = vld [vmem:[%s1976 + $0x18] sm:$0xff]
    %v1981 = vlaneseq
    %v1982 = vshrl.u32 %v1981, 7
    %v1983 = vsub.s32 4, %v1982
    %v1984 = vrot.slane %v56, %v1983
    %v1986 = vsel %vm250, %v1813, 0
    %1988 = vmatprep.subr.mxu0 0.0
    %1989 = vmatpush1.msra.mxu0 0.0
    %1990 = vmatprep.subr.mxu0 0.0
    %1991 = vmatpush1.msra.mxu0 0.0
    %1992 = vmatprep.subr.mxu0 0.0
    %1993 = vmatpush1.msra.mxu0 0.0
    %1994 = vmatprep.subr.mxu0 0.0
    %1995 = vmatpush1.msra.mxu0 0.0
    %1996 = vmatprep.subr.mxu0 0.0
    %1997 = vmatpush1.msra.mxu0 0.0
    %1998 = vmatprep.subr.mxu0 0.0
    %1999 = vmatpush1.msra.mxu0 0.0
    %2000 = vmatprep.subr.mxu0 0.0
    %2001 = vmatpush1.msra.mxu0 0.0
    %2002 = vmatprep.subr.mxu0 0.0
    %2003 = vmatpush1.msra.mxu0 0.0
    %2004 = vmatprep.subr.mxu0 0.0
    %2005 = vmatpush1.msra.mxu0 0.0
    %2006 = vmatprep.subr.mxu0 0.0
    %2007 = vmatpush1.msra.mxu0 0.0
    %2008 = vmatprep.subr.mxu0 0.0
    %2009 = vmatpush1.msra.mxu0 0.0
    %2010 = vmatprep.subr.mxu0 0.0
    %2011 = vmatpush1.msra.mxu0 0.0
    %2012 = vmatprep.subr.mxu0 0.0
    %2013 = vmatpush1.msra.mxu0 %v1980
    %2014 = vmatprep.subr.mxu0 0.0
    %2015 = vmatpush1.msra.mxu0 %v1979
    %2016 = vmatprep.subr.mxu0 0.0
    %2017 = vmatpush1.msra.mxu0 %v1978
    %2018 = vmatprep.subr.mxu0 0.0
    %2019 = vmatpush1.msra.mxu0 %v1977
    %2020 = vmatprep.subr.mxu0 0.0
    %2021 = vmatpush2.msra.mxu0 0.0
    %2022 = vmatprep.subr.mxu0 0.0
    %2023 = vmatpush2.msra.mxu0 0.0
    %2024 = vmatprep.subr.mxu0 0.0
    %2025 = vmatpush2.msra.mxu0 0.0
    %2026 = vmatprep.subr.mxu0 0.0
    %2027 = vmatpush2.msra.mxu0 0.0
    %2028 = vmatprep.subr.mxu0 0.0
    %2029 = vmatpush2.msra.mxu0 0.0
    %2030 = vmatprep.subr.mxu0 0.0
    %2031 = vmatpush2.msra.mxu0 0.0
    %2032 = vmatprep.subr.mxu0 0.0
    %2033 = vmatpush2.msra.mxu0 0.0
    %2034 = vmatprep.subr.mxu0 0.0
    %2035 = vmatpush2.msra.mxu0 0.0
    %2036 = vmatprep.subr.mxu0 0.0
    %2037 = vmatpush2.msra.mxu0 0.0
    %2038 = vmatprep.subr.mxu0 0.0
    %2039 = vmatpush2.msra.mxu0 0.0
    %2040 = vmatprep.subr.mxu0 0.0
    %2041 = vmatpush2.msra.mxu0 0.0
    %2042 = vmatprep.subr.mxu0 0.0
    %2043 = vmatpush2.msra.mxu0 0.0
    %2044 = vmatprep.subr.mxu0 0.0
    %2045 = vmatpush2.msra.mxu0 0.0
    %2046 = vmatprep.subr.mxu0 0.0
    %2047 = vmatpush2.msra.mxu0 0.0
    %2048 = vmatprep.subr.mxu0 0.0
    %2049 = vmatpush2.msra.mxu0 0.0
    %2050 = vmatprep.subr.mxu0 0.0
    %2051 = vmatpush2.msra.mxu0 0.0
    %2052 = vmatprep.mubr.f32.mxu0 0.0
    %2053 = vmatmul.mubr.f32.gmra.mxu0 %v1986
    %v2054 = vpop.f32.mrf.mxu0
    %v2055 = vadd.f32 %v1984, %v2054
    %v2056 = vpop.f32.mrf.mxu0
    %2057 = vdwg.mxu0
    %v2059 = vsel %vm250, %v2055, 0
    %v2062 = vsel %vm250, %v1973, 0
    %2064 = vmatprep.subr.mxu0 0.0
    %2065 = vmatpush1.xpose.msra.mxu0 0.0
    %2066 = vmatprep.subr.mxu0 0.0
    %2067 = vmatpush1.xpose.msra.mxu0 0.0
    %2068 = vmatprep.subr.mxu0 0.0
    %2069 = vmatpush1.xpose.msra.mxu0 0.0
    %2070 = vmatprep.subr.mxu0 0.0
    %2071 = vmatpush1.xpose.msra.mxu0 0.0
    %2072 = vmatprep.subr.mxu0 0.0
    %2073 = vmatpush1.xpose.msra.mxu0 0.0
    %2074 = vmatprep.subr.mxu0 0.0
    %2075 = vmatpush1.xpose.msra.mxu0 0.0
    %2076 = vmatprep.subr.mxu0 0.0
    %2077 = vmatpush1.xpose.msra.mxu0 0.0
    %2078 = vmatprep.subr.mxu0 0.0
    %2079 = vmatpush1.xpose.msra.mxu0 0.0
    %2080 = vmatprep.subr.mxu0 0.0
    %2081 = vmatpush1.xpose.msra.mxu0 0.0
    %2082 = vmatprep.subr.mxu0 0.0
    %2083 = vmatpush1.xpose.msra.mxu0 0.0
    %2084 = vmatprep.subr.mxu0 0.0
    %2085 = vmatpush1.xpose.msra.mxu0 0.0
    %2086 = vmatprep.subr.mxu0 0.0
    %2087 = vmatpush1.xpose.msra.mxu0 0.0
    %2088 = vmatprep.subr.mxu0 0.0
    %2089 = vmatpush1.xpose.msra.mxu0 0.0
    %2090 = vmatprep.subr.mxu0 0.0
    %2091 = vmatpush1.xpose.msra.mxu0 0.0
    %2092 = vmatprep.subr.mxu0 0.0
    %2093 = vmatpush1.xpose.msra.mxu0 0.0
    %2094 = vmatprep.subr.mxu0 0.0
    %2095 = vmatpush1.xpose.msra.mxu0 %v2062
    %2096 = vmatprep.subr.mxu0 0.0
    %2097 = vmatpush2.xpose.msra.mxu0 0.0
    %2098 = vmatprep.subr.mxu0 0.0
    %2099 = vmatpush2.xpose.msra.mxu0 0.0
    %2100 = vmatprep.subr.mxu0 0.0
    %2101 = vmatpush2.xpose.msra.mxu0 0.0
    %2102 = vmatprep.subr.mxu0 0.0
    %2103 = vmatpush2.xpose.msra.mxu0 0.0
    %2104 = vmatprep.subr.mxu0 0.0
    %2105 = vmatpush2.xpose.msra.mxu0 0.0
    %2106 = vmatprep.subr.mxu0 0.0
    %2107 = vmatpush2.xpose.msra.mxu0 0.0
    %2108 = vmatprep.subr.mxu0 0.0
    %2109 = vmatpush2.xpose.msra.mxu0 0.0
    %2110 = vmatprep.subr.mxu0 0.0
    %2111 = vmatpush2.xpose.msra.mxu0 0.0
    %2112 = vmatprep.subr.mxu0 0.0
    %2113 = vmatpush2.xpose.msra.mxu0 0.0
    %2114 = vmatprep.subr.mxu0 0.0
    %2115 = vmatpush2.xpose.msra.mxu0 0.0
    %2116 = vmatprep.subr.mxu0 0.0
    %2117 = vmatpush2.xpose.msra.mxu0 0.0
    %2118 = vmatprep.subr.mxu0 0.0
    %2119 = vmatpush2.xpose.msra.mxu0 0.0
    %2120 = vmatprep.subr.mxu0 0.0
    %2121 = vmatpush2.xpose.msra.mxu0 0.0
    %2122 = vmatprep.subr.mxu0 0.0
    %2123 = vmatpush2.xpose.msra.mxu0 0.0
    %2124 = vmatprep.subr.mxu0 0.0
    %2125 = vmatpush2.xpose.msra.mxu0 0.0
    %2126 = vmatprep.subr.mxu0 0.0
    %2127 = vmatpush2.xpose.msra.mxu0 0.0
    %2128 = vmatprep.mubr.f32.mxu0 0.0
    %2129 = vmatmul.mubr.f32.gmra.mxu0 %v2059
    %v2130 = vpop.f32.mrf.mxu0
    %v2131 = vadd.f32 0.0, %v2130
    %v2132 = vpop.f32.mrf.mxu0
    %2133 = vdwg.mxu0
    %s2134 = scalar_lea.vmem %s9, 160
    %v2135 = vld [vmem:[%s2134] sm:$0xff]
    %v2136 = vld [vmem:[%s2134 + $0x8] sm:$0xff]
    %v2137 = vld [vmem:[%s2134 + $0x10] sm:$0xff]
    %v2138 = vld [vmem:[%s2134 + $0x18] sm:$0xff]
    %v2139 = vlaneseq
    %v2140 = vshrl.u32 %v2139, 7
    %v2141 = vsub.s32 5, %v2140
    %v2142 = vrot.slane %v56, %v2141
    %v2144 = vsel %vm250, %v1894, 0
    %2146 = vmatprep.subr.mxu0 0.0
    %2147 = vmatpush1.msra.mxu0 0.0
    %2148 = vmatprep.subr.mxu0 0.0
    %2149 = vmatpush1.msra.mxu0 0.0
    %2150 = vmatprep.subr.mxu0 0.0
    %2151 = vmatpush1.msra.mxu0 0.0
    %2152 = vmatprep.subr.mxu0 0.0
    %2153 = vmatpush1.msra.mxu0 0.0
    %2154 = vmatprep.subr.mxu0 0.0
    %2155 = vmatpush1.msra.mxu0 0.0
    %2156 = vmatprep.subr.mxu0 0.0
    %2157 = vmatpush1.msra.mxu0 0.0
    %2158 = vmatprep.subr.mxu0 0.0
    %2159 = vmatpush1.msra.mxu0 0.0
    %2160 = vmatprep.subr.mxu0 0.0
    %2161 = vmatpush1.msra.mxu0 0.0
    %2162 = vmatprep.subr.mxu0 0.0
    %2163 = vmatpush1.msra.mxu0 0.0
    %2164 = vmatprep.subr.mxu0 0.0
    %2165 = vmatpush1.msra.mxu0 0.0
    %2166 = vmatprep.subr.mxu0 0.0
    %2167 = vmatpush1.msra.mxu0 0.0
    %2168 = vmatprep.subr.mxu0 0.0
    %2169 = vmatpush1.msra.mxu0 0.0
    %2170 = vmatprep.subr.mxu0 0.0
    %2171 = vmatpush1.msra.mxu0 %v2138
    %2172 = vmatprep.subr.mxu0 0.0
    %2173 = vmatpush1.msra.mxu0 %v2137
    %2174 = vmatprep.subr.mxu0 0.0
    %2175 = vmatpush1.msra.mxu0 %v2136
    %2176 = vmatprep.subr.mxu0 0.0
    %2177 = vmatpush1.msra.mxu0 %v2135
    %2178 = vmatprep.subr.mxu0 0.0
    %2179 = vmatpush2.msra.mxu0 0.0
    %2180 = vmatprep.subr.mxu0 0.0
    %2181 = vmatpush2.msra.mxu0 0.0
    %2182 = vmatprep.subr.mxu0 0.0
    %2183 = vmatpush2.msra.mxu0 0.0
    %2184 = vmatprep.subr.mxu0 0.0
    %2185 = vmatpush2.msra.mxu0 0.0
    %2186 = vmatprep.subr.mxu0 0.0
    %2187 = vmatpush2.msra.mxu0 0.0
    %2188 = vmatprep.subr.mxu0 0.0
    %2189 = vmatpush2.msra.mxu0 0.0
    %2190 = vmatprep.subr.mxu0 0.0
    %2191 = vmatpush2.msra.mxu0 0.0
    %2192 = vmatprep.subr.mxu0 0.0
    %2193 = vmatpush2.msra.mxu0 0.0
    %2194 = vmatprep.subr.mxu0 0.0
    %2195 = vmatpush2.msra.mxu0 0.0
    %2196 = vmatprep.subr.mxu0 0.0
    %2197 = vmatpush2.msra.mxu0 0.0
    %2198 = vmatprep.subr.mxu0 0.0
    %2199 = vmatpush2.msra.mxu0 0.0
    %2200 = vmatprep.subr.mxu0 0.0
    %2201 = vmatpush2.msra.mxu0 0.0
    %2202 = vmatprep.subr.mxu0 0.0
    %2203 = vmatpush2.msra.mxu0 0.0
    %2204 = vmatprep.subr.mxu0 0.0
    %2205 = vmatpush2.msra.mxu0 0.0
    %2206 = vmatprep.subr.mxu0 0.0
    %2207 = vmatpush2.msra.mxu0 0.0
    %2208 = vmatprep.subr.mxu0 0.0
    %2209 = vmatpush2.msra.mxu0 0.0
    %2210 = vmatprep.mubr.f32.mxu0 0.0
    %2211 = vmatmul.mubr.f32.gmra.mxu0 %v2144
    %v2212 = vpop.f32.mrf.mxu0
    %v2213 = vadd.f32 %v2142, %v2212
    %v2214 = vpop.f32.mrf.mxu0
    %2215 = vdwg.mxu0
    %v2217 = vsel %vm250, %v2213, 0
    %2219 = vmatprep.subr.mxu0 0.0
    %2220 = vmatpush1.xpose.msra.mxu0 0.0
    %2221 = vmatprep.subr.mxu0 0.0
    %2222 = vmatpush1.xpose.msra.mxu0 0.0
    %2223 = vmatprep.subr.mxu0 0.0
    %2224 = vmatpush1.xpose.msra.mxu0 0.0
    %2225 = vmatprep.subr.mxu0 0.0
    %2226 = vmatpush1.xpose.msra.mxu0 0.0
    %2227 = vmatprep.subr.mxu0 0.0
    %2228 = vmatpush1.xpose.msra.mxu0 0.0
    %2229 = vmatprep.subr.mxu0 0.0
    %2230 = vmatpush1.xpose.msra.mxu0 0.0
    %2231 = vmatprep.subr.mxu0 0.0
    %2232 = vmatpush1.xpose.msra.mxu0 0.0
    %2233 = vmatprep.subr.mxu0 0.0
    %2234 = vmatpush1.xpose.msra.mxu0 0.0
    %2235 = vmatprep.subr.mxu0 0.0
    %2236 = vmatpush1.xpose.msra.mxu0 0.0
    %2237 = vmatprep.subr.mxu0 0.0
    %2238 = vmatpush1.xpose.msra.mxu0 0.0
    %2239 = vmatprep.subr.mxu0 0.0
    %2240 = vmatpush1.xpose.msra.mxu0 0.0
    %2241 = vmatprep.subr.mxu0 0.0
    %2242 = vmatpush1.xpose.msra.mxu0 0.0
    %2243 = vmatprep.subr.mxu0 0.0
    %2244 = vmatpush1.xpose.msra.mxu0 0.0
    %2245 = vmatprep.subr.mxu0 0.0
    %2246 = vmatpush1.xpose.msra.mxu0 0.0
    %2247 = vmatprep.subr.mxu0 0.0
    %2248 = vmatpush1.xpose.msra.mxu0 0.0
    %2249 = vmatprep.subr.mxu0 0.0
    %2250 = vmatpush1.xpose.msra.mxu0 %v2062
    %2251 = vmatprep.subr.mxu0 0.0
    %2252 = vmatpush2.xpose.msra.mxu0 0.0
    %2253 = vmatprep.subr.mxu0 0.0
    %2254 = vmatpush2.xpose.msra.mxu0 0.0
    %2255 = vmatprep.subr.mxu0 0.0
    %2256 = vmatpush2.xpose.msra.mxu0 0.0
    %2257 = vmatprep.subr.mxu0 0.0
    %2258 = vmatpush2.xpose.msra.mxu0 0.0
    %2259 = vmatprep.subr.mxu0 0.0
    %2260 = vmatpush2.xpose.msra.mxu0 0.0
    %2261 = vmatprep.subr.mxu0 0.0
    %2262 = vmatpush2.xpose.msra.mxu0 0.0
    %2263 = vmatprep.subr.mxu0 0.0
    %2264 = vmatpush2.xpose.msra.mxu0 0.0
    %2265 = vmatprep.subr.mxu0 0.0
    %2266 = vmatpush2.xpose.msra.mxu0 0.0
    %2267 = vmatprep.subr.mxu0 0.0
    %2268 = vmatpush2.xpose.msra.mxu0 0.0
    %2269 = vmatprep.subr.mxu0 0.0
    %2270 = vmatpush2.xpose.msra.mxu0 0.0
    %2271 = vmatprep.subr.mxu0 0.0
    %2272 = vmatpush2.xpose.msra.mxu0 0.0
    %2273 = vmatprep.subr.mxu0 0.0
    %2274 = vmatpush2.xpose.msra.mxu0 0.0
    %2275 = vmatprep.subr.mxu0 0.0
    %2276 = vmatpush2.xpose.msra.mxu0 0.0
    %2277 = vmatprep.subr.mxu0 0.0
    %2278 = vmatpush2.xpose.msra.mxu0 0.0
    %2279 = vmatprep.subr.mxu0 0.0
    %2280 = vmatpush2.xpose.msra.mxu0 0.0
    %2281 = vmatprep.subr.mxu0 0.0
    %2282 = vmatpush2.xpose.msra.mxu0 0.0
    %2283 = vmatprep.mubr.f32.mxu0 0.0
    %2284 = vmatmul.mubr.f32.gmra.mxu0 %v2217
    %v2285 = vpop.f32.mrf.mxu0
    %v2286 = vadd.f32 0.0, %v2285
    %v2287 = vpop.f32.mrf.mxu0
    %2288 = vdwg.mxu0
    %vm2289 = vcmask 35840
    %v2290 = vsel %vm2289, %v2131, -inf
    %v2291 = vrot.slane %v2290, 4
    %v2292 = vmax.f32 %v2290, %v2291
    %v2293 = vrot.slane %v2292, 2
    %v2294 = vmax.f32 %v2292, %v2293
    %v2295 = vrot.slane %v2294, 1
    %v2296 = vmax.f32 %v2294, %v2295
    %v2297 = vsub.f32 %v2131, %v2296
    %v2298 = vmul.f32 %v2297, 1.442695
    %v2299 = vpow.pop %v2298
    %v2300 = vsel %vm2289, %v2299, 0.0
    %v2301 = vrot.slane %v2300, 4
    %v2302 = vadd.f32 %v2300, %v2301
    %v2303 = vrot.slane %v2302, 2
    %v2304 = vadd.f32 %v2302, %v2303
    %v2305 = vrot.slane %v2304, 1
    %v2306 = vadd.f32 %v2304, %v2305
    %v2307 = vrcp.pop %v2306
    %v2308 = vmul.f32 %v2299, %v2307
    %vm2309 = vcmask 34816
    %v2310 = vsel %vm2309, %v2286, -inf
    %v2311 = vrot.slane %v2310, 4
    %v2312 = vmax.f32 %v2310, %v2311
    %v2313 = vrot.slane %v2312, 2
    %v2314 = vmax.f32 %v2312, %v2313
    %v2315 = vrot.slane %v2314, 1
    %v2316 = vmax.f32 %v2314, %v2315
    %v2317 = vsub.f32 %v2286, %v2316
    %v2318 = vmul.f32 %v2317, 1.442695
    %v2319 = vpow.pop %v2318
    %v2320 = vsel %vm2309, %v2319, 0.0
    %v2321 = vrot.slane %v2320, 4
    %v2322 = vadd.f32 %v2320, %v2321
    %v2323 = vrot.slane %v2322, 2
    %v2324 = vadd.f32 %v2322, %v2323
    %v2325 = vrot.slane %v2324, 1
    %v2326 = vadd.f32 %v2324, %v2325
    %v2327 = vrcp.pop %v2326
    %v2328 = vmul.f32 %v2319, %v2327
    %2329 = vxpose.xlu0.b32.start [1/16] %v2308, 128
    %2330 = vxpose.xlu0.b32.cont [2/16] 0.0, 128
    %2331 = vxpose.xlu0.b32.cont [3/16] 0.0, 128
    %2332 = vxpose.xlu0.b32.cont [4/16] 0.0, 128
    %2333 = vxpose.xlu0.b32.cont [5/16] 0.0, 128
    %2334 = vxpose.xlu0.b32.cont [6/16] 0.0, 128
    %2335 = vxpose.xlu0.b32.cont [7/16] 0.0, 128
    %2336 = vxpose.xlu0.b32.cont [8/16] 0.0, 128
    %2337 = vxpose.xlu0.b32.cont [9/16] 0.0, 128
    %2338 = vxpose.xlu0.b32.cont [10/16] 0.0, 128
    %2339 = vxpose.xlu0.b32.cont [11/16] 0.0, 128
    %2340 = vxpose.xlu0.b32.cont [12/16] 0.0, 128
    %2341 = vxpose.xlu0.b32.cont [13/16] 0.0, 128
    %2342 = vxpose.xlu0.b32.cont [14/16] 0.0, 128
    %2343 = vxpose.xlu0.b32.cont [15/16] 0.0, 128
    %2344 = vxpose.xlu0.b32.end [16/16] 0.0, 128
    %v2345 = vpop.trf.xlu0
    %v2346 = vpop.trf.xlu0
    %v2347 = vpop.trf.xlu0
    %v2348 = vpop.trf.xlu0
    %v2349 = vpop.trf.xlu0
    %v2350 = vpop.trf.xlu0
    %v2351 = vpop.trf.xlu0
    %v2352 = vpop.trf.xlu0
    %v2353 = vpop.trf.xlu0
    %v2354 = vpop.trf.xlu0
    %v2355 = vpop.trf.xlu0
    %v2356 = vpop.trf.xlu0
    %v2357 = vpop.trf.xlu0
    %v2358 = vpop.trf.xlu0
    %v2359 = vpop.trf.xlu0
    %v2360 = vpop.trf.xlu0
    %vm2361 = vcmask 31744
    %v2363 = vsel %vm2361, %v2345, 0
    %v2365 = vsel %vm66, %v1813, 0
    %2367 = vmatprep.subr.mxu0 0.0
    %2368 = vmatpush1.msra.mxu0 0.0
    %2369 = vmatprep.subr.mxu0 0.0
    %2370 = vmatpush1.msra.mxu0 0.0
    %2371 = vmatprep.subr.mxu0 0.0
    %2372 = vmatpush1.msra.mxu0 0.0
    %2373 = vmatprep.subr.mxu0 0.0
    %2374 = vmatpush1.msra.mxu0 0.0
    %2375 = vmatprep.subr.mxu0 0.0
    %2376 = vmatpush1.msra.mxu0 0.0
    %2377 = vmatprep.subr.mxu0 0.0
    %2378 = vmatpush1.msra.mxu0 0.0
    %2379 = vmatprep.subr.mxu0 0.0
    %2380 = vmatpush1.msra.mxu0 0.0
    %2381 = vmatprep.subr.mxu0 0.0
    %2382 = vmatpush1.msra.mxu0 0.0
    %2383 = vmatprep.subr.mxu0 0.0
    %2384 = vmatpush1.msra.mxu0 0.0
    %2385 = vmatprep.subr.mxu0 0.0
    %2386 = vmatpush1.msra.mxu0 0.0
    %2387 = vmatprep.subr.mxu0 0.0
    %2388 = vmatpush1.msra.mxu0 0.0
    %2389 = vmatprep.subr.mxu0 0.0
    %2390 = vmatpush1.msra.mxu0 0.0
    %2391 = vmatprep.subr.mxu0 0.0
    %2392 = vmatpush1.msra.mxu0 0.0
    %2393 = vmatprep.subr.mxu0 0.0
    %2394 = vmatpush1.msra.mxu0 0.0
    %2395 = vmatprep.subr.mxu0 0.0
    %2396 = vmatpush1.msra.mxu0 0.0
    %2397 = vmatprep.subr.mxu0 0.0
    %2398 = vmatpush1.msra.mxu0 %v2365
    %2399 = vmatprep.subr.mxu0 0.0
    %2400 = vmatpush2.msra.mxu0 0.0
    %2401 = vmatprep.subr.mxu0 0.0
    %2402 = vmatpush2.msra.mxu0 0.0
    %2403 = vmatprep.subr.mxu0 0.0
    %2404 = vmatpush2.msra.mxu0 0.0
    %2405 = vmatprep.subr.mxu0 0.0
    %2406 = vmatpush2.msra.mxu0 0.0
    %2407 = vmatprep.subr.mxu0 0.0
    %2408 = vmatpush2.msra.mxu0 0.0
    %2409 = vmatprep.subr.mxu0 0.0
    %2410 = vmatpush2.msra.mxu0 0.0
    %2411 = vmatprep.subr.mxu0 0.0
    %2412 = vmatpush2.msra.mxu0 0.0
    %2413 = vmatprep.subr.mxu0 0.0
    %2414 = vmatpush2.msra.mxu0 0.0
    %2415 = vmatprep.subr.mxu0 0.0
    %2416 = vmatpush2.msra.mxu0 0.0
    %2417 = vmatprep.subr.mxu0 0.0
    %2418 = vmatpush2.msra.mxu0 0.0
    %2419 = vmatprep.subr.mxu0 0.0
    %2420 = vmatpush2.msra.mxu0 0.0
    %2421 = vmatprep.subr.mxu0 0.0
    %2422 = vmatpush2.msra.mxu0 0.0
    %2423 = vmatprep.subr.mxu0 0.0
    %2424 = vmatpush2.msra.mxu0 0.0
    %2425 = vmatprep.subr.mxu0 0.0
    %2426 = vmatpush2.msra.mxu0 0.0
    %2427 = vmatprep.subr.mxu0 0.0
    %2428 = vmatpush2.msra.mxu0 0.0
    %2429 = vmatprep.subr.mxu0 0.0
    %2430 = vmatpush2.msra.mxu0 0.0
    %2431 = vmatprep.mubr.f32.mxu0 0.0
    %2432 = vmatmul.mubr.f32.gmra.mxu0 %v2363
    %v2433 = vpop.f32.mrf.mxu0
    %v2434 = vadd.f32 0.0, %v2433
    %v2435 = vpop.f32.mrf.mxu0
    %2436 = vdwg.mxu0
    %2437 = vxpose.xlu0.b32.start [1/16] %v2328, 128
    %2438 = vxpose.xlu0.b32.cont [2/16] 0.0, 128
    %2439 = vxpose.xlu0.b32.cont [3/16] 0.0, 128
    %2440 = vxpose.xlu0.b32.cont [4/16] 0.0, 128
    %2441 = vxpose.xlu0.b32.cont [5/16] 0.0, 128
    %2442 = vxpose.xlu0.b32.cont [6/16] 0.0, 128
    %2443 = vxpose.xlu0.b32.cont [7/16] 0.0, 128
    %2444 = vxpose.xlu0.b32.cont [8/16] 0.0, 128
    %2445 = vxpose.xlu0.b32.cont [9/16] 0.0, 128
    %2446 = vxpose.xlu0.b32.cont [10/16] 0.0, 128
    %2447 = vxpose.xlu0.b32.cont [11/16] 0.0, 128
    %2448 = vxpose.xlu0.b32.cont [12/16] 0.0, 128
    %2449 = vxpose.xlu0.b32.cont [13/16] 0.0, 128
    %2450 = vxpose.xlu0.b32.cont [14/16] 0.0, 128
    %2451 = vxpose.xlu0.b32.cont [15/16] 0.0, 128
    %2452 = vxpose.xlu0.b32.end [16/16] 0.0, 128
    %v2453 = vpop.trf.xlu0
    %v2454 = vpop.trf.xlu0
    %v2455 = vpop.trf.xlu0
    %v2456 = vpop.trf.xlu0
    %v2457 = vpop.trf.xlu0
    %v2458 = vpop.trf.xlu0
    %v2459 = vpop.trf.xlu0
    %v2460 = vpop.trf.xlu0
    %v2461 = vpop.trf.xlu0
    %v2462 = vpop.trf.xlu0
    %v2463 = vpop.trf.xlu0
    %v2464 = vpop.trf.xlu0
    %v2465 = vpop.trf.xlu0
    %v2466 = vpop.trf.xlu0
    %v2467 = vpop.trf.xlu0
    %v2468 = vpop.trf.xlu0
    %vm2469 = vcmask 23552
    %v2471 = vsel %vm2469, %v2453, 0
    %vm2473 = vcmask 1042432
    %v2474 = vsel %vm2473, %v1894, 0
    %2476 = vmatprep.subr.mxu0 0.0
    %2477 = vmatpush1.msra.mxu0 0.0
    %2478 = vmatprep.subr.mxu0 0.0
    %2479 = vmatpush1.msra.mxu0 0.0
    %2480 = vmatprep.subr.mxu0 0.0
    %2481 = vmatpush1.msra.mxu0 0.0
    %2482 = vmatprep.subr.mxu0 0.0
    %2483 = vmatpush1.msra.mxu0 0.0
    %2484 = vmatprep.subr.mxu0 0.0
    %2485 = vmatpush1.msra.mxu0 0.0
    %2486 = vmatprep.subr.mxu0 0.0
    %2487 = vmatpush1.msra.mxu0 0.0
    %2488 = vmatprep.subr.mxu0 0.0
    %2489 = vmatpush1.msra.mxu0 0.0
    %2490 = vmatprep.subr.mxu0 0.0
    %2491 = vmatpush1.msra.mxu0 0.0
    %2492 = vmatprep.subr.mxu0 0.0
    %2493 = vmatpush1.msra.mxu0 0.0
    %2494 = vmatprep.subr.mxu0 0.0
    %2495 = vmatpush1.msra.mxu0 0.0
    %2496 = vmatprep.subr.mxu0 0.0
    %2497 = vmatpush1.msra.mxu0 0.0
    %2498 = vmatprep.subr.mxu0 0.0
    %2499 = vmatpush1.msra.mxu0 0.0
    %2500 = vmatprep.subr.mxu0 0.0
    %2501 = vmatpush1.msra.mxu0 0.0
    %2502 = vmatprep.subr.mxu0 0.0
    %2503 = vmatpush1.msra.mxu0 0.0
    %2504 = vmatprep.subr.mxu0 0.0
    %2505 = vmatpush1.msra.mxu0 0.0
    %2506 = vmatprep.subr.mxu0 0.0
    %2507 = vmatpush1.msra.mxu0 %v2474
    %2508 = vmatprep.subr.mxu0 0.0
    %2509 = vmatpush2.msra.mxu0 0.0
    %2510 = vmatprep.subr.mxu0 0.0
    %2511 = vmatpush2.msra.mxu0 0.0
    %2512 = vmatprep.subr.mxu0 0.0
    %2513 = vmatpush2.msra.mxu0 0.0
    %2514 = vmatprep.subr.mxu0 0.0
    %2515 = vmatpush2.msra.mxu0 0.0
    %2516 = vmatprep.subr.mxu0 0.0
    %2517 = vmatpush2.msra.mxu0 0.0
    %2518 = vmatprep.subr.mxu0 0.0
    %2519 = vmatpush2.msra.mxu0 0.0
    %2520 = vmatprep.subr.mxu0 0.0
    %2521 = vmatpush2.msra.mxu0 0.0
    %2522 = vmatprep.subr.mxu0 0.0
    %2523 = vmatpush2.msra.mxu0 0.0
    %2524 = vmatprep.subr.mxu0 0.0
    %2525 = vmatpush2.msra.mxu0 0.0
    %2526 = vmatprep.subr.mxu0 0.0
    %2527 = vmatpush2.msra.mxu0 0.0
    %2528 = vmatprep.subr.mxu0 0.0
    %2529 = vmatpush2.msra.mxu0 0.0
    %2530 = vmatprep.subr.mxu0 0.0
    %2531 = vmatpush2.msra.mxu0 0.0
    %2532 = vmatprep.subr.mxu0 0.0
    %2533 = vmatpush2.msra.mxu0 0.0
    %2534 = vmatprep.subr.mxu0 0.0
    %2535 = vmatpush2.msra.mxu0 0.0
    %2536 = vmatprep.subr.mxu0 0.0
    %2537 = vmatpush2.msra.mxu0 0.0
    %2538 = vmatprep.subr.mxu0 0.0
    %2539 = vmatpush2.msra.mxu0 0.0
    %2540 = vmatprep.mubr.f32.mxu0 0.0
    %2541 = vmatmul.mubr.f32.gmra.mxu0 %v2471
    %v2542 = vpop.f32.mrf.mxu0
    %v2543 = vadd.f32 0.0, %v2542
    %v2544 = vpop.f32.mrf.mxu0
    %2545 = vdwg.mxu0
    %v2546 = vld [vmem:[%s12] sm:$0xff]
    %v2547 = vld [vmem:[%s12 + $0x8] sm:$0xff]
    %v2548 = vld [vmem:[%s12 + $0x10] sm:$0xff]
    %v2549 = vld [vmem:[%s12 + $0x18] sm:$0xff]
    %s2550 = scalar_lea.vmem %s12, 32
    %v2551 = vld [vmem:[%s2550] sm:$0xff]
    %v2552 = vld [vmem:[%s2550 + $0x8] sm:$0xff]
    %v2553 = vld [vmem:[%s2550 + $0x10] sm:$0xff]
    %v2554 = vld [vmem:[%s2550 + $0x18] sm:$0xff]
    %v2556 = vsel %vm250, %v2434, 0
    %2558 = vmatprep.subr.mxu0 0.0
    %2559 = vmatpush1.msra.mxu0 0.0
    %2560 = vmatprep.subr.mxu0 0.0
    %2561 = vmatpush1.msra.mxu0 0.0
    %2562 = vmatprep.subr.mxu0 0.0
    %2563 = vmatpush1.msra.mxu0 0.0
    %2564 = vmatprep.subr.mxu0 0.0
    %2565 = vmatpush1.msra.mxu0 0.0
    %2566 = vmatprep.subr.mxu0 0.0
    %2567 = vmatpush1.msra.mxu0 0.0
    %2568 = vmatprep.subr.mxu0 0.0
    %2569 = vmatpush1.msra.mxu0 0.0
    %2570 = vmatprep.subr.mxu0 0.0
    %2571 = vmatpush1.msra.mxu0 0.0
    %2572 = vmatprep.subr.mxu0 0.0
    %2573 = vmatpush1.msra.mxu0 0.0
    %2574 = vmatprep.subr.mxu0 0.0
    %2575 = vmatpush1.msra.mxu0 0.0
    %2576 = vmatprep.subr.mxu0 0.0
    %2577 = vmatpush1.msra.mxu0 0.0
    %2578 = vmatprep.subr.mxu0 0.0
    %2579 = vmatpush1.msra.mxu0 0.0
    %2580 = vmatprep.subr.mxu0 0.0
    %2581 = vmatpush1.msra.mxu0 0.0
    %2582 = vmatprep.subr.mxu0 0.0
    %2583 = vmatpush1.msra.mxu0 %v2554
    %2584 = vmatprep.subr.mxu0 0.0
    %2585 = vmatpush1.msra.mxu0 %v2553
    %2586 = vmatprep.subr.mxu0 0.0
    %2587 = vmatpush1.msra.mxu0 %v2552
    %2588 = vmatprep.subr.mxu0 0.0
    %2589 = vmatpush1.msra.mxu0 %v2551
    %2590 = vmatprep.subr.mxu0 0.0
    %2591 = vmatpush2.msra.mxu0 0.0
    %2592 = vmatprep.subr.mxu0 0.0
    %2593 = vmatpush2.msra.mxu0 0.0
    %2594 = vmatprep.subr.mxu0 0.0
    %2595 = vmatpush2.msra.mxu0 0.0
    %2596 = vmatprep.subr.mxu0 0.0
    %2597 = vmatpush2.msra.mxu0 0.0
    %2598 = vmatprep.subr.mxu0 0.0
    %2599 = vmatpush2.msra.mxu0 0.0
    %2600 = vmatprep.subr.mxu0 0.0
    %2601 = vmatpush2.msra.mxu0 0.0
    %2602 = vmatprep.subr.mxu0 0.0
    %2603 = vmatpush2.msra.mxu0 0.0
    %2604 = vmatprep.subr.mxu0 0.0
    %2605 = vmatpush2.msra.mxu0 0.0
    %2606 = vmatprep.subr.mxu0 0.0
    %2607 = vmatpush2.msra.mxu0 0.0
    %2608 = vmatprep.subr.mxu0 0.0
    %2609 = vmatpush2.msra.mxu0 0.0
    %2610 = vmatprep.subr.mxu0 0.0
    %2611 = vmatpush2.msra.mxu0 0.0
    %2612 = vmatprep.subr.mxu0 0.0
    %2613 = vmatpush2.msra.mxu0 0.0
    %2614 = vmatprep.subr.mxu0 0.0
    %2615 = vmatpush2.msra.mxu0 0.0
    %2616 = vmatprep.subr.mxu0 0.0
    %2617 = vmatpush2.msra.mxu0 0.0
    %2618 = vmatprep.subr.mxu0 0.0
    %2619 = vmatpush2.msra.mxu0 0.0
    %2620 = vmatprep.subr.mxu0 0.0
    %2621 = vmatpush2.msra.mxu0 0.0
    %2622 = vmatprep.mubr.f32.mxu0 0.0
    %2623 = vmatmul.mubr.f32.gmra.mxu0 %v2556
    %v2624 = vpop.f32.mrf.mxu0
    %v2625 = vadd.f32 0.0, %v2624
    %v2626 = vpop.f32.mrf.mxu0
    %2627 = vdwg.mxu0
    %2628 = vmatprep.subr.mxu0 0.0
    %2629 = vmatpush1.msra.mxu0 0.0
    %2630 = vmatprep.subr.mxu0 0.0
    %2631 = vmatpush1.msra.mxu0 0.0
    %2632 = vmatprep.subr.mxu0 0.0
    %2633 = vmatpush1.msra.mxu0 0.0
    %2634 = vmatprep.subr.mxu0 0.0
    %2635 = vmatpush1.msra.mxu0 0.0
    %2636 = vmatprep.subr.mxu0 0.0
    %2637 = vmatpush1.msra.mxu0 0.0
    %2638 = vmatprep.subr.mxu0 0.0
    %2639 = vmatpush1.msra.mxu0 0.0
    %2640 = vmatprep.subr.mxu0 0.0
    %2641 = vmatpush1.msra.mxu0 0.0
    %2642 = vmatprep.subr.mxu0 0.0
    %2643 = vmatpush1.msra.mxu0 0.0
    %2644 = vmatprep.subr.mxu0 0.0
    %2645 = vmatpush1.msra.mxu0 0.0
    %2646 = vmatprep.subr.mxu0 0.0
    %2647 = vmatpush1.msra.mxu0 0.0
    %2648 = vmatprep.subr.mxu0 0.0
    %2649 = vmatpush1.msra.mxu0 0.0
    %2650 = vmatprep.subr.mxu0 0.0
    %2651 = vmatpush1.msra.mxu0 0.0
    %2652 = vmatprep.subr.mxu0 0.0
    %2653 = vmatpush1.msra.mxu0 %v2549
    %2654 = vmatprep.subr.mxu0 0.0
    %2655 = vmatpush1.msra.mxu0 %v2548
    %2656 = vmatprep.subr.mxu0 0.0
    %2657 = vmatpush1.msra.mxu0 %v2547
    %2658 = vmatprep.subr.mxu0 0.0
    %2659 = vmatpush1.msra.mxu0 %v2546
    %2660 = vmatprep.subr.mxu0 0.0
    %2661 = vmatpush2.msra.mxu0 0.0
    %2662 = vmatprep.subr.mxu0 0.0
    %2663 = vmatpush2.msra.mxu0 0.0
    %2664 = vmatprep.subr.mxu0 0.0
    %2665 = vmatpush2.msra.mxu0 0.0
    %2666 = vmatprep.subr.mxu0 0.0
    %2667 = vmatpush2.msra.mxu0 0.0
    %2668 = vmatprep.subr.mxu0 0.0
    %2669 = vmatpush2.msra.mxu0 0.0
    %2670 = vmatprep.subr.mxu0 0.0
    %2671 = vmatpush2.msra.mxu0 0.0
    %2672 = vmatprep.subr.mxu0 0.0
    %2673 = vmatpush2.msra.mxu0 0.0
    %2674 = vmatprep.subr.mxu0 0.0
    %2675 = vmatpush2.msra.mxu0 0.0
    %2676 = vmatprep.subr.mxu0 0.0
    %2677 = vmatpush2.msra.mxu0 0.0
    %2678 = vmatprep.subr.mxu0 0.0
    %2679 = vmatpush2.msra.mxu0 0.0
    %2680 = vmatprep.subr.mxu0 0.0
    %2681 = vmatpush2.msra.mxu0 0.0
    %2682 = vmatprep.subr.mxu0 0.0
    %2683 = vmatpush2.msra.mxu0 0.0
    %2684 = vmatprep.subr.mxu0 0.0
    %2685 = vmatpush2.msra.mxu0 0.0
    %2686 = vmatprep.subr.mxu0 0.0
    %2687 = vmatpush2.msra.mxu0 0.0
    %2688 = vmatprep.subr.mxu0 0.0
    %2689 = vmatpush2.msra.mxu0 0.0
    %2690 = vmatprep.subr.mxu0 0.0
    %2691 = vmatpush2.msra.mxu0 0.0
    %2692 = vmatprep.mubr.f32.mxu0 0.0
    %2693 = vmatmul.mubr.f32.gmra.mxu0 %v2062
    %v2694 = vpop.f32.mrf.mxu0
    %v2695 = vadd.f32 %v2625, %v2694
    %v2696 = vpop.f32.mrf.mxu0
    %2697 = vdwg.mxu0
    %s2698 = scalar_lea.vmem %s12, 64
    %v2699 = vld [vmem:[%s2698] sm:$0xff]
    %v2700 = vld [vmem:[%s2698 + $0x8] sm:$0xff]
    %v2701 = vld [vmem:[%s2698 + $0x10] sm:$0xff]
    %v2702 = vld [vmem:[%s2698 + $0x18] sm:$0xff]
    %v2704 = vsel %vm250, %v2543, 0
    %2706 = vmatprep.subr.mxu0 0.0
    %2707 = vmatpush1.msra.mxu0 0.0
    %2708 = vmatprep.subr.mxu0 0.0
    %2709 = vmatpush1.msra.mxu0 0.0
    %2710 = vmatprep.subr.mxu0 0.0
    %2711 = vmatpush1.msra.mxu0 0.0
    %2712 = vmatprep.subr.mxu0 0.0
    %2713 = vmatpush1.msra.mxu0 0.0
    %2714 = vmatprep.subr.mxu0 0.0
    %2715 = vmatpush1.msra.mxu0 0.0
    %2716 = vmatprep.subr.mxu0 0.0
    %2717 = vmatpush1.msra.mxu0 0.0
    %2718 = vmatprep.subr.mxu0 0.0
    %2719 = vmatpush1.msra.mxu0 0.0
    %2720 = vmatprep.subr.mxu0 0.0
    %2721 = vmatpush1.msra.mxu0 0.0
    %2722 = vmatprep.subr.mxu0 0.0
    %2723 = vmatpush1.msra.mxu0 0.0
    %2724 = vmatprep.subr.mxu0 0.0
    %2725 = vmatpush1.msra.mxu0 0.0
    %2726 = vmatprep.subr.mxu0 0.0
    %2727 = vmatpush1.msra.mxu0 0.0
    %2728 = vmatprep.subr.mxu0 0.0
    %2729 = vmatpush1.msra.mxu0 0.0
    %2730 = vmatprep.subr.mxu0 0.0
    %2731 = vmatpush1.msra.mxu0 %v2702
    %2732 = vmatprep.subr.mxu0 0.0
    %2733 = vmatpush1.msra.mxu0 %v2701
    %2734 = vmatprep.subr.mxu0 0.0
    %2735 = vmatpush1.msra.mxu0 %v2700
    %2736 = vmatprep.subr.mxu0 0.0
    %2737 = vmatpush1.msra.mxu0 %v2699
    %2738 = vmatprep.subr.mxu0 0.0
    %2739 = vmatpush2.msra.mxu0 0.0
    %2740 = vmatprep.subr.mxu0 0.0
    %2741 = vmatpush2.msra.mxu0 0.0
    %2742 = vmatprep.subr.mxu0 0.0
    %2743 = vmatpush2.msra.mxu0 0.0
    %2744 = vmatprep.subr.mxu0 0.0
    %2745 = vmatpush2.msra.mxu0 0.0
    %2746 = vmatprep.subr.mxu0 0.0
    %2747 = vmatpush2.msra.mxu0 0.0
    %2748 = vmatprep.subr.mxu0 0.0
    %2749 = vmatpush2.msra.mxu0 0.0
    %2750 = vmatprep.subr.mxu0 0.0
    %2751 = vmatpush2.msra.mxu0 0.0
    %2752 = vmatprep.subr.mxu0 0.0
    %2753 = vmatpush2.msra.mxu0 0.0
    %2754 = vmatprep.subr.mxu0 0.0
    %2755 = vmatpush2.msra.mxu0 0.0
    %2756 = vmatprep.subr.mxu0 0.0
    %2757 = vmatpush2.msra.mxu0 0.0
    %2758 = vmatprep.subr.mxu0 0.0
    %2759 = vmatpush2.msra.mxu0 0.0
    %2760 = vmatprep.subr.mxu0 0.0
    %2761 = vmatpush2.msra.mxu0 0.0
    %2762 = vmatprep.subr.mxu0 0.0
    %2763 = vmatpush2.msra.mxu0 0.0
    %2764 = vmatprep.subr.mxu0 0.0
    %2765 = vmatpush2.msra.mxu0 0.0
    %2766 = vmatprep.subr.mxu0 0.0
    %2767 = vmatpush2.msra.mxu0 0.0
    %2768 = vmatprep.subr.mxu0 0.0
    %2769 = vmatpush2.msra.mxu0 0.0
    %2770 = vmatprep.mubr.f32.mxu0 0.0
    %2771 = vmatmul.mubr.f32.gmra.mxu0 %v2704
    %v2772 = vpop.f32.mrf.mxu0
    %v2773 = vadd.f32 0.0, %v2772
    %v2774 = vpop.f32.mrf.mxu0
    %2775 = vdwg.mxu0
    %v2776 = vadd.f32 %v2695, %v2773
    %v2777 = vlaneseq
    %v2778 = vshrl.u32 %v2777, 7
    %v2779 = vsub.s32 2, %v2778
    %v2780 = vrot.slane %v57, %v2779
    %v2781 = vadd.f32 %v2776, %v2780
    %v2782 = vtanh.pop %v2781
    %2783 = vst [vmem:[#allocation6] sm:$0x1f] %v2782
    %v2784 = vld [vmem:[%s13] sm:$0xff]
    %v2785 = vld [vmem:[%s13 + $0x8] sm:$0xff]
    %v2786 = vld [vmem:[%s13 + $0x10] sm:$0xff]
    %v2787 = vld [vmem:[%s13 + $0x18] sm:$0xff]
    %v2788 = vld [vmem:[%s13 + $0x20] sm:$0xff]
    %v2789 = vld [vmem:[%s13 + $0x28] sm:$0xff]
    %v2790 = vld [vmem:[%s13 + $0x30] sm:$0xff]
    %v2791 = vld [vmem:[%s13 + $0x38] sm:$0xff]
    %v2792 = vld [vmem:[%s13 + $0x40] sm:$0xff]
    %v2793 = vld [vmem:[%s13 + $0x48] sm:$0xff]
    %v2794 = vld [vmem:[%s13 + $0x50] sm:$0xff]
    %v2795 = vld [vmem:[%s13 + $0x58] sm:$0xff]
    %v2796 = vld [vmem:[%s13 + $0x60] sm:$0xff]
    %v2797 = vld [vmem:[%s13 + $0x68] sm:$0xff]
    %v2798 = vld [vmem:[%s13 + $0x70] sm:$0xff]
    %v2799 = vld [vmem:[%s13 + $0x78] sm:$0xff]
    %v2800 = vlaneseq
    %v2801 = vshrl.u32 %v2800, 7
    %v2802 = vsub.s32 3, %v2801
    %v2803 = vrot.slane %v57, %v2802
    %2804 = vmatprep.subr.mxu0 0.0
    %2805 = vmatpush1.msra.mxu0 %v2799
    %2806 = vmatprep.subr.mxu0 0.0
    %2807 = vmatpush1.msra.mxu0 %v2798
    %2808 = vmatprep.subr.mxu0 0.0
    %2809 = vmatpush1.msra.mxu0 %v2797
    %2810 = vmatprep.subr.mxu0 0.0
    %2811 = vmatpush1.msra.mxu0 %v2796
    %2812 = vmatprep.subr.mxu0 0.0
    %2813 = vmatpush1.msra.mxu0 %v2795
    %2814 = vmatprep.subr.mxu0 0.0
    %2815 = vmatpush1.msra.mxu0 %v2794
    %2816 = vmatprep.subr.mxu0 0.0
    %2817 = vmatpush1.msra.mxu0 %v2793
    %2818 = vmatprep.subr.mxu0 0.0
    %2819 = vmatpush1.msra.mxu0 %v2792
    %2820 = vmatprep.subr.mxu0 0.0
    %2821 = vmatpush1.msra.mxu0 %v2791
    %2822 = vmatprep.subr.mxu0 0.0
    %2823 = vmatpush1.msra.mxu0 %v2790
    %2824 = vmatprep.subr.mxu0 0.0
    %2825 = vmatpush1.msra.mxu0 %v2789
    %2826 = vmatprep.subr.mxu0 0.0
    %2827 = vmatpush1.msra.mxu0 %v2788
    %2828 = vmatprep.subr.mxu0 0.0
    %2829 = vmatpush1.msra.mxu0 %v2787
    %2830 = vmatprep.subr.mxu0 0.0
    %2831 = vmatpush1.msra.mxu0 %v2786
    %2832 = vmatprep.subr.mxu0 0.0
    %2833 = vmatpush1.msra.mxu0 %v2785
    %2834 = vmatprep.subr.mxu0 0.0
    %2835 = vmatpush1.msra.mxu0 %v2784
    %2836 = vmatprep.subr.mxu0 0.0
    %2837 = vmatpush2.msra.mxu0 0.0
    %2838 = vmatprep.subr.mxu0 0.0
    %2839 = vmatpush2.msra.mxu0 0.0
    %2840 = vmatprep.subr.mxu0 0.0
    %2841 = vmatpush2.msra.mxu0 0.0
    %2842 = vmatprep.subr.mxu0 0.0
    %2843 = vmatpush2.msra.mxu0 0.0
    %2844 = vmatprep.subr.mxu0 0.0
    %2845 = vmatpush2.msra.mxu0 0.0
    %2846 = vmatprep.subr.mxu0 0.0
    %2847 = vmatpush2.msra.mxu0 0.0
    %2848 = vmatprep.subr.mxu0 0.0
    %2849 = vmatpush2.msra.mxu0 0.0
    %2850 = vmatprep.subr.mxu0 0.0
    %2851 = vmatpush2.msra.mxu0 0.0
    %2852 = vmatprep.subr.mxu0 0.0
    %2853 = vmatpush2.msra.mxu0 0.0
    %2854 = vmatprep.subr.mxu0 0.0
    %2855 = vmatpush2.msra.mxu0 0.0
    %2856 = vmatprep.subr.mxu0 0.0
    %2857 = vmatpush2.msra.mxu0 0.0
    %2858 = vmatprep.subr.mxu0 0.0
    %2859 = vmatpush2.msra.mxu0 0.0
    %2860 = vmatprep.subr.mxu0 0.0
    %2861 = vmatpush2.msra.mxu0 0.0
    %2862 = vmatprep.subr.mxu0 0.0
    %2863 = vmatpush2.msra.mxu0 0.0
    %2864 = vmatprep.subr.mxu0 0.0
    %2865 = vmatpush2.msra.mxu0 0.0
    %2866 = vmatprep.subr.mxu0 0.0
    %2867 = vmatpush2.msra.mxu0 0.0
    %2868 = vmatprep.mubr.f32.mxu0 0.0
    %2869 = vmatmul.mubr.f32.gmra.mxu0 %v2782
    %v2870 = vpop.f32.mrf.mxu0
    %v2871 = vadd.f32 %v2803, %v2870
    %v2872 = vpop.f32.mrf.mxu0
    %2873 = vdwg.mxu0
    %2874 = vst [vmem:[%s18] sm:$0x1f] %v2871
    // Predicated region
    $region62: #{_forward_jit.1} parent=1 // pred_check
      _
    $region63: #{_forward_jit.1} parent=1 // pred_check_branch
      %2876 = sbr.rel (0) target = $region65
    $region64: #{_forward_jit.1} parent=1 // pred_region
      %s2878 = ssub.s32 128, 128
      %2879 = vsyncadd [#allocation3], %s2878
      %s2881 = sshll.u32 [#allocation2], 4
      %s2882 = int_to_ptr.vmem [resolvable:$true] %s2881
      %2884 = dma.vmem_to_hbm [thread:$0]  %s2882, 128, %s15, [#allocation3]
    $region65: #{_forward_jit.1} parent=1 // pred_fallthru
      _
    // Predicated region
    $region66: #{_forward_jit.1} parent=1 // pred_check
      _
    $region67: #{_forward_jit.1} parent=1 // pred_check_branch
      %2886 = sbr.rel (0) target = $region69
    $region68: #{_forward_jit.1} parent=1 // pred_region
      %s2888 = ssub.s32 256, 256
      %2889 = vsyncadd [#allocation5], %s2888
      %s2890 = sshll.u32 [#allocation4], 4
      %s2891 = int_to_ptr.vmem [resolvable:$true] %s2890
      %2896 = dma.vmem_to_hbm [thread:$0]  %s2891, 256, %s16, [#allocation5], 128, 128, 8
    $region69: #{_forward_jit.1} parent=1 // pred_fallthru
      _
    // Predicated region
    $region70: #{_forward_jit.1} parent=1 // pred_check
      _
    $region71: #{_forward_jit.1} parent=1 // pred_check_branch
      %2898 = sbr.rel (0) target = $region73
    $region72: #{_forward_jit.1} parent=1 // pred_region
      %s2900 = ssub.s32 128, 128
      %2901 = vsyncadd [#allocation5], %s2900
      %s2903 = sshll.u32 [#allocation6], 4
      %s2904 = int_to_ptr.vmem [resolvable:$true] %s2903
      %2906 = dma.vmem_to_hbm [thread:$0]  %s2904, 128, %s17, [#allocation5]
    $region73: #{_forward_jit.1} parent=1 // pred_fallthru
      _
    // Predicated region
    $region74: #{_forward_jit.1} parent=1 // pred_check
      _
    $region75: #{_forward_jit.1} parent=1 // pred_check_branch
      %2908 = sbr.rel (0) target = $region77
    $region76: #{_forward_jit.1} parent=1 // pred_region
      _
    $region77: #{_forward_jit.1} parent=1 // pred_fallthru
      _
    // Predicated region
    $region78: #{_forward_jit.1} parent=1 // pred_check
      _
    $region79: #{_forward_jit.1} parent=1 // pred_check_branch
      %2910 = sbr.rel (0) target = $region81
    $region80: #{_forward_jit.1} parent=1 // pred_region
      %2911 = dma.done [#allocation3], 128
    $region81: #{_forward_jit.1} parent=1 // pred_fallthru
      _
    // Predicated region
    $region82: #{_forward_jit.1} parent=1 // pred_check
      _
    $region83: #{_forward_jit.1} parent=1 // pred_check_branch
      %2913 = sbr.rel (0) target = $region85
    $region84: #{_forward_jit.1} parent=1 // pred_region
      %2914 = dma.done [#allocation5], 256
    $region85: #{_forward_jit.1} parent=1 // pred_fallthru
      _
    // Predicated region
    $region86: #{_forward_jit.1} parent=1 // pred_check
      _
    $region87: #{_forward_jit.1} parent=1 // pred_check_branch
      %2916 = sbr.rel (0) target = $region89
    $region88: #{_forward_jit.1} parent=1 // pred_region
      %2917 = dma.done [#allocation5], 128
    $region89: #{_forward_jit.1} parent=1 // pred_fallthru
      _
    // Predicated region
    $region90: #{_forward_jit.1} parent=1 // pred_check
      _
    $region91: #{_forward_jit.1} parent=1 // pred_check_branch
      %2919 = sbr.rel (0) target = $region93
    $region92: #{_forward_jit.1} parent=1 // pred_region
      _
    $region93: #{_forward_jit.1} parent=1 // pred_fallthru
      _
    %2920 = vsyncpa [#allocation3], 1
    %2921 = vsyncpa [#allocation5], 1

</llo_original>
